<compile_context>
chip_gen: v7x
topology: tpu7x:2x2x1
jax: 0.10.0
libtpu: 0.0.40
codegen_flags: <defaults>
</compile_context>

<pallas_src>
import functools
import math

import jax
import jax.numpy as jnp
from jax.experimental import pallas as pl
from jax.experimental.pallas import tpu as pltpu


# ---------------------------------------------------------------------------
# Fused per-batch kernel: QKV proj + per-head top-k softmax attention +
# head merge + output projection + residual + LayerNorm.
# ---------------------------------------------------------------------------
def _fused_sparse_attn_kernel(xq_ref, xk_ref, xv_ref,
                              wq_ref, wk_ref, wv_ref,
                              wo_ref, bo_ref, g_ref, b_ref,
                              out_ref, wts_ref,
                              *, num_heads, top_k, eps):
    f32 = jnp.float32
    S = xq_ref.shape[1]
    D = xq_ref.shape[2]
    H = num_heads
    dk = D // H
    K = top_k
    cdt = xq_ref.dtype                      # MXU operand dtype (f32 or bf16)

    xq = xq_ref[0]                          # [S, D]
    xk = xk_ref[0]
    xv = xv_ref[0]

    # Fused projections: one lane-dense [S,D]@[D,D] matmul per stream.
    # (1/sqrt(d_k) is already folded into wq by the wrapper.)
    q = jnp.dot(xq, wq_ref[...], preferred_element_type=f32)    # [S, D] f32
    k = jnp.dot(xk, wk_ref[...], preferred_element_type=f32)
    v = jnp.dot(xv, wv_ref[...], preferred_element_type=f32)

    # Packed top-k key: monotone-int32 view of the f32 score with the inverted
    # column index embedded in the low bits -> one integer max reduction per k
    # gives both the (near-exact) max value and its argmax, ties to lowest idx.
    lbits = max(1, (S - 1).bit_length())
    lmask = (1 << lbits) - 1
    himask = jnp.int32(~lmask)
    full = jnp.int32(0x7FFFFFFF)
    key_min = jnp.int32(-2 ** 31)
    col = jax.lax.broadcasted_iota(jnp.int32, (S, S), 1)
    rank = lmask - col                       # lower column -> larger rank

    head_outs = []
    for h in range(H):
        lo, hi = h * dk, (h + 1) * dk
        q_h = q[:, lo:hi]                    # [S, dk]
        k_h = k[:, lo:hi]
        v_h = v[:, lo:hi]

        # scores[s, t] = <q_h[s], k_h[t]>  (contract last dims, no transpose)
        scores = jax.lax.dot_general(
            q_h, k_h, (((1,), (1,)), ((), ())),
            preferred_element_type=f32)      # [S, S] f32

        bits = pltpu.bitcast(scores, jnp.int32)
        mono = jnp.where(bits < 0, bits ^ full, bits)   # order-preserving int32
        key = (mono & himask) | rank

        attn = jnp.zeros((S, S), f32)        # running sparse scatter
        denom = jnp.zeros((S, 1), f32)
        v0 = jnp.zeros((S, 1), f32)
        p_cols = []
        for j in range(K):
            kmax = jnp.max(key, axis=1, keepdims=True)  # [S,1] one XLU reduce
            oh = key == kmax                            # exactly one hit / row
            # decode the selected score (exact up to the low tie-break bits)
            vm = kmax & himask
            vj = pltpu.bitcast(jnp.where(vm < 0, vm ^ full, vm), f32)
            if j == 0:
                v0 = vj
                pj = jnp.ones((S, 1), f32)              # exp(v0 - v0)
            else:
                pj = jnp.exp(vj - v0)                   # EUP
            denom = denom + pj
            attn = attn + jnp.where(oh, pj, 0.0)
            p_cols.append(pj)
            key = jnp.where(oh, key_min, key)           # mask selected entry

        inv = pl.reciprocal(denom, approx=True)         # EUP
        inv = inv * (2.0 - denom * inv)                 # Newton step -> f32 accurate
        attn = attn * inv
        w_h = jnp.concatenate(p_cols, axis=1) * inv     # [S, K] softmax(top-k)
        wts_ref[0, h] = w_h.astype(wts_ref.dtype)

        head_outs.append(
            jnp.dot(attn.astype(cdt), v_h.astype(cdt),
                    preferred_element_type=f32))        # [S, dk]

    # Merge heads (lane concat) + output projection + residual + LayerNorm.
    merged = jnp.concatenate(head_outs, axis=1)          # [S, D] f32
    y = jnp.dot(merged.astype(cdt), wo_ref[...], preferred_element_type=f32)
    y = y + bo_ref[...] + xq.astype(f32)
    mu = jnp.mean(y, axis=-1, keepdims=True)
    var = jnp.mean((y - mu) ** 2, axis=-1, keepdims=True)
    yn = (y - mu) * jax.lax.rsqrt(var + eps)
    out_ref[0] = (yn * g_ref[...] + b_ref[...]).astype(out_ref.dtype)


# ---------------------------------------------------------------------------
# Wrapper
# ---------------------------------------------------------------------------
def sparse_attention_forward(xq, xk, xv, params, *, num_heads, top_k,
                             compute_dtype=jnp.float32, eps=1e-5):
    B, S, D = xq.shape
    assert D % num_heads == 0
    dk = D // num_heads
    K = min(top_k, S)
    cdt = compute_dtype

    scale = 1.0 / math.sqrt(dk)
    wq = (params["Wq"] * scale).astype(cdt)   # fold 1/sqrt(d_k) into W_q
    wk = params["Wk"].astype(cdt)
    wv = params["Wv"].astype(cdt)
    wo = params["Wo"].astype(cdt)
    bo = params["bo"].reshape(1, D).astype(jnp.float32)
    gamma = params["gamma"].reshape(1, D).astype(jnp.float32)
    beta = params["beta"].reshape(1, D).astype(jnp.float32)

    kernel = functools.partial(_fused_sparse_attn_kernel,
                               num_heads=num_heads, top_k=K, eps=eps)

    out, wts = pl.pallas_call(
        kernel,
        out_shape=(jax.ShapeDtypeStruct((B, S, D), jnp.float32),
                   jax.ShapeDtypeStruct((B, num_heads, S, K), jnp.float32)),
        grid=(B,),
        in_specs=[
            pl.BlockSpec((1, S, D), lambda b: (b, 0, 0)),
            pl.BlockSpec((1, S, D), lambda b: (b, 0, 0)),
            pl.BlockSpec((1, S, D), lambda b: (b, 0, 0)),
            pl.BlockSpec((D, D), lambda b: (0, 0)),
            pl.BlockSpec((D, D), lambda b: (0, 0)),
            pl.BlockSpec((D, D), lambda b: (0, 0)),
            pl.BlockSpec((D, D), lambda b: (0, 0)),
            pl.BlockSpec((1, D), lambda b: (0, 0)),
            pl.BlockSpec((1, D), lambda b: (0, 0)),
            pl.BlockSpec((1, D), lambda b: (0, 0)),
        ],
        out_specs=(
            pl.BlockSpec((1, S, D), lambda b: (b, 0, 0)),
            pl.BlockSpec((1, num_heads, S, K), lambda b: (b, 0, 0, 0)),
        ),
        compiler_params=pltpu.CompilerParams(
            dimension_semantics=("parallel",),
            # TODO(synk): for large S, tile the KV axis (blockwise top-k) so
            # the dense [S,S] accumulator fits v7x's 64 MiB VMEM.
            vmem_limit_bytes=64 * 1024 * 1024),
    )(xq.astype(cdt), xk.astype(cdt), xv.astype(cdt),
      wq, wk, wv, wo, bo, gamma, beta)
    return out, wts


# ---------------------------------------------------------------------------
# Pure-JAX reference for validation
# ---------------------------------------------------------------------------
def reference_forward(xq, xk, xv, params, *, num_heads, top_k):
    B, S, D = xq.shape
    dk = D // num_heads
    K = min(top_k, S)
    q = (xq @ params["Wq"]).reshape(B, S, num_heads, dk).transpose(0, 2, 1, 3)
    k = (xk @ params["Wk"]).reshape(B, S, num_heads, dk).transpose(0, 2, 1, 3)
    v = (xv @ params["Wv"]).reshape(B, S, num_heads, dk).transpose(0, 2, 1, 3)
    scores = jnp.einsum("bhsd,bhtd->bhst", q, k) / jnp.sqrt(jnp.float32(dk))
    topv, topi = jax.lax.top_k(scores, K)
    w = jax.nn.softmax(topv, axis=-1)
    onehot = jax.nn.one_hot(topi, S, dtype=jnp.float32)            # [B,H,S,K,S]
    attn = jnp.einsum("bhsk,bhskt->bhst", w, onehot)
    out_h = jnp.einsum("bhst,bhtd->bhsd", attn, v)
    merged = out_h.transpose(0, 2, 1, 3).reshape(B, S, D)
    y = merged @ params["Wo"] + params["bo"] + xq
    mu = jnp.mean(y, axis=-1, keepdims=True)
    var = jnp.mean((y - mu) ** 2, axis=-1, keepdims=True)
    yn = (y - mu) / jnp.sqrt(var + 1e-5)
    return yn * params["gamma"] + params["beta"], w


if __name__ == "__main__":
    B, S, D, H, TOP_K = 2, 16, 32, 4, 8

    key = jax.random.PRNGKey(0)
    ks = jax.random.split(key, 10)
    xq = jax.random.normal(ks[0], (B, S, D), jnp.float32)
    xk = jax.random.normal(ks[1], (B, S, D), jnp.float32)
    xv = jax.random.normal(ks[2], (B, S, D), jnp.float32)

    params = {
        "Wq": 0.2 * jax.random.normal(ks[3], (D, D), jnp.float32),
        "Wk": 0.2 * jax.random.normal(ks[4], (D, D), jnp.float32),
        "Wv": 0.2 * jax.random.normal(ks[5], (D, D), jnp.float32),
        "Wo": 0.2 * jax.random.normal(ks[6], (D, D), jnp.float32),
        "bo": 0.1 * jax.random.normal(ks[7], (D,), jnp.float32),
        "gamma": 1.0 + 0.1 * jax.random.normal(ks[8], (D,), jnp.float32),
        "beta": 0.1 * jax.random.normal(ks[9], (D,), jnp.float32),
    }

    # f32 (reference-accuracy) run.
    out, sparse_w = sparse_attention_forward(
        xq, xk, xv, params, num_heads=H, top_k=TOP_K)
    out = jax.block_until_ready(out)
    sparse_w = jax.block_until_ready(sparse_w)

    ref_out, ref_w = reference_forward(xq, xk, xv, params, num_heads=H, top_k=TOP_K)
    assert out.shape == (B, S, D) and sparse_w.shape == (B, H, S, min(TOP_K, S))
    assert jnp.allclose(out, ref_out, atol=1e-3, rtol=1e-3)
    assert jnp.allclose(sparse_w, ref_w, atol=1e-4, rtol=1e-4)

    # bf16 matmul-operand run (v6e/v7x fast path); f32 accumulation keeps it close.
    out_bf, w_bf = sparse_attention_forward(
        xq, xk, xv, params, num_heads=H, top_k=TOP_K, compute_dtype=jnp.bfloat16)
    out_bf = jax.block_until_ready(out_bf)
    w_bf = jax.block_until_ready(w_bf)
    assert bool(jnp.all(jnp.isfinite(out_bf)))
    assert float(jnp.mean(jnp.abs(out_bf - ref_out))) < 0.1

    print("KERNEL_OK")
</pallas_src>

<mosaic_0001>
module attributes {stable_mosaic.version = 11 : i64} {
  func.func @_fused_sparse_attn_kernel(%arg0: i32, %arg1: memref<1x16x32xf32, #tpu.memory_space<vmem>>, %arg2: memref<1x16x32xf32, #tpu.memory_space<vmem>>, %arg3: memref<1x16x32xf32, #tpu.memory_space<vmem>>, %arg4: memref<32x32xf32, #tpu.memory_space<vmem>>, %arg5: memref<32x32xf32, #tpu.memory_space<vmem>>, %arg6: memref<32x32xf32, #tpu.memory_space<vmem>>, %arg7: memref<32x32xf32, #tpu.memory_space<vmem>>, %arg8: memref<1x32xf32, #tpu.memory_space<vmem>>, %arg9: memref<1x32xf32, #tpu.memory_space<vmem>>, %arg10: memref<1x32xf32, #tpu.memory_space<vmem>>, %arg11: memref<1x16x32xf32, #tpu.memory_space<vmem>>, %arg12: memref<1x4x16x8xf32, #tpu.memory_space<vmem>>) attributes {dimension_semantics = [#tpu.dimension_semantics<parallel>], iteration_bounds = array<i64: 2>, scalar_prefetch = 0 : i64, scratch_operands = 0 : i64, tpu.core_type = #tpu.core_type<tc>, window_params = [{transform_indices = @transform_0, window_bounds = array<i64: 1, 16, 32>}, {transform_indices = @transform_1, window_bounds = array<i64: 1, 16, 32>}, {transform_indices = @transform_2, window_bounds = array<i64: 1, 16, 32>}, {pipeline_mode = #tpu.pipeline_mode<synchronous>, transform_indices = @transform_3, window_bounds = array<i64: 32, 32>}, {pipeline_mode = #tpu.pipeline_mode<synchronous>, transform_indices = @transform_4, window_bounds = array<i64: 32, 32>}, {pipeline_mode = #tpu.pipeline_mode<synchronous>, transform_indices = @transform_5, window_bounds = array<i64: 32, 32>}, {pipeline_mode = #tpu.pipeline_mode<synchronous>, transform_indices = @transform_6, window_bounds = array<i64: 32, 32>}, {pipeline_mode = #tpu.pipeline_mode<synchronous>, transform_indices = @transform_7, window_bounds = array<i64: 1, 32>}, {pipeline_mode = #tpu.pipeline_mode<synchronous>, transform_indices = @transform_8, window_bounds = array<i64: 1, 32>}, {pipeline_mode = #tpu.pipeline_mode<synchronous>, transform_indices = @transform_9, window_bounds = array<i64: 1, 32>}, {transform_indices = @transform_10, window_bounds = array<i64: 1, 16, 32>}, {transform_indices = @transform_11, window_bounds = array<i64: 1, 4, 16, 8>}]} {
    %c0 = arith.constant 0 : index
    %c0_0 = arith.constant 0 : index
    %c0_1 = arith.constant 0 : index
    %0 = vector.load %arg1[%c0, %c0_0, %c0_1] : memref<1x16x32xf32, #tpu.memory_space<vmem>>, vector<1x16x32xf32>
    %1 = vector.shape_cast %0 : vector<1x16x32xf32> to vector<16x32xf32>
    %c0_2 = arith.constant 0 : index
    %c0_3 = arith.constant 0 : index
    %c0_4 = arith.constant 0 : index
    %2 = vector.load %arg2[%c0_2, %c0_3, %c0_4] : memref<1x16x32xf32, #tpu.memory_space<vmem>>, vector<1x16x32xf32>
    %3 = vector.shape_cast %2 : vector<1x16x32xf32> to vector<16x32xf32>
    %c0_5 = arith.constant 0 : index
    %c0_6 = arith.constant 0 : index
    %c0_7 = arith.constant 0 : index
    %4 = vector.load %arg3[%c0_5, %c0_6, %c0_7] : memref<1x16x32xf32, #tpu.memory_space<vmem>>, vector<1x16x32xf32>
    %5 = vector.shape_cast %4 : vector<1x16x32xf32> to vector<16x32xf32>
    %c0_8 = arith.constant 0 : index
    %c0_9 = arith.constant 0 : index
    %6 = vector.load %arg4[%c0_8, %c0_9] : memref<32x32xf32, #tpu.memory_space<vmem>>, vector<32x32xf32>
    %cst = arith.constant dense<0.000000e+00> : vector<16x32xf32>
    %7 = tpu.matmul %1, %6, %cst {dimension_numbers = #tpu.dot_dimension_numbers<[1], [0], [0], [1], [0, 0, 1, 1], [], []>} : vector<16x32xf32>, vector<32x32xf32>, vector<16x32xf32> -> vector<16x32xf32>
    %c0_10 = arith.constant 0 : index
    %c0_11 = arith.constant 0 : index
    %8 = vector.load %arg5[%c0_10, %c0_11] : memref<32x32xf32, #tpu.memory_space<vmem>>, vector<32x32xf32>
    %cst_12 = arith.constant dense<0.000000e+00> : vector<16x32xf32>
    %9 = tpu.matmul %3, %8, %cst_12 {dimension_numbers = #tpu.dot_dimension_numbers<[1], [0], [0], [1], [0, 0, 1, 1], [], []>} : vector<16x32xf32>, vector<32x32xf32>, vector<16x32xf32> -> vector<16x32xf32>
    %c0_13 = arith.constant 0 : index
    %c0_14 = arith.constant 0 : index
    %10 = vector.load %arg6[%c0_13, %c0_14] : memref<32x32xf32, #tpu.memory_space<vmem>>, vector<32x32xf32>
    %cst_15 = arith.constant dense<0.000000e+00> : vector<16x32xf32>
    %11 = tpu.matmul %5, %10, %cst_15 {dimension_numbers = #tpu.dot_dimension_numbers<[1], [0], [0], [1], [0, 0, 1, 1], [], []>} : vector<16x32xf32>, vector<32x32xf32>, vector<16x32xf32> -> vector<16x32xf32>
    %12 = tpu.iota {dimensions = array<i32: 1>} : vector<16x16xi32>
    %c15_i32 = arith.constant 15 : i32
    %13 = vector.broadcast %c15_i32 : i32 to vector<16x16xi32>
    %14 = arith.subi %13, %12 : vector<16x16xi32>
    %15 = vector.extract_strided_slice %7 {offsets = [0, 0], sizes = [16, 8], strides = [1, 1]} : vector<16x32xf32> to vector<16x8xf32>
    %16 = vector.extract_strided_slice %9 {offsets = [0, 0], sizes = [16, 8], strides = [1, 1]} : vector<16x32xf32> to vector<16x8xf32>
    %17 = vector.extract_strided_slice %11 {offsets = [0, 0], sizes = [16, 8], strides = [1, 1]} : vector<16x32xf32> to vector<16x8xf32>
    %cst_16 = arith.constant dense<0.000000e+00> : vector<16x16xf32>
    %18 = tpu.matmul %15, %16, %cst_16 {dimension_numbers = #tpu.dot_dimension_numbers<[1], [1], [0], [0], [0, 0, 1, 0], [], []>} : vector<16x8xf32>, vector<16x8xf32>, vector<16x16xf32> -> vector<16x16xf32>
    %19 = tpu.bitcast %18 : vector<16x16xf32> -> vector<16x16xi32>
    %c0_i32 = arith.constant 0 : i32
    %20 = vector.broadcast %c0_i32 : i32 to vector<16x16xi32>
    %21 = arith.cmpi slt, %19, %20 : vector<16x16xi32>
    %c2147483647_i32 = arith.constant 2147483647 : i32
    %22 = vector.broadcast %c2147483647_i32 : i32 to vector<16x16xi32>
    %23 = arith.xori %19, %22 : vector<16x16xi32>
    %24 = arith.select %21, %23, %19 : vector<16x16xi1>, vector<16x16xi32>
    %c-16_i32 = arith.constant -16 : i32
    %25 = vector.broadcast %c-16_i32 : i32 to vector<16x16xi32>
    %26 = arith.andi %24, %25 : vector<16x16xi32>
    %27 = arith.ori %26, %14 : vector<16x16xi32>
    %cst_17 = arith.constant 0.000000e+00 : f32
    %28 = vector.broadcast %cst_17 : f32 to vector<16x16xf32>
    %cst_18 = arith.constant 0.000000e+00 : f32
    %29 = vector.broadcast %cst_18 : f32 to vector<16x1xf32>
    %cst_19 = arith.constant dense<-2147483648> : vector<16xi32>
    %30 = vector.multi_reduction <maxsi>, %27, %cst_19 [1] : vector<16x16xi32> to vector<16xi32>
    %31 = vector.shape_cast %30 : vector<16xi32> to vector<16x1xi32>
    %32 = vector.broadcast %31 : vector<16x1xi32> to vector<16x16xi32>
    %33 = arith.cmpi eq, %27, %32 : vector<16x16xi32>
    %c-16_i32_20 = arith.constant -16 : i32
    %34 = vector.broadcast %c-16_i32_20 : i32 to vector<16x1xi32>
    %35 = arith.andi %31, %34 : vector<16x1xi32>
    %c0_i32_21 = arith.constant 0 : i32
    %36 = vector.broadcast %c0_i32_21 : i32 to vector<16x1xi32>
    %37 = arith.cmpi slt, %35, %36 : vector<16x1xi32>
    %c2147483647_i32_22 = arith.constant 2147483647 : i32
    %38 = vector.broadcast %c2147483647_i32_22 : i32 to vector<16x1xi32>
    %39 = arith.xori %35, %38 : vector<16x1xi32>
    %40 = arith.select %37, %39, %35 : vector<16x1xi1>, vector<16x1xi32>
    %41 = tpu.bitcast %40 : vector<16x1xi32> -> vector<16x1xf32>
    %cst_23 = arith.constant 1.000000e+00 : f32
    %42 = vector.broadcast %cst_23 : f32 to vector<16x1xf32>
    %43 = arith.addf %29, %42 : vector<16x1xf32>
    %cst_24 = arith.constant 0.000000e+00 : f32
    %44 = vector.shape_cast %42 : vector<16x1xf32> to vector<16x1xf32>
    %45 = vector.broadcast %44 : vector<16x1xf32> to vector<16x16xf32>
    %46 = vector.broadcast %cst_24 : f32 to vector<16x16xf32>
    %47 = arith.select %33, %45, %46 : vector<16x16xi1>, vector<16x16xf32>
    %48 = arith.addf %28, %47 : vector<16x16xf32>
    %c-2147483648_i32 = arith.constant -2147483648 : i32
    %49 = vector.broadcast %c-2147483648_i32 : i32 to vector<16x16xi32>
    %50 = arith.select %33, %49, %27 : vector<16x16xi1>, vector<16x16xi32>
    %cst_25 = arith.constant dense<-2147483648> : vector<16xi32>
    %51 = vector.multi_reduction <maxsi>, %50, %cst_25 [1] : vector<16x16xi32> to vector<16xi32>
    %52 = vector.shape_cast %51 : vector<16xi32> to vector<16x1xi32>
    %53 = vector.broadcast %52 : vector<16x1xi32> to vector<16x16xi32>
    %54 = arith.cmpi eq, %50, %53 : vector<16x16xi32>
    %c-16_i32_26 = arith.constant -16 : i32
    %55 = vector.broadcast %c-16_i32_26 : i32 to vector<16x1xi32>
    %56 = arith.andi %52, %55 : vector<16x1xi32>
    %c0_i32_27 = arith.constant 0 : i32
    %57 = vector.broadcast %c0_i32_27 : i32 to vector<16x1xi32>
    %58 = arith.cmpi slt, %56, %57 : vector<16x1xi32>
    %c2147483647_i32_28 = arith.constant 2147483647 : i32
    %59 = vector.broadcast %c2147483647_i32_28 : i32 to vector<16x1xi32>
    %60 = arith.xori %56, %59 : vector<16x1xi32>
    %61 = arith.select %58, %60, %56 : vector<16x1xi1>, vector<16x1xi32>
    %62 = tpu.bitcast %61 : vector<16x1xi32> -> vector<16x1xf32>
    %63 = arith.subf %62, %41 : vector<16x1xf32>
    %64 = math.exp %63 : vector<16x1xf32>
    %65 = arith.addf %43, %64 : vector<16x1xf32>
    %cst_29 = arith.constant 0.000000e+00 : f32
    %66 = vector.shape_cast %64 : vector<16x1xf32> to vector<16x1xf32>
    %67 = vector.broadcast %66 : vector<16x1xf32> to vector<16x16xf32>
    %68 = vector.broadcast %cst_29 : f32 to vector<16x16xf32>
    %69 = arith.select %54, %67, %68 : vector<16x16xi1>, vector<16x16xf32>
    %70 = arith.addf %48, %69 : vector<16x16xf32>
    %c-2147483648_i32_30 = arith.constant -2147483648 : i32
    %71 = vector.broadcast %c-2147483648_i32_30 : i32 to vector<16x16xi32>
    %72 = arith.select %54, %71, %50 : vector<16x16xi1>, vector<16x16xi32>
    %cst_31 = arith.constant dense<-2147483648> : vector<16xi32>
    %73 = vector.multi_reduction <maxsi>, %72, %cst_31 [1] : vector<16x16xi32> to vector<16xi32>
    %74 = vector.shape_cast %73 : vector<16xi32> to vector<16x1xi32>
    %75 = vector.broadcast %74 : vector<16x1xi32> to vector<16x16xi32>
    %76 = arith.cmpi eq, %72, %75 : vector<16x16xi32>
    %c-16_i32_32 = arith.constant -16 : i32
    %77 = vector.broadcast %c-16_i32_32 : i32 to vector<16x1xi32>
    %78 = arith.andi %74, %77 : vector<16x1xi32>
    %c0_i32_33 = arith.constant 0 : i32
    %79 = vector.broadcast %c0_i32_33 : i32 to vector<16x1xi32>
    %80 = arith.cmpi slt, %78, %79 : vector<16x1xi32>
    %c2147483647_i32_34 = arith.constant 2147483647 : i32
    %81 = vector.broadcast %c2147483647_i32_34 : i32 to vector<16x1xi32>
    %82 = arith.xori %78, %81 : vector<16x1xi32>
    %83 = arith.select %80, %82, %78 : vector<16x1xi1>, vector<16x1xi32>
    %84 = tpu.bitcast %83 : vector<16x1xi32> -> vector<16x1xf32>
    %85 = arith.subf %84, %41 : vector<16x1xf32>
    %86 = math.exp %85 : vector<16x1xf32>
    %87 = arith.addf %65, %86 : vector<16x1xf32>
    %cst_35 = arith.constant 0.000000e+00 : f32
    %88 = vector.shape_cast %86 : vector<16x1xf32> to vector<16x1xf32>
    %89 = vector.broadcast %88 : vector<16x1xf32> to vector<16x16xf32>
    %90 = vector.broadcast %cst_35 : f32 to vector<16x16xf32>
    %91 = arith.select %76, %89, %90 : vector<16x16xi1>, vector<16x16xf32>
    %92 = arith.addf %70, %91 : vector<16x16xf32>
    %c-2147483648_i32_36 = arith.constant -2147483648 : i32
    %93 = vector.broadcast %c-2147483648_i32_36 : i32 to vector<16x16xi32>
    %94 = arith.select %76, %93, %72 : vector<16x16xi1>, vector<16x16xi32>
    %cst_37 = arith.constant dense<-2147483648> : vector<16xi32>
    %95 = vector.multi_reduction <maxsi>, %94, %cst_37 [1] : vector<16x16xi32> to vector<16xi32>
    %96 = vector.shape_cast %95 : vector<16xi32> to vector<16x1xi32>
    %97 = vector.broadcast %96 : vector<16x1xi32> to vector<16x16xi32>
    %98 = arith.cmpi eq, %94, %97 : vector<16x16xi32>
    %c-16_i32_38 = arith.constant -16 : i32
    %99 = vector.broadcast %c-16_i32_38 : i32 to vector<16x1xi32>
    %100 = arith.andi %96, %99 : vector<16x1xi32>
    %c0_i32_39 = arith.constant 0 : i32
    %101 = vector.broadcast %c0_i32_39 : i32 to vector<16x1xi32>
    %102 = arith.cmpi slt, %100, %101 : vector<16x1xi32>
    %c2147483647_i32_40 = arith.constant 2147483647 : i32
    %103 = vector.broadcast %c2147483647_i32_40 : i32 to vector<16x1xi32>
    %104 = arith.xori %100, %103 : vector<16x1xi32>
    %105 = arith.select %102, %104, %100 : vector<16x1xi1>, vector<16x1xi32>
    %106 = tpu.bitcast %105 : vector<16x1xi32> -> vector<16x1xf32>
    %107 = arith.subf %106, %41 : vector<16x1xf32>
    %108 = math.exp %107 : vector<16x1xf32>
    %109 = arith.addf %87, %108 : vector<16x1xf32>
    %cst_41 = arith.constant 0.000000e+00 : f32
    %110 = vector.shape_cast %108 : vector<16x1xf32> to vector<16x1xf32>
    %111 = vector.broadcast %110 : vector<16x1xf32> to vector<16x16xf32>
    %112 = vector.broadcast %cst_41 : f32 to vector<16x16xf32>
    %113 = arith.select %98, %111, %112 : vector<16x16xi1>, vector<16x16xf32>
    %114 = arith.addf %92, %113 : vector<16x16xf32>
    %c-2147483648_i32_42 = arith.constant -2147483648 : i32
    %115 = vector.broadcast %c-2147483648_i32_42 : i32 to vector<16x16xi32>
    %116 = arith.select %98, %115, %94 : vector<16x16xi1>, vector<16x16xi32>
    %cst_43 = arith.constant dense<-2147483648> : vector<16xi32>
    %117 = vector.multi_reduction <maxsi>, %116, %cst_43 [1] : vector<16x16xi32> to vector<16xi32>
    %118 = vector.shape_cast %117 : vector<16xi32> to vector<16x1xi32>
    %119 = vector.broadcast %118 : vector<16x1xi32> to vector<16x16xi32>
    %120 = arith.cmpi eq, %116, %119 : vector<16x16xi32>
    %c-16_i32_44 = arith.constant -16 : i32
    %121 = vector.broadcast %c-16_i32_44 : i32 to vector<16x1xi32>
    %122 = arith.andi %118, %121 : vector<16x1xi32>
    %c0_i32_45 = arith.constant 0 : i32
    %123 = vector.broadcast %c0_i32_45 : i32 to vector<16x1xi32>
    %124 = arith.cmpi slt, %122, %123 : vector<16x1xi32>
    %c2147483647_i32_46 = arith.constant 2147483647 : i32
    %125 = vector.broadcast %c2147483647_i32_46 : i32 to vector<16x1xi32>
    %126 = arith.xori %122, %125 : vector<16x1xi32>
    %127 = arith.select %124, %126, %122 : vector<16x1xi1>, vector<16x1xi32>
    %128 = tpu.bitcast %127 : vector<16x1xi32> -> vector<16x1xf32>
    %129 = arith.subf %128, %41 : vector<16x1xf32>
    %130 = math.exp %129 : vector<16x1xf32>
    %131 = arith.addf %109, %130 : vector<16x1xf32>
    %cst_47 = arith.constant 0.000000e+00 : f32
    %132 = vector.shape_cast %130 : vector<16x1xf32> to vector<16x1xf32>
    %133 = vector.broadcast %132 : vector<16x1xf32> to vector<16x16xf32>
    %134 = vector.broadcast %cst_47 : f32 to vector<16x16xf32>
    %135 = arith.select %120, %133, %134 : vector<16x16xi1>, vector<16x16xf32>
    %136 = arith.addf %114, %135 : vector<16x16xf32>
    %c-2147483648_i32_48 = arith.constant -2147483648 : i32
    %137 = vector.broadcast %c-2147483648_i32_48 : i32 to vector<16x16xi32>
    %138 = arith.select %120, %137, %116 : vector<16x16xi1>, vector<16x16xi32>
    %cst_49 = arith.constant dense<-2147483648> : vector<16xi32>
    %139 = vector.multi_reduction <maxsi>, %138, %cst_49 [1] : vector<16x16xi32> to vector<16xi32>
    %140 = vector.shape_cast %139 : vector<16xi32> to vector<16x1xi32>
    %141 = vector.broadcast %140 : vector<16x1xi32> to vector<16x16xi32>
    %142 = arith.cmpi eq, %138, %141 : vector<16x16xi32>
    %c-16_i32_50 = arith.constant -16 : i32
    %143 = vector.broadcast %c-16_i32_50 : i32 to vector<16x1xi32>
    %144 = arith.andi %140, %143 : vector<16x1xi32>
    %c0_i32_51 = arith.constant 0 : i32
    %145 = vector.broadcast %c0_i32_51 : i32 to vector<16x1xi32>
    %146 = arith.cmpi slt, %144, %145 : vector<16x1xi32>
    %c2147483647_i32_52 = arith.constant 2147483647 : i32
    %147 = vector.broadcast %c2147483647_i32_52 : i32 to vector<16x1xi32>
    %148 = arith.xori %144, %147 : vector<16x1xi32>
    %149 = arith.select %146, %148, %144 : vector<16x1xi1>, vector<16x1xi32>
    %150 = tpu.bitcast %149 : vector<16x1xi32> -> vector<16x1xf32>
    %151 = arith.subf %150, %41 : vector<16x1xf32>
    %152 = math.exp %151 : vector<16x1xf32>
    %153 = arith.addf %131, %152 : vector<16x1xf32>
    %cst_53 = arith.constant 0.000000e+00 : f32
    %154 = vector.shape_cast %152 : vector<16x1xf32> to vector<16x1xf32>
    %155 = vector.broadcast %154 : vector<16x1xf32> to vector<16x16xf32>
    %156 = vector.broadcast %cst_53 : f32 to vector<16x16xf32>
    %157 = arith.select %142, %155, %156 : vector<16x16xi1>, vector<16x16xf32>
    %158 = arith.addf %136, %157 : vector<16x16xf32>
    %c-2147483648_i32_54 = arith.constant -2147483648 : i32
    %159 = vector.broadcast %c-2147483648_i32_54 : i32 to vector<16x16xi32>
    %160 = arith.select %142, %159, %138 : vector<16x16xi1>, vector<16x16xi32>
    %cst_55 = arith.constant dense<-2147483648> : vector<16xi32>
    %161 = vector.multi_reduction <maxsi>, %160, %cst_55 [1] : vector<16x16xi32> to vector<16xi32>
    %162 = vector.shape_cast %161 : vector<16xi32> to vector<16x1xi32>
    %163 = vector.broadcast %162 : vector<16x1xi32> to vector<16x16xi32>
    %164 = arith.cmpi eq, %160, %163 : vector<16x16xi32>
    %c-16_i32_56 = arith.constant -16 : i32
    %165 = vector.broadcast %c-16_i32_56 : i32 to vector<16x1xi32>
    %166 = arith.andi %162, %165 : vector<16x1xi32>
    %c0_i32_57 = arith.constant 0 : i32
    %167 = vector.broadcast %c0_i32_57 : i32 to vector<16x1xi32>
    %168 = arith.cmpi slt, %166, %167 : vector<16x1xi32>
    %c2147483647_i32_58 = arith.constant 2147483647 : i32
    %169 = vector.broadcast %c2147483647_i32_58 : i32 to vector<16x1xi32>
    %170 = arith.xori %166, %169 : vector<16x1xi32>
    %171 = arith.select %168, %170, %166 : vector<16x1xi1>, vector<16x1xi32>
    %172 = tpu.bitcast %171 : vector<16x1xi32> -> vector<16x1xf32>
    %173 = arith.subf %172, %41 : vector<16x1xf32>
    %174 = math.exp %173 : vector<16x1xf32>
    %175 = arith.addf %153, %174 : vector<16x1xf32>
    %cst_59 = arith.constant 0.000000e+00 : f32
    %176 = vector.shape_cast %174 : vector<16x1xf32> to vector<16x1xf32>
    %177 = vector.broadcast %176 : vector<16x1xf32> to vector<16x16xf32>
    %178 = vector.broadcast %cst_59 : f32 to vector<16x16xf32>
    %179 = arith.select %164, %177, %178 : vector<16x16xi1>, vector<16x16xf32>
    %180 = arith.addf %158, %179 : vector<16x16xf32>
    %c-2147483648_i32_60 = arith.constant -2147483648 : i32
    %181 = vector.broadcast %c-2147483648_i32_60 : i32 to vector<16x16xi32>
    %182 = arith.select %164, %181, %160 : vector<16x16xi1>, vector<16x16xi32>
    %cst_61 = arith.constant dense<-2147483648> : vector<16xi32>
    %183 = vector.multi_reduction <maxsi>, %182, %cst_61 [1] : vector<16x16xi32> to vector<16xi32>
    %184 = vector.shape_cast %183 : vector<16xi32> to vector<16x1xi32>
    %185 = vector.broadcast %184 : vector<16x1xi32> to vector<16x16xi32>
    %186 = arith.cmpi eq, %182, %185 : vector<16x16xi32>
    %c-16_i32_62 = arith.constant -16 : i32
    %187 = vector.broadcast %c-16_i32_62 : i32 to vector<16x1xi32>
    %188 = arith.andi %184, %187 : vector<16x1xi32>
    %c0_i32_63 = arith.constant 0 : i32
    %189 = vector.broadcast %c0_i32_63 : i32 to vector<16x1xi32>
    %190 = arith.cmpi slt, %188, %189 : vector<16x1xi32>
    %c2147483647_i32_64 = arith.constant 2147483647 : i32
    %191 = vector.broadcast %c2147483647_i32_64 : i32 to vector<16x1xi32>
    %192 = arith.xori %188, %191 : vector<16x1xi32>
    %193 = arith.select %190, %192, %188 : vector<16x1xi1>, vector<16x1xi32>
    %194 = tpu.bitcast %193 : vector<16x1xi32> -> vector<16x1xf32>
    %195 = arith.subf %194, %41 : vector<16x1xf32>
    %196 = math.exp %195 : vector<16x1xf32>
    %197 = arith.addf %175, %196 : vector<16x1xf32>
    %cst_65 = arith.constant 0.000000e+00 : f32
    %198 = vector.shape_cast %196 : vector<16x1xf32> to vector<16x1xf32>
    %199 = vector.broadcast %198 : vector<16x1xf32> to vector<16x16xf32>
    %200 = vector.broadcast %cst_65 : f32 to vector<16x16xf32>
    %201 = arith.select %186, %199, %200 : vector<16x16xi1>, vector<16x16xf32>
    %202 = arith.addf %180, %201 : vector<16x16xf32>
    %203 = tpu.reciprocal %197 {approx = true} : vector<16x1xf32> -> vector<16x1xf32>
    %204 = arith.mulf %197, %203 : vector<16x1xf32>
    %cst_66 = arith.constant 2.000000e+00 : f32
    %205 = vector.broadcast %cst_66 : f32 to vector<16x1xf32>
    %206 = arith.subf %205, %204 : vector<16x1xf32>
    %207 = arith.mulf %203, %206 : vector<16x1xf32>
    %208 = vector.broadcast %207 : vector<16x1xf32> to vector<16x16xf32>
    %209 = arith.mulf %202, %208 : vector<16x16xf32>
    %210 = tpu.concatenate %42, %64, %86, %108, %130, %152, %174, %196 in 1 : vector<16x1xf32>, vector<16x1xf32>, vector<16x1xf32>, vector<16x1xf32>, vector<16x1xf32>, vector<16x1xf32>, vector<16x1xf32>, vector<16x1xf32> -> vector<16x8xf32>
    %211 = vector.broadcast %207 : vector<16x1xf32> to vector<16x8xf32>
    %212 = arith.mulf %210, %211 : vector<16x8xf32>
    %c0_67 = arith.constant 0 : index
    %c0_68 = arith.constant 0 : index
    %c0_69 = arith.constant 0 : index
    %c0_70 = arith.constant 0 : index
    %213 = vector.load %arg12[%c0_67, %c0_68, %c0_69, %c0_70] : memref<1x4x16x8xf32, #tpu.memory_space<vmem>>, vector<1x1x16x8xf32>
    %214 = vector.shape_cast %213 : vector<1x1x16x8xf32> to vector<16x8xf32>
    %215 = vector.shape_cast %212 : vector<16x8xf32> to vector<1x1x16x8xf32>
    tpu.vector_store %arg12[%c0_67, %c0_68, %c0_69, %c0_70], %215 {strides = array<i32>} : memref<1x4x16x8xf32, #tpu.memory_space<vmem>>, vector<1x1x16x8xf32>,
    %cst_71 = arith.constant dense<0.000000e+00> : vector<16x8xf32>
    %216 = tpu.matmul %209, %17, %cst_71 {dimension_numbers = #tpu.dot_dimension_numbers<[1], [0], [0], [1], [0, 0, 1, 1], [], []>} : vector<16x16xf32>, vector<16x8xf32>, vector<16x8xf32> -> vector<16x8xf32>
    %217 = vector.extract_strided_slice %7 {offsets = [0, 8], sizes = [16, 8], strides = [1, 1]} : vector<16x32xf32> to vector<16x8xf32>
    %218 = vector.extract_strided_slice %9 {offsets = [0, 8], sizes = [16, 8], strides = [1, 1]} : vector<16x32xf32> to vector<16x8xf32>
    %219 = vector.extract_strided_slice %11 {offsets = [0, 8], sizes = [16, 8], strides = [1, 1]} : vector<16x32xf32> to vector<16x8xf32>
    %cst_72 = arith.constant dense<0.000000e+00> : vector<16x16xf32>
    %220 = tpu.matmul %217, %218, %cst_72 {dimension_numbers = #tpu.dot_dimension_numbers<[1], [1], [0], [0], [0, 0, 1, 0], [], []>} : vector<16x8xf32>, vector<16x8xf32>, vector<16x16xf32> -> vector<16x16xf32>
    %221 = tpu.bitcast %220 : vector<16x16xf32> -> vector<16x16xi32>
    %c0_i32_73 = arith.constant 0 : i32
    %222 = vector.broadcast %c0_i32_73 : i32 to vector<16x16xi32>
    %223 = arith.cmpi slt, %221, %222 : vector<16x16xi32>
    %c2147483647_i32_74 = arith.constant 2147483647 : i32
    %224 = vector.broadcast %c2147483647_i32_74 : i32 to vector<16x16xi32>
    %225 = arith.xori %221, %224 : vector<16x16xi32>
    %226 = arith.select %223, %225, %221 : vector<16x16xi1>, vector<16x16xi32>
    %c-16_i32_75 = arith.constant -16 : i32
    %227 = vector.broadcast %c-16_i32_75 : i32 to vector<16x16xi32>
    %228 = arith.andi %226, %227 : vector<16x16xi32>
    %229 = arith.ori %228, %14 : vector<16x16xi32>
    %cst_76 = arith.constant 0.000000e+00 : f32
    %230 = vector.broadcast %cst_76 : f32 to vector<16x16xf32>
    %cst_77 = arith.constant 0.000000e+00 : f32
    %231 = vector.broadcast %cst_77 : f32 to vector<16x1xf32>
    %cst_78 = arith.constant dense<-2147483648> : vector<16xi32>
    %232 = vector.multi_reduction <maxsi>, %229, %cst_78 [1] : vector<16x16xi32> to vector<16xi32>
    %233 = vector.shape_cast %232 : vector<16xi32> to vector<16x1xi32>
    %234 = vector.broadcast %233 : vector<16x1xi32> to vector<16x16xi32>
    %235 = arith.cmpi eq, %229, %234 : vector<16x16xi32>
    %c-16_i32_79 = arith.constant -16 : i32
    %236 = vector.broadcast %c-16_i32_79 : i32 to vector<16x1xi32>
    %237 = arith.andi %233, %236 : vector<16x1xi32>
    %c0_i32_80 = arith.constant 0 : i32
    %238 = vector.broadcast %c0_i32_80 : i32 to vector<16x1xi32>
    %239 = arith.cmpi slt, %237, %238 : vector<16x1xi32>
    %c2147483647_i32_81 = arith.constant 2147483647 : i32
    %240 = vector.broadcast %c2147483647_i32_81 : i32 to vector<16x1xi32>
    %241 = arith.xori %237, %240 : vector<16x1xi32>
    %242 = arith.select %239, %241, %237 : vector<16x1xi1>, vector<16x1xi32>
    %243 = tpu.bitcast %242 : vector<16x1xi32> -> vector<16x1xf32>
    %cst_82 = arith.constant 1.000000e+00 : f32
    %244 = vector.broadcast %cst_82 : f32 to vector<16x1xf32>
    %245 = arith.addf %231, %244 : vector<16x1xf32>
    %cst_83 = arith.constant 0.000000e+00 : f32
    %246 = vector.shape_cast %244 : vector<16x1xf32> to vector<16x1xf32>
    %247 = vector.broadcast %246 : vector<16x1xf32> to vector<16x16xf32>
    %248 = vector.broadcast %cst_83 : f32 to vector<16x16xf32>
    %249 = arith.select %235, %247, %248 : vector<16x16xi1>, vector<16x16xf32>
    %250 = arith.addf %230, %249 : vector<16x16xf32>
    %c-2147483648_i32_84 = arith.constant -2147483648 : i32
    %251 = vector.broadcast %c-2147483648_i32_84 : i32 to vector<16x16xi32>
    %252 = arith.select %235, %251, %229 : vector<16x16xi1>, vector<16x16xi32>
    %cst_85 = arith.constant dense<-2147483648> : vector<16xi32>
    %253 = vector.multi_reduction <maxsi>, %252, %cst_85 [1] : vector<16x16xi32> to vector<16xi32>
    %254 = vector.shape_cast %253 : vector<16xi32> to vector<16x1xi32>
    %255 = vector.broadcast %254 : vector<16x1xi32> to vector<16x16xi32>
    %256 = arith.cmpi eq, %252, %255 : vector<16x16xi32>
    %c-16_i32_86 = arith.constant -16 : i32
    %257 = vector.broadcast %c-16_i32_86 : i32 to vector<16x1xi32>
    %258 = arith.andi %254, %257 : vector<16x1xi32>
    %c0_i32_87 = arith.constant 0 : i32
    %259 = vector.broadcast %c0_i32_87 : i32 to vector<16x1xi32>
    %260 = arith.cmpi slt, %258, %259 : vector<16x1xi32>
    %c2147483647_i32_88 = arith.constant 2147483647 : i32
    %261 = vector.broadcast %c2147483647_i32_88 : i32 to vector<16x1xi32>
    %262 = arith.xori %258, %261 : vector<16x1xi32>
    %263 = arith.select %260, %262, %258 : vector<16x1xi1>, vector<16x1xi32>
    %264 = tpu.bitcast %263 : vector<16x1xi32> -> vector<16x1xf32>
    %265 = arith.subf %264, %243 : vector<16x1xf32>
    %266 = math.exp %265 : vector<16x1xf32>
    %267 = arith.addf %245, %266 : vector<16x1xf32>
    %cst_89 = arith.constant 0.000000e+00 : f32
    %268 = vector.shape_cast %266 : vector<16x1xf32> to vector<16x1xf32>
    %269 = vector.broadcast %268 : vector<16x1xf32> to vector<16x16xf32>
    %270 = vector.broadcast %cst_89 : f32 to vector<16x16xf32>
    %271 = arith.select %256, %269, %270 : vector<16x16xi1>, vector<16x16xf32>
    %272 = arith.addf %250, %271 : vector<16x16xf32>
    %c-2147483648_i32_90 = arith.constant -2147483648 : i32
    %273 = vector.broadcast %c-2147483648_i32_90 : i32 to vector<16x16xi32>
    %274 = arith.select %256, %273, %252 : vector<16x16xi1>, vector<16x16xi32>
    %cst_91 = arith.constant dense<-2147483648> : vector<16xi32>
    %275 = vector.multi_reduction <maxsi>, %274, %cst_91 [1] : vector<16x16xi32> to vector<16xi32>
    %276 = vector.shape_cast %275 : vector<16xi32> to vector<16x1xi32>
    %277 = vector.broadcast %276 : vector<16x1xi32> to vector<16x16xi32>
    %278 = arith.cmpi eq, %274, %277 : vector<16x16xi32>
    %c-16_i32_92 = arith.constant -16 : i32
    %279 = vector.broadcast %c-16_i32_92 : i32 to vector<16x1xi32>
    %280 = arith.andi %276, %279 : vector<16x1xi32>
    %c0_i32_93 = arith.constant 0 : i32
    %281 = vector.broadcast %c0_i32_93 : i32 to vector<16x1xi32>
    %282 = arith.cmpi slt, %280, %281 : vector<16x1xi32>
    %c2147483647_i32_94 = arith.constant 2147483647 : i32
    %283 = vector.broadcast %c2147483647_i32_94 : i32 to vector<16x1xi32>
    %284 = arith.xori %280, %283 : vector<16x1xi32>
    %285 = arith.select %282, %284, %280 : vector<16x1xi1>, vector<16x1xi32>
    %286 = tpu.bitcast %285 : vector<16x1xi32> -> vector<16x1xf32>
    %287 = arith.subf %286, %243 : vector<16x1xf32>
    %288 = math.exp %287 : vector<16x1xf32>
    %289 = arith.addf %267, %288 : vector<16x1xf32>
    %cst_95 = arith.constant 0.000000e+00 : f32
    %290 = vector.shape_cast %288 : vector<16x1xf32> to vector<16x1xf32>
    %291 = vector.broadcast %290 : vector<16x1xf32> to vector<16x16xf32>
    %292 = vector.broadcast %cst_95 : f32 to vector<16x16xf32>
    %293 = arith.select %278, %291, %292 : vector<16x16xi1>, vector<16x16xf32>
    %294 = arith.addf %272, %293 : vector<16x16xf32>
    %c-2147483648_i32_96 = arith.constant -2147483648 : i32
    %295 = vector.broadcast %c-2147483648_i32_96 : i32 to vector<16x16xi32>
    %296 = arith.select %278, %295, %274 : vector<16x16xi1>, vector<16x16xi32>
    %cst_97 = arith.constant dense<-2147483648> : vector<16xi32>
    %297 = vector.multi_reduction <maxsi>, %296, %cst_97 [1] : vector<16x16xi32> to vector<16xi32>
    %298 = vector.shape_cast %297 : vector<16xi32> to vector<16x1xi32>
    %299 = vector.broadcast %298 : vector<16x1xi32> to vector<16x16xi32>
    %300 = arith.cmpi eq, %296, %299 : vector<16x16xi32>
    %c-16_i32_98 = arith.constant -16 : i32
    %301 = vector.broadcast %c-16_i32_98 : i32 to vector<16x1xi32>
    %302 = arith.andi %298, %301 : vector<16x1xi32>
    %c0_i32_99 = arith.constant 0 : i32
    %303 = vector.broadcast %c0_i32_99 : i32 to vector<16x1xi32>
    %304 = arith.cmpi slt, %302, %303 : vector<16x1xi32>
    %c2147483647_i32_100 = arith.constant 2147483647 : i32
    %305 = vector.broadcast %c2147483647_i32_100 : i32 to vector<16x1xi32>
    %306 = arith.xori %302, %305 : vector<16x1xi32>
    %307 = arith.select %304, %306, %302 : vector<16x1xi1>, vector<16x1xi32>
    %308 = tpu.bitcast %307 : vector<16x1xi32> -> vector<16x1xf32>
    %309 = arith.subf %308, %243 : vector<16x1xf32>
    %310 = math.exp %309 : vector<16x1xf32>
    %311 = arith.addf %289, %310 : vector<16x1xf32>
    %cst_101 = arith.constant 0.000000e+00 : f32
    %312 = vector.shape_cast %310 : vector<16x1xf32> to vector<16x1xf32>
    %313 = vector.broadcast %312 : vector<16x1xf32> to vector<16x16xf32>
    %314 = vector.broadcast %cst_101 : f32 to vector<16x16xf32>
    %315 = arith.select %300, %313, %314 : vector<16x16xi1>, vector<16x16xf32>
    %316 = arith.addf %294, %315 : vector<16x16xf32>
    %c-2147483648_i32_102 = arith.constant -2147483648 : i32
    %317 = vector.broadcast %c-2147483648_i32_102 : i32 to vector<16x16xi32>
    %318 = arith.select %300, %317, %296 : vector<16x16xi1>, vector<16x16xi32>
    %cst_103 = arith.constant dense<-2147483648> : vector<16xi32>
    %319 = vector.multi_reduction <maxsi>, %318, %cst_103 [1] : vector<16x16xi32> to vector<16xi32>
    %320 = vector.shape_cast %319 : vector<16xi32> to vector<16x1xi32>
    %321 = vector.broadcast %320 : vector<16x1xi32> to vector<16x16xi32>
    %322 = arith.cmpi eq, %318, %321 : vector<16x16xi32>
    %c-16_i32_104 = arith.constant -16 : i32
    %323 = vector.broadcast %c-16_i32_104 : i32 to vector<16x1xi32>
    %324 = arith.andi %320, %323 : vector<16x1xi32>
    %c0_i32_105 = arith.constant 0 : i32
    %325 = vector.broadcast %c0_i32_105 : i32 to vector<16x1xi32>
    %326 = arith.cmpi slt, %324, %325 : vector<16x1xi32>
    %c2147483647_i32_106 = arith.constant 2147483647 : i32
    %327 = vector.broadcast %c2147483647_i32_106 : i32 to vector<16x1xi32>
    %328 = arith.xori %324, %327 : vector<16x1xi32>
    %329 = arith.select %326, %328, %324 : vector<16x1xi1>, vector<16x1xi32>
    %330 = tpu.bitcast %329 : vector<16x1xi32> -> vector<16x1xf32>
    %331 = arith.subf %330, %243 : vector<16x1xf32>
    %332 = math.exp %331 : vector<16x1xf32>
    %333 = arith.addf %311, %332 : vector<16x1xf32>
    %cst_107 = arith.constant 0.000000e+00 : f32
    %334 = vector.shape_cast %332 : vector<16x1xf32> to vector<16x1xf32>
    %335 = vector.broadcast %334 : vector<16x1xf32> to vector<16x16xf32>
    %336 = vector.broadcast %cst_107 : f32 to vector<16x16xf32>
    %337 = arith.select %322, %335, %336 : vector<16x16xi1>, vector<16x16xf32>
    %338 = arith.addf %316, %337 : vector<16x16xf32>
    %c-2147483648_i32_108 = arith.constant -2147483648 : i32
    %339 = vector.broadcast %c-2147483648_i32_108 : i32 to vector<16x16xi32>
    %340 = arith.select %322, %339, %318 : vector<16x16xi1>, vector<16x16xi32>
    %cst_109 = arith.constant dense<-2147483648> : vector<16xi32>
    %341 = vector.multi_reduction <maxsi>, %340, %cst_109 [1] : vector<16x16xi32> to vector<16xi32>
    %342 = vector.shape_cast %341 : vector<16xi32> to vector<16x1xi32>
    %343 = vector.broadcast %342 : vector<16x1xi32> to vector<16x16xi32>
    %344 = arith.cmpi eq, %340, %343 : vector<16x16xi32>
    %c-16_i32_110 = arith.constant -16 : i32
    %345 = vector.broadcast %c-16_i32_110 : i32 to vector<16x1xi32>
    %346 = arith.andi %342, %345 : vector<16x1xi32>
    %c0_i32_111 = arith.constant 0 : i32
    %347 = vector.broadcast %c0_i32_111 : i32 to vector<16x1xi32>
    %348 = arith.cmpi slt, %346, %347 : vector<16x1xi32>
    %c2147483647_i32_112 = arith.constant 2147483647 : i32
    %349 = vector.broadcast %c2147483647_i32_112 : i32 to vector<16x1xi32>
    %350 = arith.xori %346, %349 : vector<16x1xi32>
    %351 = arith.select %348, %350, %346 : vector<16x1xi1>, vector<16x1xi32>
    %352 = tpu.bitcast %351 : vector<16x1xi32> -> vector<16x1xf32>
    %353 = arith.subf %352, %243 : vector<16x1xf32>
    %354 = math.exp %353 : vector<16x1xf32>
    %355 = arith.addf %333, %354 : vector<16x1xf32>
    %cst_113 = arith.constant 0.000000e+00 : f32
    %356 = vector.shape_cast %354 : vector<16x1xf32> to vector<16x1xf32>
    %357 = vector.broadcast %356 : vector<16x1xf32> to vector<16x16xf32>
    %358 = vector.broadcast %cst_113 : f32 to vector<16x16xf32>
    %359 = arith.select %344, %357, %358 : vector<16x16xi1>, vector<16x16xf32>
    %360 = arith.addf %338, %359 : vector<16x16xf32>
    %c-2147483648_i32_114 = arith.constant -2147483648 : i32
    %361 = vector.broadcast %c-2147483648_i32_114 : i32 to vector<16x16xi32>
    %362 = arith.select %344, %361, %340 : vector<16x16xi1>, vector<16x16xi32>
    %cst_115 = arith.constant dense<-2147483648> : vector<16xi32>
    %363 = vector.multi_reduction <maxsi>, %362, %cst_115 [1] : vector<16x16xi32> to vector<16xi32>
    %364 = vector.shape_cast %363 : vector<16xi32> to vector<16x1xi32>
    %365 = vector.broadcast %364 : vector<16x1xi32> to vector<16x16xi32>
    %366 = arith.cmpi eq, %362, %365 : vector<16x16xi32>
    %c-16_i32_116 = arith.constant -16 : i32
    %367 = vector.broadcast %c-16_i32_116 : i32 to vector<16x1xi32>
    %368 = arith.andi %364, %367 : vector<16x1xi32>
    %c0_i32_117 = arith.constant 0 : i32
    %369 = vector.broadcast %c0_i32_117 : i32 to vector<16x1xi32>
    %370 = arith.cmpi slt, %368, %369 : vector<16x1xi32>
    %c2147483647_i32_118 = arith.constant 2147483647 : i32
    %371 = vector.broadcast %c2147483647_i32_118 : i32 to vector<16x1xi32>
    %372 = arith.xori %368, %371 : vector<16x1xi32>
    %373 = arith.select %370, %372, %368 : vector<16x1xi1>, vector<16x1xi32>
    %374 = tpu.bitcast %373 : vector<16x1xi32> -> vector<16x1xf32>
    %375 = arith.subf %374, %243 : vector<16x1xf32>
    %376 = math.exp %375 : vector<16x1xf32>
    %377 = arith.addf %355, %376 : vector<16x1xf32>
    %cst_119 = arith.constant 0.000000e+00 : f32
    %378 = vector.shape_cast %376 : vector<16x1xf32> to vector<16x1xf32>
    %379 = vector.broadcast %378 : vector<16x1xf32> to vector<16x16xf32>
    %380 = vector.broadcast %cst_119 : f32 to vector<16x16xf32>
    %381 = arith.select %366, %379, %380 : vector<16x16xi1>, vector<16x16xf32>
    %382 = arith.addf %360, %381 : vector<16x16xf32>
    %c-2147483648_i32_120 = arith.constant -2147483648 : i32
    %383 = vector.broadcast %c-2147483648_i32_120 : i32 to vector<16x16xi32>
    %384 = arith.select %366, %383, %362 : vector<16x16xi1>, vector<16x16xi32>
    %cst_121 = arith.constant dense<-2147483648> : vector<16xi32>
    %385 = vector.multi_reduction <maxsi>, %384, %cst_121 [1] : vector<16x16xi32> to vector<16xi32>
    %386 = vector.shape_cast %385 : vector<16xi32> to vector<16x1xi32>
    %387 = vector.broadcast %386 : vector<16x1xi32> to vector<16x16xi32>
    %388 = arith.cmpi eq, %384, %387 : vector<16x16xi32>
    %c-16_i32_122 = arith.constant -16 : i32
    %389 = vector.broadcast %c-16_i32_122 : i32 to vector<16x1xi32>
    %390 = arith.andi %386, %389 : vector<16x1xi32>
    %c0_i32_123 = arith.constant 0 : i32
    %391 = vector.broadcast %c0_i32_123 : i32 to vector<16x1xi32>
    %392 = arith.cmpi slt, %390, %391 : vector<16x1xi32>
    %c2147483647_i32_124 = arith.constant 2147483647 : i32
    %393 = vector.broadcast %c2147483647_i32_124 : i32 to vector<16x1xi32>
    %394 = arith.xori %390, %393 : vector<16x1xi32>
    %395 = arith.select %392, %394, %390 : vector<16x1xi1>, vector<16x1xi32>
    %396 = tpu.bitcast %395 : vector<16x1xi32> -> vector<16x1xf32>
    %397 = arith.subf %396, %243 : vector<16x1xf32>
    %398 = math.exp %397 : vector<16x1xf32>
    %399 = arith.addf %377, %398 : vector<16x1xf32>
    %cst_125 = arith.constant 0.000000e+00 : f32
    %400 = vector.shape_cast %398 : vector<16x1xf32> to vector<16x1xf32>
    %401 = vector.broadcast %400 : vector<16x1xf32> to vector<16x16xf32>
    %402 = vector.broadcast %cst_125 : f32 to vector<16x16xf32>
    %403 = arith.select %388, %401, %402 : vector<16x16xi1>, vector<16x16xf32>
    %404 = arith.addf %382, %403 : vector<16x16xf32>
    %405 = tpu.reciprocal %399 {approx = true} : vector<16x1xf32> -> vector<16x1xf32>
    %406 = arith.mulf %399, %405 : vector<16x1xf32>
    %cst_126 = arith.constant 2.000000e+00 : f32
    %407 = vector.broadcast %cst_126 : f32 to vector<16x1xf32>
    %408 = arith.subf %407, %406 : vector<16x1xf32>
    %409 = arith.mulf %405, %408 : vector<16x1xf32>
    %410 = vector.broadcast %409 : vector<16x1xf32> to vector<16x16xf32>
    %411 = arith.mulf %404, %410 : vector<16x16xf32>
    %412 = tpu.concatenate %244, %266, %288, %310, %332, %354, %376, %398 in 1 : vector<16x1xf32>, vector<16x1xf32>, vector<16x1xf32>, vector<16x1xf32>, vector<16x1xf32>, vector<16x1xf32>, vector<16x1xf32>, vector<16x1xf32> -> vector<16x8xf32>
    %413 = vector.broadcast %409 : vector<16x1xf32> to vector<16x8xf32>
    %414 = arith.mulf %412, %413 : vector<16x8xf32>
    %c0_127 = arith.constant 0 : index
    %c1 = arith.constant 1 : index
    %c0_128 = arith.constant 0 : index
    %c0_129 = arith.constant 0 : index
    %415 = vector.load %arg12[%c0_127, %c1, %c0_128, %c0_129] : memref<1x4x16x8xf32, #tpu.memory_space<vmem>>, vector<1x1x16x8xf32>
    %416 = vector.shape_cast %415 : vector<1x1x16x8xf32> to vector<16x8xf32>
    %417 = vector.shape_cast %414 : vector<16x8xf32> to vector<1x1x16x8xf32>
    tpu.vector_store %arg12[%c0_127, %c1, %c0_128, %c0_129], %417 {strides = array<i32>} : memref<1x4x16x8xf32, #tpu.memory_space<vmem>>, vector<1x1x16x8xf32>,
    %cst_130 = arith.constant dense<0.000000e+00> : vector<16x8xf32>
    %418 = tpu.matmul %411, %219, %cst_130 {dimension_numbers = #tpu.dot_dimension_numbers<[1], [0], [0], [1], [0, 0, 1, 1], [], []>} : vector<16x16xf32>, vector<16x8xf32>, vector<16x8xf32> -> vector<16x8xf32>
    %419 = vector.extract_strided_slice %7 {offsets = [0, 16], sizes = [16, 8], strides = [1, 1]} : vector<16x32xf32> to vector<16x8xf32>
    %420 = vector.extract_strided_slice %9 {offsets = [0, 16], sizes = [16, 8], strides = [1, 1]} : vector<16x32xf32> to vector<16x8xf32>
    %421 = vector.extract_strided_slice %11 {offsets = [0, 16], sizes = [16, 8], strides = [1, 1]} : vector<16x32xf32> to vector<16x8xf32>
    %cst_131 = arith.constant dense<0.000000e+00> : vector<16x16xf32>
    %422 = tpu.matmul %419, %420, %cst_131 {dimension_numbers = #tpu.dot_dimension_numbers<[1], [1], [0], [0], [0, 0, 1, 0], [], []>} : vector<16x8xf32>, vector<16x8xf32>, vector<16x16xf32> -> vector<16x16xf32>
    %423 = tpu.bitcast %422 : vector<16x16xf32> -> vector<16x16xi32>
    %c0_i32_132 = arith.constant 0 : i32
    %424 = vector.broadcast %c0_i32_132 : i32 to vector<16x16xi32>
    %425 = arith.cmpi slt, %423, %424 : vector<16x16xi32>
    %c2147483647_i32_133 = arith.constant 2147483647 : i32
    %426 = vector.broadcast %c2147483647_i32_133 : i32 to vector<16x16xi32>
    %427 = arith.xori %423, %426 : vector<16x16xi32>
    %428 = arith.select %425, %427, %423 : vector<16x16xi1>, vector<16x16xi32>
    %c-16_i32_134 = arith.constant -16 : i32
    %429 = vector.broadcast %c-16_i32_134 : i32 to vector<16x16xi32>
    %430 = arith.andi %428, %429 : vector<16x16xi32>
    %431 = arith.ori %430, %14 : vector<16x16xi32>
    %cst_135 = arith.constant 0.000000e+00 : f32
    %432 = vector.broadcast %cst_135 : f32 to vector<16x16xf32>
    %cst_136 = arith.constant 0.000000e+00 : f32
    %433 = vector.broadcast %cst_136 : f32 to vector<16x1xf32>
    %cst_137 = arith.constant dense<-2147483648> : vector<16xi32>
    %434 = vector.multi_reduction <maxsi>, %431, %cst_137 [1] : vector<16x16xi32> to vector<16xi32>
    %435 = vector.shape_cast %434 : vector<16xi32> to vector<16x1xi32>
    %436 = vector.broadcast %435 : vector<16x1xi32> to vector<16x16xi32>
    %437 = arith.cmpi eq, %431, %436 : vector<16x16xi32>
    %c-16_i32_138 = arith.constant -16 : i32
    %438 = vector.broadcast %c-16_i32_138 : i32 to vector<16x1xi32>
    %439 = arith.andi %435, %438 : vector<16x1xi32>
    %c0_i32_139 = arith.constant 0 : i32
    %440 = vector.broadcast %c0_i32_139 : i32 to vector<16x1xi32>
    %441 = arith.cmpi slt, %439, %440 : vector<16x1xi32>
    %c2147483647_i32_140 = arith.constant 2147483647 : i32
    %442 = vector.broadcast %c2147483647_i32_140 : i32 to vector<16x1xi32>
    %443 = arith.xori %439, %442 : vector<16x1xi32>
    %444 = arith.select %441, %443, %439 : vector<16x1xi1>, vector<16x1xi32>
    %445 = tpu.bitcast %444 : vector<16x1xi32> -> vector<16x1xf32>
    %cst_141 = arith.constant 1.000000e+00 : f32
    %446 = vector.broadcast %cst_141 : f32 to vector<16x1xf32>
    %447 = arith.addf %433, %446 : vector<16x1xf32>
    %cst_142 = arith.constant 0.000000e+00 : f32
    %448 = vector.shape_cast %446 : vector<16x1xf32> to vector<16x1xf32>
    %449 = vector.broadcast %448 : vector<16x1xf32> to vector<16x16xf32>
    %450 = vector.broadcast %cst_142 : f32 to vector<16x16xf32>
    %451 = arith.select %437, %449, %450 : vector<16x16xi1>, vector<16x16xf32>
    %452 = arith.addf %432, %451 : vector<16x16xf32>
    %c-2147483648_i32_143 = arith.constant -2147483648 : i32
    %453 = vector.broadcast %c-2147483648_i32_143 : i32 to vector<16x16xi32>
    %454 = arith.select %437, %453, %431 : vector<16x16xi1>, vector<16x16xi32>
    %cst_144 = arith.constant dense<-2147483648> : vector<16xi32>
    %455 = vector.multi_reduction <maxsi>, %454, %cst_144 [1] : vector<16x16xi32> to vector<16xi32>
    %456 = vector.shape_cast %455 : vector<16xi32> to vector<16x1xi32>
    %457 = vector.broadcast %456 : vector<16x1xi32> to vector<16x16xi32>
    %458 = arith.cmpi eq, %454, %457 : vector<16x16xi32>
    %c-16_i32_145 = arith.constant -16 : i32
    %459 = vector.broadcast %c-16_i32_145 : i32 to vector<16x1xi32>
    %460 = arith.andi %456, %459 : vector<16x1xi32>
    %c0_i32_146 = arith.constant 0 : i32
    %461 = vector.broadcast %c0_i32_146 : i32 to vector<16x1xi32>
    %462 = arith.cmpi slt, %460, %461 : vector<16x1xi32>
    %c2147483647_i32_147 = arith.constant 2147483647 : i32
    %463 = vector.broadcast %c2147483647_i32_147 : i32 to vector<16x1xi32>
    %464 = arith.xori %460, %463 : vector<16x1xi32>
    %465 = arith.select %462, %464, %460 : vector<16x1xi1>, vector<16x1xi32>
    %466 = tpu.bitcast %465 : vector<16x1xi32> -> vector<16x1xf32>
    %467 = arith.subf %466, %445 : vector<16x1xf32>
    %468 = math.exp %467 : vector<16x1xf32>
    %469 = arith.addf %447, %468 : vector<16x1xf32>
    %cst_148 = arith.constant 0.000000e+00 : f32
    %470 = vector.shape_cast %468 : vector<16x1xf32> to vector<16x1xf32>
    %471 = vector.broadcast %470 : vector<16x1xf32> to vector<16x16xf32>
    %472 = vector.broadcast %cst_148 : f32 to vector<16x16xf32>
    %473 = arith.select %458, %471, %472 : vector<16x16xi1>, vector<16x16xf32>
    %474 = arith.addf %452, %473 : vector<16x16xf32>
    %c-2147483648_i32_149 = arith.constant -2147483648 : i32
    %475 = vector.broadcast %c-2147483648_i32_149 : i32 to vector<16x16xi32>
    %476 = arith.select %458, %475, %454 : vector<16x16xi1>, vector<16x16xi32>
    %cst_150 = arith.constant dense<-2147483648> : vector<16xi32>
    %477 = vector.multi_reduction <maxsi>, %476, %cst_150 [1] : vector<16x16xi32> to vector<16xi32>
    %478 = vector.shape_cast %477 : vector<16xi32> to vector<16x1xi32>
    %479 = vector.broadcast %478 : vector<16x1xi32> to vector<16x16xi32>
    %480 = arith.cmpi eq, %476, %479 : vector<16x16xi32>
    %c-16_i32_151 = arith.constant -16 : i32
    %481 = vector.broadcast %c-16_i32_151 : i32 to vector<16x1xi32>
    %482 = arith.andi %478, %481 : vector<16x1xi32>
    %c0_i32_152 = arith.constant 0 : i32
    %483 = vector.broadcast %c0_i32_152 : i32 to vector<16x1xi32>
    %484 = arith.cmpi slt, %482, %483 : vector<16x1xi32>
    %c2147483647_i32_153 = arith.constant 2147483647 : i32
    %485 = vector.broadcast %c2147483647_i32_153 : i32 to vector<16x1xi32>
    %486 = arith.xori %482, %485 : vector<16x1xi32>
    %487 = arith.select %484, %486, %482 : vector<16x1xi1>, vector<16x1xi32>
    %488 = tpu.bitcast %487 : vector<16x1xi32> -> vector<16x1xf32>
    %489 = arith.subf %488, %445 : vector<16x1xf32>
    %490 = math.exp %489 : vector<16x1xf32>
    %491 = arith.addf %469, %490 : vector<16x1xf32>
    %cst_154 = arith.constant 0.000000e+00 : f32
    %492 = vector.shape_cast %490 : vector<16x1xf32> to vector<16x1xf32>
    %493 = vector.broadcast %492 : vector<16x1xf32> to vector<16x16xf32>
    %494 = vector.broadcast %cst_154 : f32 to vector<16x16xf32>
    %495 = arith.select %480, %493, %494 : vector<16x16xi1>, vector<16x16xf32>
    %496 = arith.addf %474, %495 : vector<16x16xf32>
    %c-2147483648_i32_155 = arith.constant -2147483648 : i32
    %497 = vector.broadcast %c-2147483648_i32_155 : i32 to vector<16x16xi32>
    %498 = arith.select %480, %497, %476 : vector<16x16xi1>, vector<16x16xi32>
    %cst_156 = arith.constant dense<-2147483648> : vector<16xi32>
    %499 = vector.multi_reduction <maxsi>, %498, %cst_156 [1] : vector<16x16xi32> to vector<16xi32>
    %500 = vector.shape_cast %499 : vector<16xi32> to vector<16x1xi32>
    %501 = vector.broadcast %500 : vector<16x1xi32> to vector<16x16xi32>
    %502 = arith.cmpi eq, %498, %501 : vector<16x16xi32>
    %c-16_i32_157 = arith.constant -16 : i32
    %503 = vector.broadcast %c-16_i32_157 : i32 to vector<16x1xi32>
    %504 = arith.andi %500, %503 : vector<16x1xi32>
    %c0_i32_158 = arith.constant 0 : i32
    %505 = vector.broadcast %c0_i32_158 : i32 to vector<16x1xi32>
    %506 = arith.cmpi slt, %504, %505 : vector<16x1xi32>
    %c2147483647_i32_159 = arith.constant 2147483647 : i32
    %507 = vector.broadcast %c2147483647_i32_159 : i32 to vector<16x1xi32>
    %508 = arith.xori %504, %507 : vector<16x1xi32>
    %509 = arith.select %506, %508, %504 : vector<16x1xi1>, vector<16x1xi32>
    %510 = tpu.bitcast %509 : vector<16x1xi32> -> vector<16x1xf32>
    %511 = arith.subf %510, %445 : vector<16x1xf32>
    %512 = math.exp %511 : vector<16x1xf32>
    %513 = arith.addf %491, %512 : vector<16x1xf32>
    %cst_160 = arith.constant 0.000000e+00 : f32
    %514 = vector.shape_cast %512 : vector<16x1xf32> to vector<16x1xf32>
    %515 = vector.broadcast %514 : vector<16x1xf32> to vector<16x16xf32>
    %516 = vector.broadcast %cst_160 : f32 to vector<16x16xf32>
    %517 = arith.select %502, %515, %516 : vector<16x16xi1>, vector<16x16xf32>
    %518 = arith.addf %496, %517 : vector<16x16xf32>
    %c-2147483648_i32_161 = arith.constant -2147483648 : i32
    %519 = vector.broadcast %c-2147483648_i32_161 : i32 to vector<16x16xi32>
    %520 = arith.select %502, %519, %498 : vector<16x16xi1>, vector<16x16xi32>
    %cst_162 = arith.constant dense<-2147483648> : vector<16xi32>
    %521 = vector.multi_reduction <maxsi>, %520, %cst_162 [1] : vector<16x16xi32> to vector<16xi32>
    %522 = vector.shape_cast %521 : vector<16xi32> to vector<16x1xi32>
    %523 = vector.broadcast %522 : vector<16x1xi32> to vector<16x16xi32>
    %524 = arith.cmpi eq, %520, %523 : vector<16x16xi32>
    %c-16_i32_163 = arith.constant -16 : i32
    %525 = vector.broadcast %c-16_i32_163 : i32 to vector<16x1xi32>
    %526 = arith.andi %522, %525 : vector<16x1xi32>
    %c0_i32_164 = arith.constant 0 : i32
    %527 = vector.broadcast %c0_i32_164 : i32 to vector<16x1xi32>
    %528 = arith.cmpi slt, %526, %527 : vector<16x1xi32>
    %c2147483647_i32_165 = arith.constant 2147483647 : i32
    %529 = vector.broadcast %c2147483647_i32_165 : i32 to vector<16x1xi32>
    %530 = arith.xori %526, %529 : vector<16x1xi32>
    %531 = arith.select %528, %530, %526 : vector<16x1xi1>, vector<16x1xi32>
    %532 = tpu.bitcast %531 : vector<16x1xi32> -> vector<16x1xf32>
    %533 = arith.subf %532, %445 : vector<16x1xf32>
    %534 = math.exp %533 : vector<16x1xf32>
    %535 = arith.addf %513, %534 : vector<16x1xf32>
    %cst_166 = arith.constant 0.000000e+00 : f32
    %536 = vector.shape_cast %534 : vector<16x1xf32> to vector<16x1xf32>
    %537 = vector.broadcast %536 : vector<16x1xf32> to vector<16x16xf32>
    %538 = vector.broadcast %cst_166 : f32 to vector<16x16xf32>
    %539 = arith.select %524, %537, %538 : vector<16x16xi1>, vector<16x16xf32>
    %540 = arith.addf %518, %539 : vector<16x16xf32>
    %c-2147483648_i32_167 = arith.constant -2147483648 : i32
    %541 = vector.broadcast %c-2147483648_i32_167 : i32 to vector<16x16xi32>
    %542 = arith.select %524, %541, %520 : vector<16x16xi1>, vector<16x16xi32>
    %cst_168 = arith.constant dense<-2147483648> : vector<16xi32>
    %543 = vector.multi_reduction <maxsi>, %542, %cst_168 [1] : vector<16x16xi32> to vector<16xi32>
    %544 = vector.shape_cast %543 : vector<16xi32> to vector<16x1xi32>
    %545 = vector.broadcast %544 : vector<16x1xi32> to vector<16x16xi32>
    %546 = arith.cmpi eq, %542, %545 : vector<16x16xi32>
    %c-16_i32_169 = arith.constant -16 : i32
    %547 = vector.broadcast %c-16_i32_169 : i32 to vector<16x1xi32>
    %548 = arith.andi %544, %547 : vector<16x1xi32>
    %c0_i32_170 = arith.constant 0 : i32
    %549 = vector.broadcast %c0_i32_170 : i32 to vector<16x1xi32>
    %550 = arith.cmpi slt, %548, %549 : vector<16x1xi32>
    %c2147483647_i32_171 = arith.constant 2147483647 : i32
    %551 = vector.broadcast %c2147483647_i32_171 : i32 to vector<16x1xi32>
    %552 = arith.xori %548, %551 : vector<16x1xi32>
    %553 = arith.select %550, %552, %548 : vector<16x1xi1>, vector<16x1xi32>
    %554 = tpu.bitcast %553 : vector<16x1xi32> -> vector<16x1xf32>
    %555 = arith.subf %554, %445 : vector<16x1xf32>
    %556 = math.exp %555 : vector<16x1xf32>
    %557 = arith.addf %535, %556 : vector<16x1xf32>
    %cst_172 = arith.constant 0.000000e+00 : f32
    %558 = vector.shape_cast %556 : vector<16x1xf32> to vector<16x1xf32>
    %559 = vector.broadcast %558 : vector<16x1xf32> to vector<16x16xf32>
    %560 = vector.broadcast %cst_172 : f32 to vector<16x16xf32>
    %561 = arith.select %546, %559, %560 : vector<16x16xi1>, vector<16x16xf32>
    %562 = arith.addf %540, %561 : vector<16x16xf32>
    %c-2147483648_i32_173 = arith.constant -2147483648 : i32
    %563 = vector.broadcast %c-2147483648_i32_173 : i32 to vector<16x16xi32>
    %564 = arith.select %546, %563, %542 : vector<16x16xi1>, vector<16x16xi32>
    %cst_174 = arith.constant dense<-2147483648> : vector<16xi32>
    %565 = vector.multi_reduction <maxsi>, %564, %cst_174 [1] : vector<16x16xi32> to vector<16xi32>
    %566 = vector.shape_cast %565 : vector<16xi32> to vector<16x1xi32>
    %567 = vector.broadcast %566 : vector<16x1xi32> to vector<16x16xi32>
    %568 = arith.cmpi eq, %564, %567 : vector<16x16xi32>
    %c-16_i32_175 = arith.constant -16 : i32
    %569 = vector.broadcast %c-16_i32_175 : i32 to vector<16x1xi32>
    %570 = arith.andi %566, %569 : vector<16x1xi32>
    %c0_i32_176 = arith.constant 0 : i32
    %571 = vector.broadcast %c0_i32_176 : i32 to vector<16x1xi32>
    %572 = arith.cmpi slt, %570, %571 : vector<16x1xi32>
    %c2147483647_i32_177 = arith.constant 2147483647 : i32
    %573 = vector.broadcast %c2147483647_i32_177 : i32 to vector<16x1xi32>
    %574 = arith.xori %570, %573 : vector<16x1xi32>
    %575 = arith.select %572, %574, %570 : vector<16x1xi1>, vector<16x1xi32>
    %576 = tpu.bitcast %575 : vector<16x1xi32> -> vector<16x1xf32>
    %577 = arith.subf %576, %445 : vector<16x1xf32>
    %578 = math.exp %577 : vector<16x1xf32>
    %579 = arith.addf %557, %578 : vector<16x1xf32>
    %cst_178 = arith.constant 0.000000e+00 : f32
    %580 = vector.shape_cast %578 : vector<16x1xf32> to vector<16x1xf32>
    %581 = vector.broadcast %580 : vector<16x1xf32> to vector<16x16xf32>
    %582 = vector.broadcast %cst_178 : f32 to vector<16x16xf32>
    %583 = arith.select %568, %581, %582 : vector<16x16xi1>, vector<16x16xf32>
    %584 = arith.addf %562, %583 : vector<16x16xf32>
    %c-2147483648_i32_179 = arith.constant -2147483648 : i32
    %585 = vector.broadcast %c-2147483648_i32_179 : i32 to vector<16x16xi32>
    %586 = arith.select %568, %585, %564 : vector<16x16xi1>, vector<16x16xi32>
    %cst_180 = arith.constant dense<-2147483648> : vector<16xi32>
    %587 = vector.multi_reduction <maxsi>, %586, %cst_180 [1] : vector<16x16xi32> to vector<16xi32>
    %588 = vector.shape_cast %587 : vector<16xi32> to vector<16x1xi32>
    %589 = vector.broadcast %588 : vector<16x1xi32> to vector<16x16xi32>
    %590 = arith.cmpi eq, %586, %589 : vector<16x16xi32>
    %c-16_i32_181 = arith.constant -16 : i32
    %591 = vector.broadcast %c-16_i32_181 : i32 to vector<16x1xi32>
    %592 = arith.andi %588, %591 : vector<16x1xi32>
    %c0_i32_182 = arith.constant 0 : i32
    %593 = vector.broadcast %c0_i32_182 : i32 to vector<16x1xi32>
    %594 = arith.cmpi slt, %592, %593 : vector<16x1xi32>
    %c2147483647_i32_183 = arith.constant 2147483647 : i32
    %595 = vector.broadcast %c2147483647_i32_183 : i32 to vector<16x1xi32>
    %596 = arith.xori %592, %595 : vector<16x1xi32>
    %597 = arith.select %594, %596, %592 : vector<16x1xi1>, vector<16x1xi32>
    %598 = tpu.bitcast %597 : vector<16x1xi32> -> vector<16x1xf32>
    %599 = arith.subf %598, %445 : vector<16x1xf32>
    %600 = math.exp %599 : vector<16x1xf32>
    %601 = arith.addf %579, %600 : vector<16x1xf32>
    %cst_184 = arith.constant 0.000000e+00 : f32
    %602 = vector.shape_cast %600 : vector<16x1xf32> to vector<16x1xf32>
    %603 = vector.broadcast %602 : vector<16x1xf32> to vector<16x16xf32>
    %604 = vector.broadcast %cst_184 : f32 to vector<16x16xf32>
    %605 = arith.select %590, %603, %604 : vector<16x16xi1>, vector<16x16xf32>
    %606 = arith.addf %584, %605 : vector<16x16xf32>
    %607 = tpu.reciprocal %601 {approx = true} : vector<16x1xf32> -> vector<16x1xf32>
    %608 = arith.mulf %601, %607 : vector<16x1xf32>
    %cst_185 = arith.constant 2.000000e+00 : f32
    %609 = vector.broadcast %cst_185 : f32 to vector<16x1xf32>
    %610 = arith.subf %609, %608 : vector<16x1xf32>
    %611 = arith.mulf %607, %610 : vector<16x1xf32>
    %612 = vector.broadcast %611 : vector<16x1xf32> to vector<16x16xf32>
    %613 = arith.mulf %606, %612 : vector<16x16xf32>
    %614 = tpu.concatenate %446, %468, %490, %512, %534, %556, %578, %600 in 1 : vector<16x1xf32>, vector<16x1xf32>, vector<16x1xf32>, vector<16x1xf32>, vector<16x1xf32>, vector<16x1xf32>, vector<16x1xf32>, vector<16x1xf32> -> vector<16x8xf32>
    %615 = vector.broadcast %611 : vector<16x1xf32> to vector<16x8xf32>
    %616 = arith.mulf %614, %615 : vector<16x8xf32>
    %c0_186 = arith.constant 0 : index
    %c2 = arith.constant 2 : index
    %c0_187 = arith.constant 0 : index
    %c0_188 = arith.constant 0 : index
    %617 = vector.load %arg12[%c0_186, %c2, %c0_187, %c0_188] : memref<1x4x16x8xf32, #tpu.memory_space<vmem>>, vector<1x1x16x8xf32>
    %618 = vector.shape_cast %617 : vector<1x1x16x8xf32> to vector<16x8xf32>
    %619 = vector.shape_cast %616 : vector<16x8xf32> to vector<1x1x16x8xf32>
    tpu.vector_store %arg12[%c0_186, %c2, %c0_187, %c0_188], %619 {strides = array<i32>} : memref<1x4x16x8xf32, #tpu.memory_space<vmem>>, vector<1x1x16x8xf32>,
    %cst_189 = arith.constant dense<0.000000e+00> : vector<16x8xf32>
    %620 = tpu.matmul %613, %421, %cst_189 {dimension_numbers = #tpu.dot_dimension_numbers<[1], [0], [0], [1], [0, 0, 1, 1], [], []>} : vector<16x16xf32>, vector<16x8xf32>, vector<16x8xf32> -> vector<16x8xf32>
    %621 = vector.extract_strided_slice %7 {offsets = [0, 24], sizes = [16, 8], strides = [1, 1]} : vector<16x32xf32> to vector<16x8xf32>
    %622 = vector.extract_strided_slice %9 {offsets = [0, 24], sizes = [16, 8], strides = [1, 1]} : vector<16x32xf32> to vector<16x8xf32>
    %623 = vector.extract_strided_slice %11 {offsets = [0, 24], sizes = [16, 8], strides = [1, 1]} : vector<16x32xf32> to vector<16x8xf32>
    %cst_190 = arith.constant dense<0.000000e+00> : vector<16x16xf32>
    %624 = tpu.matmul %621, %622, %cst_190 {dimension_numbers = #tpu.dot_dimension_numbers<[1], [1], [0], [0], [0, 0, 1, 0], [], []>} : vector<16x8xf32>, vector<16x8xf32>, vector<16x16xf32> -> vector<16x16xf32>
    %625 = tpu.bitcast %624 : vector<16x16xf32> -> vector<16x16xi32>
    %c0_i32_191 = arith.constant 0 : i32
    %626 = vector.broadcast %c0_i32_191 : i32 to vector<16x16xi32>
    %627 = arith.cmpi slt, %625, %626 : vector<16x16xi32>
    %c2147483647_i32_192 = arith.constant 2147483647 : i32
    %628 = vector.broadcast %c2147483647_i32_192 : i32 to vector<16x16xi32>
    %629 = arith.xori %625, %628 : vector<16x16xi32>
    %630 = arith.select %627, %629, %625 : vector<16x16xi1>, vector<16x16xi32>
    %c-16_i32_193 = arith.constant -16 : i32
    %631 = vector.broadcast %c-16_i32_193 : i32 to vector<16x16xi32>
    %632 = arith.andi %630, %631 : vector<16x16xi32>
    %633 = arith.ori %632, %14 : vector<16x16xi32>
    %cst_194 = arith.constant 0.000000e+00 : f32
    %634 = vector.broadcast %cst_194 : f32 to vector<16x16xf32>
    %cst_195 = arith.constant 0.000000e+00 : f32
    %635 = vector.broadcast %cst_195 : f32 to vector<16x1xf32>
    %cst_196 = arith.constant dense<-2147483648> : vector<16xi32>
    %636 = vector.multi_reduction <maxsi>, %633, %cst_196 [1] : vector<16x16xi32> to vector<16xi32>
    %637 = vector.shape_cast %636 : vector<16xi32> to vector<16x1xi32>
    %638 = vector.broadcast %637 : vector<16x1xi32> to vector<16x16xi32>
    %639 = arith.cmpi eq, %633, %638 : vector<16x16xi32>
    %c-16_i32_197 = arith.constant -16 : i32
    %640 = vector.broadcast %c-16_i32_197 : i32 to vector<16x1xi32>
    %641 = arith.andi %637, %640 : vector<16x1xi32>
    %c0_i32_198 = arith.constant 0 : i32
    %642 = vector.broadcast %c0_i32_198 : i32 to vector<16x1xi32>
    %643 = arith.cmpi slt, %641, %642 : vector<16x1xi32>
    %c2147483647_i32_199 = arith.constant 2147483647 : i32
    %644 = vector.broadcast %c2147483647_i32_199 : i32 to vector<16x1xi32>
    %645 = arith.xori %641, %644 : vector<16x1xi32>
    %646 = arith.select %643, %645, %641 : vector<16x1xi1>, vector<16x1xi32>
    %647 = tpu.bitcast %646 : vector<16x1xi32> -> vector<16x1xf32>
    %cst_200 = arith.constant 1.000000e+00 : f32
    %648 = vector.broadcast %cst_200 : f32 to vector<16x1xf32>
    %649 = arith.addf %635, %648 : vector<16x1xf32>
    %cst_201 = arith.constant 0.000000e+00 : f32
    %650 = vector.shape_cast %648 : vector<16x1xf32> to vector<16x1xf32>
    %651 = vector.broadcast %650 : vector<16x1xf32> to vector<16x16xf32>
    %652 = vector.broadcast %cst_201 : f32 to vector<16x16xf32>
    %653 = arith.select %639, %651, %652 : vector<16x16xi1>, vector<16x16xf32>
    %654 = arith.addf %634, %653 : vector<16x16xf32>
    %c-2147483648_i32_202 = arith.constant -2147483648 : i32
    %655 = vector.broadcast %c-2147483648_i32_202 : i32 to vector<16x16xi32>
    %656 = arith.select %639, %655, %633 : vector<16x16xi1>, vector<16x16xi32>
    %cst_203 = arith.constant dense<-2147483648> : vector<16xi32>
    %657 = vector.multi_reduction <maxsi>, %656, %cst_203 [1] : vector<16x16xi32> to vector<16xi32>
    %658 = vector.shape_cast %657 : vector<16xi32> to vector<16x1xi32>
    %659 = vector.broadcast %658 : vector<16x1xi32> to vector<16x16xi32>
    %660 = arith.cmpi eq, %656, %659 : vector<16x16xi32>
    %c-16_i32_204 = arith.constant -16 : i32
    %661 = vector.broadcast %c-16_i32_204 : i32 to vector<16x1xi32>
    %662 = arith.andi %658, %661 : vector<16x1xi32>
    %c0_i32_205 = arith.constant 0 : i32
    %663 = vector.broadcast %c0_i32_205 : i32 to vector<16x1xi32>
    %664 = arith.cmpi slt, %662, %663 : vector<16x1xi32>
    %c2147483647_i32_206 = arith.constant 2147483647 : i32
    %665 = vector.broadcast %c2147483647_i32_206 : i32 to vector<16x1xi32>
    %666 = arith.xori %662, %665 : vector<16x1xi32>
    %667 = arith.select %664, %666, %662 : vector<16x1xi1>, vector<16x1xi32>
    %668 = tpu.bitcast %667 : vector<16x1xi32> -> vector<16x1xf32>
    %669 = arith.subf %668, %647 : vector<16x1xf32>
    %670 = math.exp %669 : vector<16x1xf32>
    %671 = arith.addf %649, %670 : vector<16x1xf32>
    %cst_207 = arith.constant 0.000000e+00 : f32
    %672 = vector.shape_cast %670 : vector<16x1xf32> to vector<16x1xf32>
    %673 = vector.broadcast %672 : vector<16x1xf32> to vector<16x16xf32>
    %674 = vector.broadcast %cst_207 : f32 to vector<16x16xf32>
    %675 = arith.select %660, %673, %674 : vector<16x16xi1>, vector<16x16xf32>
    %676 = arith.addf %654, %675 : vector<16x16xf32>
    %c-2147483648_i32_208 = arith.constant -2147483648 : i32
    %677 = vector.broadcast %c-2147483648_i32_208 : i32 to vector<16x16xi32>
    %678 = arith.select %660, %677, %656 : vector<16x16xi1>, vector<16x16xi32>
    %cst_209 = arith.constant dense<-2147483648> : vector<16xi32>
    %679 = vector.multi_reduction <maxsi>, %678, %cst_209 [1] : vector<16x16xi32> to vector<16xi32>
    %680 = vector.shape_cast %679 : vector<16xi32> to vector<16x1xi32>
    %681 = vector.broadcast %680 : vector<16x1xi32> to vector<16x16xi32>
    %682 = arith.cmpi eq, %678, %681 : vector<16x16xi32>
    %c-16_i32_210 = arith.constant -16 : i32
    %683 = vector.broadcast %c-16_i32_210 : i32 to vector<16x1xi32>
    %684 = arith.andi %680, %683 : vector<16x1xi32>
    %c0_i32_211 = arith.constant 0 : i32
    %685 = vector.broadcast %c0_i32_211 : i32 to vector<16x1xi32>
    %686 = arith.cmpi slt, %684, %685 : vector<16x1xi32>
    %c2147483647_i32_212 = arith.constant 2147483647 : i32
    %687 = vector.broadcast %c2147483647_i32_212 : i32 to vector<16x1xi32>
    %688 = arith.xori %684, %687 : vector<16x1xi32>
    %689 = arith.select %686, %688, %684 : vector<16x1xi1>, vector<16x1xi32>
    %690 = tpu.bitcast %689 : vector<16x1xi32> -> vector<16x1xf32>
    %691 = arith.subf %690, %647 : vector<16x1xf32>
    %692 = math.exp %691 : vector<16x1xf32>
    %693 = arith.addf %671, %692 : vector<16x1xf32>
    %cst_213 = arith.constant 0.000000e+00 : f32
    %694 = vector.shape_cast %692 : vector<16x1xf32> to vector<16x1xf32>
    %695 = vector.broadcast %694 : vector<16x1xf32> to vector<16x16xf32>
    %696 = vector.broadcast %cst_213 : f32 to vector<16x16xf32>
    %697 = arith.select %682, %695, %696 : vector<16x16xi1>, vector<16x16xf32>
    %698 = arith.addf %676, %697 : vector<16x16xf32>
    %c-2147483648_i32_214 = arith.constant -2147483648 : i32
    %699 = vector.broadcast %c-2147483648_i32_214 : i32 to vector<16x16xi32>
    %700 = arith.select %682, %699, %678 : vector<16x16xi1>, vector<16x16xi32>
    %cst_215 = arith.constant dense<-2147483648> : vector<16xi32>
    %701 = vector.multi_reduction <maxsi>, %700, %cst_215 [1] : vector<16x16xi32> to vector<16xi32>
    %702 = vector.shape_cast %701 : vector<16xi32> to vector<16x1xi32>
    %703 = vector.broadcast %702 : vector<16x1xi32> to vector<16x16xi32>
    %704 = arith.cmpi eq, %700, %703 : vector<16x16xi32>
    %c-16_i32_216 = arith.constant -16 : i32
    %705 = vector.broadcast %c-16_i32_216 : i32 to vector<16x1xi32>
    %706 = arith.andi %702, %705 : vector<16x1xi32>
    %c0_i32_217 = arith.constant 0 : i32
    %707 = vector.broadcast %c0_i32_217 : i32 to vector<16x1xi32>
    %708 = arith.cmpi slt, %706, %707 : vector<16x1xi32>
    %c2147483647_i32_218 = arith.constant 2147483647 : i32
    %709 = vector.broadcast %c2147483647_i32_218 : i32 to vector<16x1xi32>
    %710 = arith.xori %706, %709 : vector<16x1xi32>
    %711 = arith.select %708, %710, %706 : vector<16x1xi1>, vector<16x1xi32>
    %712 = tpu.bitcast %711 : vector<16x1xi32> -> vector<16x1xf32>
    %713 = arith.subf %712, %647 : vector<16x1xf32>
    %714 = math.exp %713 : vector<16x1xf32>
    %715 = arith.addf %693, %714 : vector<16x1xf32>
    %cst_219 = arith.constant 0.000000e+00 : f32
    %716 = vector.shape_cast %714 : vector<16x1xf32> to vector<16x1xf32>
    %717 = vector.broadcast %716 : vector<16x1xf32> to vector<16x16xf32>
    %718 = vector.broadcast %cst_219 : f32 to vector<16x16xf32>
    %719 = arith.select %704, %717, %718 : vector<16x16xi1>, vector<16x16xf32>
    %720 = arith.addf %698, %719 : vector<16x16xf32>
    %c-2147483648_i32_220 = arith.constant -2147483648 : i32
    %721 = vector.broadcast %c-2147483648_i32_220 : i32 to vector<16x16xi32>
    %722 = arith.select %704, %721, %700 : vector<16x16xi1>, vector<16x16xi32>
    %cst_221 = arith.constant dense<-2147483648> : vector<16xi32>
    %723 = vector.multi_reduction <maxsi>, %722, %cst_221 [1] : vector<16x16xi32> to vector<16xi32>
    %724 = vector.shape_cast %723 : vector<16xi32> to vector<16x1xi32>
    %725 = vector.broadcast %724 : vector<16x1xi32> to vector<16x16xi32>
    %726 = arith.cmpi eq, %722, %725 : vector<16x16xi32>
    %c-16_i32_222 = arith.constant -16 : i32
    %727 = vector.broadcast %c-16_i32_222 : i32 to vector<16x1xi32>
    %728 = arith.andi %724, %727 : vector<16x1xi32>
    %c0_i32_223 = arith.constant 0 : i32
    %729 = vector.broadcast %c0_i32_223 : i32 to vector<16x1xi32>
    %730 = arith.cmpi slt, %728, %729 : vector<16x1xi32>
    %c2147483647_i32_224 = arith.constant 2147483647 : i32
    %731 = vector.broadcast %c2147483647_i32_224 : i32 to vector<16x1xi32>
    %732 = arith.xori %728, %731 : vector<16x1xi32>
    %733 = arith.select %730, %732, %728 : vector<16x1xi1>, vector<16x1xi32>
    %734 = tpu.bitcast %733 : vector<16x1xi32> -> vector<16x1xf32>
    %735 = arith.subf %734, %647 : vector<16x1xf32>
    %736 = math.exp %735 : vector<16x1xf32>
    %737 = arith.addf %715, %736 : vector<16x1xf32>
    %cst_225 = arith.constant 0.000000e+00 : f32
    %738 = vector.shape_cast %736 : vector<16x1xf32> to vector<16x1xf32>
    %739 = vector.broadcast %738 : vector<16x1xf32> to vector<16x16xf32>
    %740 = vector.broadcast %cst_225 : f32 to vector<16x16xf32>
    %741 = arith.select %726, %739, %740 : vector<16x16xi1>, vector<16x16xf32>
    %742 = arith.addf %720, %741 : vector<16x16xf32>
    %c-2147483648_i32_226 = arith.constant -2147483648 : i32
    %743 = vector.broadcast %c-2147483648_i32_226 : i32 to vector<16x16xi32>
    %744 = arith.select %726, %743, %722 : vector<16x16xi1>, vector<16x16xi32>
    %cst_227 = arith.constant dense<-2147483648> : vector<16xi32>
    %745 = vector.multi_reduction <maxsi>, %744, %cst_227 [1] : vector<16x16xi32> to vector<16xi32>
    %746 = vector.shape_cast %745 : vector<16xi32> to vector<16x1xi32>
    %747 = vector.broadcast %746 : vector<16x1xi32> to vector<16x16xi32>
    %748 = arith.cmpi eq, %744, %747 : vector<16x16xi32>
    %c-16_i32_228 = arith.constant -16 : i32
    %749 = vector.broadcast %c-16_i32_228 : i32 to vector<16x1xi32>
    %750 = arith.andi %746, %749 : vector<16x1xi32>
    %c0_i32_229 = arith.constant 0 : i32
    %751 = vector.broadcast %c0_i32_229 : i32 to vector<16x1xi32>
    %752 = arith.cmpi slt, %750, %751 : vector<16x1xi32>
    %c2147483647_i32_230 = arith.constant 2147483647 : i32
    %753 = vector.broadcast %c2147483647_i32_230 : i32 to vector<16x1xi32>
    %754 = arith.xori %750, %753 : vector<16x1xi32>
    %755 = arith.select %752, %754, %750 : vector<16x1xi1>, vector<16x1xi32>
    %756 = tpu.bitcast %755 : vector<16x1xi32> -> vector<16x1xf32>
    %757 = arith.subf %756, %647 : vector<16x1xf32>
    %758 = math.exp %757 : vector<16x1xf32>
    %759 = arith.addf %737, %758 : vector<16x1xf32>
    %cst_231 = arith.constant 0.000000e+00 : f32
    %760 = vector.shape_cast %758 : vector<16x1xf32> to vector<16x1xf32>
    %761 = vector.broadcast %760 : vector<16x1xf32> to vector<16x16xf32>
    %762 = vector.broadcast %cst_231 : f32 to vector<16x16xf32>
    %763 = arith.select %748, %761, %762 : vector<16x16xi1>, vector<16x16xf32>
    %764 = arith.addf %742, %763 : vector<16x16xf32>
    %c-2147483648_i32_232 = arith.constant -2147483648 : i32
    %765 = vector.broadcast %c-2147483648_i32_232 : i32 to vector<16x16xi32>
    %766 = arith.select %748, %765, %744 : vector<16x16xi1>, vector<16x16xi32>
    %cst_233 = arith.constant dense<-2147483648> : vector<16xi32>
    %767 = vector.multi_reduction <maxsi>, %766, %cst_233 [1] : vector<16x16xi32> to vector<16xi32>
    %768 = vector.shape_cast %767 : vector<16xi32> to vector<16x1xi32>
    %769 = vector.broadcast %768 : vector<16x1xi32> to vector<16x16xi32>
    %770 = arith.cmpi eq, %766, %769 : vector<16x16xi32>
    %c-16_i32_234 = arith.constant -16 : i32
    %771 = vector.broadcast %c-16_i32_234 : i32 to vector<16x1xi32>
    %772 = arith.andi %768, %771 : vector<16x1xi32>
    %c0_i32_235 = arith.constant 0 : i32
    %773 = vector.broadcast %c0_i32_235 : i32 to vector<16x1xi32>
    %774 = arith.cmpi slt, %772, %773 : vector<16x1xi32>
    %c2147483647_i32_236 = arith.constant 2147483647 : i32
    %775 = vector.broadcast %c2147483647_i32_236 : i32 to vector<16x1xi32>
    %776 = arith.xori %772, %775 : vector<16x1xi32>
    %777 = arith.select %774, %776, %772 : vector<16x1xi1>, vector<16x1xi32>
    %778 = tpu.bitcast %777 : vector<16x1xi32> -> vector<16x1xf32>
    %779 = arith.subf %778, %647 : vector<16x1xf32>
    %780 = math.exp %779 : vector<16x1xf32>
    %781 = arith.addf %759, %780 : vector<16x1xf32>
    %cst_237 = arith.constant 0.000000e+00 : f32
    %782 = vector.shape_cast %780 : vector<16x1xf32> to vector<16x1xf32>
    %783 = vector.broadcast %782 : vector<16x1xf32> to vector<16x16xf32>
    %784 = vector.broadcast %cst_237 : f32 to vector<16x16xf32>
    %785 = arith.select %770, %783, %784 : vector<16x16xi1>, vector<16x16xf32>
    %786 = arith.addf %764, %785 : vector<16x16xf32>
    %c-2147483648_i32_238 = arith.constant -2147483648 : i32
    %787 = vector.broadcast %c-2147483648_i32_238 : i32 to vector<16x16xi32>
    %788 = arith.select %770, %787, %766 : vector<16x16xi1>, vector<16x16xi32>
    %cst_239 = arith.constant dense<-2147483648> : vector<16xi32>
    %789 = vector.multi_reduction <maxsi>, %788, %cst_239 [1] : vector<16x16xi32> to vector<16xi32>
    %790 = vector.shape_cast %789 : vector<16xi32> to vector<16x1xi32>
    %791 = vector.broadcast %790 : vector<16x1xi32> to vector<16x16xi32>
    %792 = arith.cmpi eq, %788, %791 : vector<16x16xi32>
    %c-16_i32_240 = arith.constant -16 : i32
    %793 = vector.broadcast %c-16_i32_240 : i32 to vector<16x1xi32>
    %794 = arith.andi %790, %793 : vector<16x1xi32>
    %c0_i32_241 = arith.constant 0 : i32
    %795 = vector.broadcast %c0_i32_241 : i32 to vector<16x1xi32>
    %796 = arith.cmpi slt, %794, %795 : vector<16x1xi32>
    %c2147483647_i32_242 = arith.constant 2147483647 : i32
    %797 = vector.broadcast %c2147483647_i32_242 : i32 to vector<16x1xi32>
    %798 = arith.xori %794, %797 : vector<16x1xi32>
    %799 = arith.select %796, %798, %794 : vector<16x1xi1>, vector<16x1xi32>
    %800 = tpu.bitcast %799 : vector<16x1xi32> -> vector<16x1xf32>
    %801 = arith.subf %800, %647 : vector<16x1xf32>
    %802 = math.exp %801 : vector<16x1xf32>
    %803 = arith.addf %781, %802 : vector<16x1xf32>
    %cst_243 = arith.constant 0.000000e+00 : f32
    %804 = vector.shape_cast %802 : vector<16x1xf32> to vector<16x1xf32>
    %805 = vector.broadcast %804 : vector<16x1xf32> to vector<16x16xf32>
    %806 = vector.broadcast %cst_243 : f32 to vector<16x16xf32>
    %807 = arith.select %792, %805, %806 : vector<16x16xi1>, vector<16x16xf32>
    %808 = arith.addf %786, %807 : vector<16x16xf32>
    %809 = tpu.reciprocal %803 {approx = true} : vector<16x1xf32> -> vector<16x1xf32>
    %810 = arith.mulf %803, %809 : vector<16x1xf32>
    %cst_244 = arith.constant 2.000000e+00 : f32
    %811 = vector.broadcast %cst_244 : f32 to vector<16x1xf32>
    %812 = arith.subf %811, %810 : vector<16x1xf32>
    %813 = arith.mulf %809, %812 : vector<16x1xf32>
    %814 = vector.broadcast %813 : vector<16x1xf32> to vector<16x16xf32>
    %815 = arith.mulf %808, %814 : vector<16x16xf32>
    %816 = tpu.concatenate %648, %670, %692, %714, %736, %758, %780, %802 in 1 : vector<16x1xf32>, vector<16x1xf32>, vector<16x1xf32>, vector<16x1xf32>, vector<16x1xf32>, vector<16x1xf32>, vector<16x1xf32>, vector<16x1xf32> -> vector<16x8xf32>
    %817 = vector.broadcast %813 : vector<16x1xf32> to vector<16x8xf32>
    %818 = arith.mulf %816, %817 : vector<16x8xf32>
    %c0_245 = arith.constant 0 : index
    %c3 = arith.constant 3 : index
    %c0_246 = arith.constant 0 : index
    %c0_247 = arith.constant 0 : index
    %819 = vector.load %arg12[%c0_245, %c3, %c0_246, %c0_247] : memref<1x4x16x8xf32, #tpu.memory_space<vmem>>, vector<1x1x16x8xf32>
    %820 = vector.shape_cast %819 : vector<1x1x16x8xf32> to vector<16x8xf32>
    %821 = vector.shape_cast %818 : vector<16x8xf32> to vector<1x1x16x8xf32>
    tpu.vector_store %arg12[%c0_245, %c3, %c0_246, %c0_247], %821 {strides = array<i32>} : memref<1x4x16x8xf32, #tpu.memory_space<vmem>>, vector<1x1x16x8xf32>,
    %cst_248 = arith.constant dense<0.000000e+00> : vector<16x8xf32>
    %822 = tpu.matmul %815, %623, %cst_248 {dimension_numbers = #tpu.dot_dimension_numbers<[1], [0], [0], [1], [0, 0, 1, 1], [], []>} : vector<16x16xf32>, vector<16x8xf32>, vector<16x8xf32> -> vector<16x8xf32>
    %823 = tpu.concatenate %216, %418, %620, %822 in 1 : vector<16x8xf32>, vector<16x8xf32>, vector<16x8xf32>, vector<16x8xf32> -> vector<16x32xf32>
    %c0_249 = arith.constant 0 : index
    %c0_250 = arith.constant 0 : index
    %824 = vector.load %arg7[%c0_249, %c0_250] : memref<32x32xf32, #tpu.memory_space<vmem>>, vector<32x32xf32>
    %cst_251 = arith.constant dense<0.000000e+00> : vector<16x32xf32>
    %825 = tpu.matmul %823, %824, %cst_251 {dimension_numbers = #tpu.dot_dimension_numbers<[1], [0], [0], [1], [0, 0, 1, 1], [], []>} : vector<16x32xf32>, vector<32x32xf32>, vector<16x32xf32> -> vector<16x32xf32>
    %c0_252 = arith.constant 0 : index
    %c0_253 = arith.constant 0 : index
    %826 = vector.load %arg8[%c0_252, %c0_253] : memref<1x32xf32, #tpu.memory_space<vmem>>, vector<1x32xf32>
    %827 = vector.broadcast %826 : vector<1x32xf32> to vector<16x32xf32>
    %828 = arith.addf %825, %827 : vector<16x32xf32>
    %829 = arith.addf %828, %1 : vector<16x32xf32>
    %cst_254 = arith.constant dense<0.000000e+00> : vector<16xf32>
    %830 = vector.multi_reduction <add>, %829, %cst_254 [1] : vector<16x32xf32> to vector<16xf32>
    %831 = vector.shape_cast %830 : vector<16xf32> to vector<16x1xf32>
    %cst_255 = arith.constant 3.200000e+01 : f32
    %832 = vector.broadcast %cst_255 : f32 to vector<16x1xf32>
    %833 = arith.divf %831, %832 : vector<16x1xf32>
    %834 = vector.broadcast %833 : vector<16x1xf32> to vector<16x32xf32>
    %835 = arith.subf %829, %834 : vector<16x32xf32>
    %836 = arith.mulf %835, %835 : vector<16x32xf32>
    %cst_256 = arith.constant dense<0.000000e+00> : vector<16xf32>
    %837 = vector.multi_reduction <add>, %836, %cst_256 [1] : vector<16x32xf32> to vector<16xf32>
    %838 = vector.shape_cast %837 : vector<16xf32> to vector<16x1xf32>
    %cst_257 = arith.constant 3.200000e+01 : f32
    %839 = vector.broadcast %cst_257 : f32 to vector<16x1xf32>
    %840 = arith.divf %838, %839 : vector<16x1xf32>
    %841 = vector.broadcast %833 : vector<16x1xf32> to vector<16x32xf32>
    %842 = arith.subf %829, %841 : vector<16x32xf32>
    %cst_258 = arith.constant 9.99999974E-6 : f32
    %843 = vector.broadcast %cst_258 : f32 to vector<16x1xf32>
    %844 = arith.addf %840, %843 : vector<16x1xf32>
    %845 = math.rsqrt %844 : vector<16x1xf32>
    %846 = vector.broadcast %845 : vector<16x1xf32> to vector<16x32xf32>
    %847 = arith.mulf %842, %846 : vector<16x32xf32>
    %c0_259 = arith.constant 0 : index
    %c0_260 = arith.constant 0 : index
    %848 = vector.load %arg9[%c0_259, %c0_260] : memref<1x32xf32, #tpu.memory_space<vmem>>, vector<1x32xf32>
    %849 = vector.broadcast %848 : vector<1x32xf32> to vector<16x32xf32>
    %850 = arith.mulf %847, %849 : vector<16x32xf32>
    %c0_261 = arith.constant 0 : index
    %c0_262 = arith.constant 0 : index
    %851 = vector.load %arg10[%c0_261, %c0_262] : memref<1x32xf32, #tpu.memory_space<vmem>>, vector<1x32xf32>
    %852 = vector.broadcast %851 : vector<1x32xf32> to vector<16x32xf32>
    %853 = arith.addf %850, %852 : vector<16x32xf32>
    %c0_263 = arith.constant 0 : index
    %c0_264 = arith.constant 0 : index
    %c0_265 = arith.constant 0 : index
    %854 = vector.load %arg11[%c0_263, %c0_264, %c0_265] : memref<1x16x32xf32, #tpu.memory_space<vmem>>, vector<1x16x32xf32>
    %855 = vector.shape_cast %854 : vector<1x16x32xf32> to vector<16x32xf32>
    %856 = vector.shape_cast %853 : vector<16x32xf32> to vector<1x16x32xf32>
    tpu.vector_store %arg11[%c0_263, %c0_264, %c0_265], %856 {strides = array<i32>} : memref<1x16x32xf32, #tpu.memory_space<vmem>>, vector<1x16x32xf32>,
    return
  }
  func.func @transform_0(%arg0: i32) -> (i32, i32, i32) {
    %c0_i32 = arith.constant 0 : i32
    %c0_i32_0 = arith.constant 0 : i32
    %c0_i32_1 = arith.constant 0 : i32
    return %arg0, %c0_i32, %c0_i32_0 : i32, i32, i32
  }
  func.func @transform_1(%arg0: i32) -> (i32, i32, i32) {
    %c0_i32 = arith.constant 0 : i32
    %c0_i32_0 = arith.constant 0 : i32
    %c0_i32_1 = arith.constant 0 : i32
    return %arg0, %c0_i32, %c0_i32_0 : i32, i32, i32
  }
  func.func @transform_2(%arg0: i32) -> (i32, i32, i32) {
    %c0_i32 = arith.constant 0 : i32
    %c0_i32_0 = arith.constant 0 : i32
    %c0_i32_1 = arith.constant 0 : i32
    return %arg0, %c0_i32, %c0_i32_0 : i32, i32, i32
  }
  func.func @transform_3(%arg0: i32) -> (i32, i32) {
    %c0_i32 = arith.constant 0 : i32
    %c0_i32_0 = arith.constant 0 : i32
    %c0_i32_1 = arith.constant 0 : i32
    return %c0_i32, %c0_i32_0 : i32, i32
  }
  func.func @transform_4(%arg0: i32) -> (i32, i32) {
    %c0_i32 = arith.constant 0 : i32
    %c0_i32_0 = arith.constant 0 : i32
    %c0_i32_1 = arith.constant 0 : i32
    return %c0_i32, %c0_i32_0 : i32, i32
  }
  func.func @transform_5(%arg0: i32) -> (i32, i32) {
    %c0_i32 = arith.constant 0 : i32
    %c0_i32_0 = arith.constant 0 : i32
    %c0_i32_1 = arith.constant 0 : i32
    return %c0_i32, %c0_i32_0 : i32, i32
  }
  func.func @transform_6(%arg0: i32) -> (i32, i32) {
    %c0_i32 = arith.constant 0 : i32
    %c0_i32_0 = arith.constant 0 : i32
    %c0_i32_1 = arith.constant 0 : i32
    return %c0_i32, %c0_i32_0 : i32, i32
  }
  func.func @transform_7(%arg0: i32) -> (i32, i32) {
    %c0_i32 = arith.constant 0 : i32
    %c0_i32_0 = arith.constant 0 : i32
    %c0_i32_1 = arith.constant 0 : i32
    return %c0_i32, %c0_i32_0 : i32, i32
  }
  func.func @transform_8(%arg0: i32) -> (i32, i32) {
    %c0_i32 = arith.constant 0 : i32
    %c0_i32_0 = arith.constant 0 : i32
    %c0_i32_1 = arith.constant 0 : i32
    return %c0_i32, %c0_i32_0 : i32, i32
  }
  func.func @transform_9(%arg0: i32) -> (i32, i32) {
    %c0_i32 = arith.constant 0 : i32
    %c0_i32_0 = arith.constant 0 : i32
    %c0_i32_1 = arith.constant 0 : i32
    return %c0_i32, %c0_i32_0 : i32, i32
  }
  func.func @transform_10(%arg0: i32) -> (i32, i32, i32) {
    %c0_i32 = arith.constant 0 : i32
    %c0_i32_0 = arith.constant 0 : i32
    %c0_i32_1 = arith.constant 0 : i32
    return %arg0, %c0_i32, %c0_i32_0 : i32, i32, i32
  }
  func.func @transform_11(%arg0: i32) -> (i32, i32, i32, i32) {
    %c0_i32 = arith.constant 0 : i32
    %c0_i32_0 = arith.constant 0 : i32
    %c0_i32_1 = arith.constant 0 : i32
    %c0_i32_2 = arith.constant 0 : i32
    return %arg0, %c0_i32, %c0_i32_0, %c0_i32_1 : i32, i32, i32, i32
  }
}

</mosaic_0001>

<llo_original>
// kernel: tpu_custom_call.1
$region0: #{tpu_custom_call.1}
  #allocation0 [shape = 'u32[]', space=smem, size = 0x4, offset = 0x4, fixed_abs, tag = 'smem constant byte address 0x4 - core index']
  #allocation1 [shape = 'u32[144,128]{1,0:T(1,128)}', space=vmem, size = 0x12000, scoped, tag = 'internal scratch']
  %s0 = inlined_call_operand.hbm [shape: f32[2,16,32], index: 0, kind: input, shape index: {}]
  %s1 = inlined_call_operand.hbm [shape: f32[2,16,32], index: 1, kind: input, shape index: {}]
  %s2 = inlined_call_operand.hbm [shape: f32[2,16,32], index: 2, kind: input, shape index: {}]
  %s3 = inlined_call_operand.hbm [shape: f32[32,32], index: 3, kind: input, shape index: {}]
  %s4 = inlined_call_operand.hbm [shape: f32[32,32], index: 4, kind: input, shape index: {}]
  %s5 = inlined_call_operand.hbm [shape: f32[32,32], index: 5, kind: input, shape index: {}]
  %s6 = inlined_call_operand.hbm [shape: f32[32,32], index: 6, kind: input, shape index: {}]
  %s7 = inlined_call_operand.hbm [shape: f32[1,32], index: 7, kind: input, shape index: {}]
  %s8 = inlined_call_operand.hbm [shape: f32[1,32], index: 8, kind: input, shape index: {}]
  %s9 = inlined_call_operand.hbm [shape: f32[1,32], index: 9, kind: input, shape index: {}]
  %s10 = inlined_call_operand.hbm [shape: f32[2,16,32], index: 10, kind: output, shape index: {0}]
  %s11 = inlined_call_operand.hbm [shape: f32[2,4,16,8], index: 11, kind: output, shape index: {1}]
  %12 = xla_tuple %s10, %s11
  %s13 = sld [smem:[#allocation0]]
  $region121: #{tpu_custom_call.1} parent=0
    _
  %s15 = ssub.s32 1, %s13
  %s16 = scalar_select 0, %s15, %s13
  $region1: #{tpu_custom_call.1} parent=0
    #allocation2 [shape = 'u8[16384]{0}', space=vmem, size = 0x4000, scoped, tag = 'input window, operand 0']
    #allocation3 [shape = 's32[2]{0}', space=sflag, size = 0x8, scoped, tag = 'scoped memory for tpu_custom_call.1']
    #allocation4 [shape = 's32[2]{0}', space=sflag, size = 0x8, scoped, tag = 'scoped memory for tpu_custom_call.1']
    #allocation5 [shape = 'u8[16384]{0}', space=vmem, size = 0x4000, scoped, tag = 'input window, operand 1']
    #allocation6 [shape = 's32[2]{0}', space=sflag, size = 0x8, scoped, tag = 'scoped memory for tpu_custom_call.1']
    #allocation7 [shape = 'u8[16384]{0}', space=vmem, size = 0x4000, scoped, tag = 'input window, operand 2']
    #allocation8 [shape = 'u8[16384]{0}', space=vmem, size = 0x4000, scoped, tag = 'input window, operand 3, single buffered']
    #allocation9 [shape = 's32[1]{0}', space=sflag, size = 0x4, scoped, tag = 'scoped memory for tpu_custom_call.1']
    #allocation10 [shape = 'u8[16384]{0}', space=vmem, size = 0x4000, scoped, tag = 'input window, operand 4, single buffered']
    #allocation11 [shape = 'u8[16384]{0}', space=vmem, size = 0x4000, scoped, tag = 'input window, operand 5, single buffered']
    #allocation12 [shape = 's32[1]{0}', space=sflag, size = 0x4, scoped, tag = 'scoped memory for tpu_custom_call.1']
    #allocation13 [shape = 'u8[16384]{0}', space=vmem, size = 0x4000, scoped, tag = 'input window, operand 6, single buffered']
    #allocation14 [shape = 'u8[512]{0}', space=vmem, size = 0x400, scoped, tag = 'input window, operand 7, single buffered']
    #allocation15 [shape = 's32[1]{0}', space=sflag, size = 0x4, scoped, tag = 'scoped memory for tpu_custom_call.1']
    #allocation16 [shape = 'u8[512]{0}', space=vmem, size = 0x400, scoped, tag = 'input window, operand 8, single buffered']
    #allocation17 [shape = 'u8[512]{0}', space=vmem, size = 0x400, scoped, tag = 'input window, operand 9, single buffered']
    #allocation18 [shape = 's32[1]{0}', space=sflag, size = 0x4, scoped, tag = 'scoped memory for tpu_custom_call.1']
    #allocation19 [shape = 'u8[16384]{0}', space=vmem, size = 0x4000, scoped, tag = 'output window, operand 0']
    #allocation20 [shape = 'u8[65536]{0}', space=vmem, size = 0x10000, scoped, tag = 'output window, operand 1']
    #allocation21 [shape = 's32[2]{0}', space=sflag, size = 0x8, scoped, tag = 'scoped memory for tpu_custom_call.1']
    %17 = vsyncpa [#allocation3], 0
    %s18 = scalar_lea.sflag [#allocation3], 1
    %19 = vsyncpa %s18, 0
    %20 = vsyncpa [#allocation6], 0
    %s21 = scalar_lea.sflag [#allocation6], 1
    %22 = vsyncpa %s21, 0
    %23 = vsyncpa [#allocation9], 0
    %24 = vsyncpa [#allocation12], 0
    %25 = vsyncpa [#allocation15], 0
    %26 = vsyncpa [#allocation18], 0
    %27 = vsyncpa [#allocation4], 0
    %s28 = scalar_lea.sflag [#allocation4], 1
    %29 = vsyncpa %s28, 0
    %30 = vsyncpa [#allocation21], 0
    %s31 = scalar_lea.sflag [#allocation21], 1
    %32 = vsyncpa %s31, 0
    loop: start=0, step=1, limit=4
    $region2: #{tpu_custom_call.1} parent=1 // loop_pre_header
      _
    $region3: #{tpu_custom_call.1} parent=1 // loop_header
      %s34 = sphi 0, %s38
      %p35 = scmp.ge.s32.totalorder %s34, 4
      %s44 = sphi 0, %s46
      %s47 = sphi 0, %s44
      %s48 = sphi 0, %s47
      %s64 = sphi 0, %s48
      %s70 = sphi 0, %s72
      %s73 = sphi 0, %s70
      %s74 = sphi 0, %s73
      %s90 = sphi 0, %s74
      %s96 = sphi 0, %s98
      %s99 = sphi 0, %s96
      %s100 = sphi 0, %s99
      %s116 = sphi 0, %s100
      %s120 = sphi 0, %s120
      %s122 = sphi 0, %s120
      %s123 = sphi 0, %s122
      %s137 = sphi 0, %s123
      %s141 = sphi 0, %s141
      %s143 = sphi 0, %s141
      %s144 = sphi 0, %s143
      %s158 = sphi 0, %s144
      %s162 = sphi 0, %s162
      %s164 = sphi 0, %s162
      %s165 = sphi 0, %s164
      %s179 = sphi 0, %s165
      %s183 = sphi 0, %s183
      %s185 = sphi 0, %s183
      %s186 = sphi 0, %s185
      %s200 = sphi 0, %s186
      %s204 = sphi 0, %s204
      %s206 = sphi 0, %s204
      %s207 = sphi 0, %s206
      %s221 = sphi 0, %s207
      %s225 = sphi 0, %s225
      %s227 = sphi 0, %s225
      %s228 = sphi 0, %s227
      %s242 = sphi 0, %s228
      %s246 = sphi 0, %s246
      %s248 = sphi 0, %s246
      %s249 = sphi 0, %s248
      %s263 = sphi 0, %s249
      %s269 = sphi 0, %s271
      %s272 = sphi 0, %s269
      %s273 = sphi 0, %s272
      %s289 = sphi 0, %s273
      %s295 = sphi 0, %s297
      %s298 = sphi 0, %s295
      %s299 = sphi 0, %s298
      %s315 = sphi 0, %s299
    $region4: #{tpu_custom_call.1} parent=1 // loop_header_branch
      %37 = sbr.rel (%p35) target = $region8
    $region5: #{tpu_custom_call.1} parent=1 // loop_body
      %s39 = ssub.s32 %s34, 1
      %s40 = ssub.s32 %s34, 2
      %s41 = sadd.s32 %s34, 1
      %s42 = ssub.s32 %s34, %s41
      %p43 = scmp.eq.s32.totalorder %s42, 0
      %s45 = sadd.s32 %s44, 1
      %s46 = scalar_select %p43, %s44, %s45
      %p49 = pneg %p43
      %p50 = scmp.eq.s32.totalorder %s34, 1
      %p51 = por %p49, %p50
      %p52 = scmp.ne.s32.totalorder %s44, %s47
      %p53 = scmp.eq.s32.totalorder %s34, 0
      %p54 = por %p52, %p53
      %p55 = scmp.ne.s32.totalorder %s44, %s47
      %p56 = scmp.eq.s32.totalorder %s39, 1
      %p57 = por %p55, %p56
      %p58 = scmp.ne.s32.totalorder %s47, %s48
      %p59 = scmp.eq.s32.totalorder %s39, 0
      %p60 = por %p58, %p59
      %p61 = scmp.ne.s32.totalorder %s47, %s48
      %p62 = scmp.eq.s32.totalorder %s40, 1
      %p63 = por %p61, %p62
      %p65 = scmp.ne.s32.totalorder %s48, %s64
      %p66 = scmp.eq.s32.totalorder %s40, 0
      %p67 = por %p65, %p66
      %s68 = ssub.s32 %s34, %s41
      %p69 = scmp.eq.s32.totalorder %s68, 0
      %s71 = sadd.s32 %s70, 1
      %s72 = scalar_select %p69, %s70, %s71
      %p75 = pneg %p69
      %p76 = scmp.eq.s32.totalorder %s34, 1
      %p77 = por %p75, %p76
      %p78 = scmp.ne.s32.totalorder %s70, %s73
      %p79 = scmp.eq.s32.totalorder %s34, 0
      %p80 = por %p78, %p79
      %p81 = scmp.ne.s32.totalorder %s70, %s73
      %p82 = scmp.eq.s32.totalorder %s39, 1
      %p83 = por %p81, %p82
      %p84 = scmp.ne.s32.totalorder %s73, %s74
      %p85 = scmp.eq.s32.totalorder %s39, 0
      %p86 = por %p84, %p85
      %p87 = scmp.ne.s32.totalorder %s73, %s74
      %p88 = scmp.eq.s32.totalorder %s40, 1
      %p89 = por %p87, %p88
      %p91 = scmp.ne.s32.totalorder %s74, %s90
      %p92 = scmp.eq.s32.totalorder %s40, 0
      %p93 = por %p91, %p92
      %s94 = ssub.s32 %s34, %s41
      %p95 = scmp.eq.s32.totalorder %s94, 0
      %s97 = sadd.s32 %s96, 1
      %s98 = scalar_select %p95, %s96, %s97
      %p101 = pneg %p95
      %p102 = scmp.eq.s32.totalorder %s34, 1
      %p103 = por %p101, %p102
      %p104 = scmp.ne.s32.totalorder %s96, %s99
      %p105 = scmp.eq.s32.totalorder %s34, 0
      %p106 = por %p104, %p105
      %p107 = scmp.ne.s32.totalorder %s96, %s99
      %p108 = scmp.eq.s32.totalorder %s39, 1
      %p109 = por %p107, %p108
      %p110 = scmp.ne.s32.totalorder %s99, %s100
      %p111 = scmp.eq.s32.totalorder %s39, 0
      %p112 = por %p110, %p111
      %p113 = scmp.ne.s32.totalorder %s99, %s100
      %p114 = scmp.eq.s32.totalorder %s40, 1
      %p115 = por %p113, %p114
      %p117 = scmp.ne.s32.totalorder %s100, %s116
      %p118 = scmp.eq.s32.totalorder %s40, 0
      %p119 = por %p117, %p118
      %s121 = sadd.s32 %s120, 1
      %p124 = scmp.eq.s32.totalorder %s34, 1
      %p125 = scmp.ne.s32.totalorder %s120, %s122
      %p126 = scmp.eq.s32.totalorder %s34, 0
      %p127 = por %p125, %p126
      %p128 = scmp.ne.s32.totalorder %s120, %s122
      %p129 = scmp.eq.s32.totalorder %s39, 1
      %p130 = por %p128, %p129
      %p131 = scmp.ne.s32.totalorder %s122, %s123
      %p132 = scmp.eq.s32.totalorder %s39, 0
      %p133 = por %p131, %p132
      %p134 = scmp.ne.s32.totalorder %s122, %s123
      %p135 = scmp.eq.s32.totalorder %s40, 1
      %p136 = por %p134, %p135
      %p138 = scmp.ne.s32.totalorder %s123, %s137
      %p139 = scmp.eq.s32.totalorder %s40, 0
      %p140 = por %p138, %p139
      %s142 = sadd.s32 %s141, 1
      %p145 = scmp.eq.s32.totalorder %s34, 1
      %p146 = scmp.ne.s32.totalorder %s141, %s143
      %p147 = scmp.eq.s32.totalorder %s34, 0
      %p148 = por %p146, %p147
      %p149 = scmp.ne.s32.totalorder %s141, %s143
      %p150 = scmp.eq.s32.totalorder %s39, 1
      %p151 = por %p149, %p150
      %p152 = scmp.ne.s32.totalorder %s143, %s144
      %p153 = scmp.eq.s32.totalorder %s39, 0
      %p154 = por %p152, %p153
      %p155 = scmp.ne.s32.totalorder %s143, %s144
      %p156 = scmp.eq.s32.totalorder %s40, 1
      %p157 = por %p155, %p156
      %p159 = scmp.ne.s32.totalorder %s144, %s158
      %p160 = scmp.eq.s32.totalorder %s40, 0
      %p161 = por %p159, %p160
      %s163 = sadd.s32 %s162, 1
      %p166 = scmp.eq.s32.totalorder %s34, 1
      %p167 = scmp.ne.s32.totalorder %s162, %s164
      %p168 = scmp.eq.s32.totalorder %s34, 0
      %p169 = por %p167, %p168
      %p170 = scmp.ne.s32.totalorder %s162, %s164
      %p171 = scmp.eq.s32.totalorder %s39, 1
      %p172 = por %p170, %p171
      %p173 = scmp.ne.s32.totalorder %s164, %s165
      %p174 = scmp.eq.s32.totalorder %s39, 0
      %p175 = por %p173, %p174
      %p176 = scmp.ne.s32.totalorder %s164, %s165
      %p177 = scmp.eq.s32.totalorder %s40, 1
      %p178 = por %p176, %p177
      %p180 = scmp.ne.s32.totalorder %s165, %s179
      %p181 = scmp.eq.s32.totalorder %s40, 0
      %p182 = por %p180, %p181
      %s184 = sadd.s32 %s183, 1
      %p187 = scmp.eq.s32.totalorder %s34, 1
      %p188 = scmp.ne.s32.totalorder %s183, %s185
      %p189 = scmp.eq.s32.totalorder %s34, 0
      %p190 = por %p188, %p189
      %p191 = scmp.ne.s32.totalorder %s183, %s185
      %p192 = scmp.eq.s32.totalorder %s39, 1
      %p193 = por %p191, %p192
      %p194 = scmp.ne.s32.totalorder %s185, %s186
      %p195 = scmp.eq.s32.totalorder %s39, 0
      %p196 = por %p194, %p195
      %p197 = scmp.ne.s32.totalorder %s185, %s186
      %p198 = scmp.eq.s32.totalorder %s40, 1
      %p199 = por %p197, %p198
      %p201 = scmp.ne.s32.totalorder %s186, %s200
      %p202 = scmp.eq.s32.totalorder %s40, 0
      %p203 = por %p201, %p202
      %s205 = sadd.s32 %s204, 1
      %p208 = scmp.eq.s32.totalorder %s34, 1
      %p209 = scmp.ne.s32.totalorder %s204, %s206
      %p210 = scmp.eq.s32.totalorder %s34, 0
      %p211 = por %p209, %p210
      %p212 = scmp.ne.s32.totalorder %s204, %s206
      %p213 = scmp.eq.s32.totalorder %s39, 1
      %p214 = por %p212, %p213
      %p215 = scmp.ne.s32.totalorder %s206, %s207
      %p216 = scmp.eq.s32.totalorder %s39, 0
      %p217 = por %p215, %p216
      %p218 = scmp.ne.s32.totalorder %s206, %s207
      %p219 = scmp.eq.s32.totalorder %s40, 1
      %p220 = por %p218, %p219
      %p222 = scmp.ne.s32.totalorder %s207, %s221
      %p223 = scmp.eq.s32.totalorder %s40, 0
      %p224 = por %p222, %p223
      %s226 = sadd.s32 %s225, 1
      %p229 = scmp.eq.s32.totalorder %s34, 1
      %p230 = scmp.ne.s32.totalorder %s225, %s227
      %p231 = scmp.eq.s32.totalorder %s34, 0
      %p232 = por %p230, %p231
      %p233 = scmp.ne.s32.totalorder %s225, %s227
      %p234 = scmp.eq.s32.totalorder %s39, 1
      %p235 = por %p233, %p234
      %p236 = scmp.ne.s32.totalorder %s227, %s228
      %p237 = scmp.eq.s32.totalorder %s39, 0
      %p238 = por %p236, %p237
      %p239 = scmp.ne.s32.totalorder %s227, %s228
      %p240 = scmp.eq.s32.totalorder %s40, 1
      %p241 = por %p239, %p240
      %p243 = scmp.ne.s32.totalorder %s228, %s242
      %p244 = scmp.eq.s32.totalorder %s40, 0
      %p245 = por %p243, %p244
      %s247 = sadd.s32 %s246, 1
      %p250 = scmp.eq.s32.totalorder %s34, 1
      %p251 = scmp.ne.s32.totalorder %s246, %s248
      %p252 = scmp.eq.s32.totalorder %s34, 0
      %p253 = por %p251, %p252
      %p254 = scmp.ne.s32.totalorder %s246, %s248
      %p255 = scmp.eq.s32.totalorder %s39, 1
      %p256 = por %p254, %p255
      %p257 = scmp.ne.s32.totalorder %s248, %s249
      %p258 = scmp.eq.s32.totalorder %s39, 0
      %p259 = por %p257, %p258
      %p260 = scmp.ne.s32.totalorder %s248, %s249
      %p261 = scmp.eq.s32.totalorder %s40, 1
      %p262 = por %p260, %p261
      %p264 = scmp.ne.s32.totalorder %s249, %s263
      %p265 = scmp.eq.s32.totalorder %s40, 0
      %p266 = por %p264, %p265
      %s267 = ssub.s32 %s34, %s41
      %p268 = scmp.eq.s32.totalorder %s267, 0
      %s270 = sadd.s32 %s269, 1
      %s271 = scalar_select %p268, %s269, %s270
      %p274 = pneg %p268
      %p275 = scmp.eq.s32.totalorder %s34, 1
      %p276 = por %p274, %p275
      %p277 = scmp.ne.s32.totalorder %s269, %s272
      %p278 = scmp.eq.s32.totalorder %s34, 0
      %p279 = por %p277, %p278
      %p280 = scmp.ne.s32.totalorder %s269, %s272
      %p281 = scmp.eq.s32.totalorder %s39, 1
      %p282 = por %p280, %p281
      %p283 = scmp.ne.s32.totalorder %s272, %s273
      %p284 = scmp.eq.s32.totalorder %s39, 0
      %p285 = por %p283, %p284
      %p286 = scmp.ne.s32.totalorder %s272, %s273
      %p287 = scmp.eq.s32.totalorder %s40, 1
      %p288 = por %p286, %p287
      %p290 = scmp.ne.s32.totalorder %s273, %s289
      %p291 = scmp.eq.s32.totalorder %s40, 0
      %p292 = por %p290, %p291
      %s293 = ssub.s32 %s34, %s41
      %p294 = scmp.eq.s32.totalorder %s293, 0
      %s296 = sadd.s32 %s295, 1
      %s297 = scalar_select %p294, %s295, %s296
      %p300 = pneg %p294
      %p301 = scmp.eq.s32.totalorder %s34, 1
      %p302 = por %p300, %p301
      %p303 = scmp.ne.s32.totalorder %s295, %s298
      %p304 = scmp.eq.s32.totalorder %s34, 0
      %p305 = por %p303, %p304
      %p306 = scmp.ne.s32.totalorder %s295, %s298
      %p307 = scmp.eq.s32.totalorder %s39, 1
      %p308 = por %p306, %p307
      %p309 = scmp.ne.s32.totalorder %s298, %s299
      %p310 = scmp.eq.s32.totalorder %s39, 0
      %p311 = por %p309, %p310
      %p312 = scmp.ne.s32.totalorder %s298, %s299
      %p313 = scmp.eq.s32.totalorder %s40, 1
      %p314 = por %p312, %p313
      %p316 = scmp.ne.s32.totalorder %s299, %s315
      %p317 = scmp.eq.s32.totalorder %s40, 0
      %p318 = por %p316, %p317
      %p319 = scmp.le.s32.totalorder 1, %s34
      %p320 = scmp.lt.s32.totalorder %s34, 3
      %p321 = pnand %p319, %p320
      %p322 = pneg %p321
      // Predicated region
      $region9: #{tpu_custom_call.1} parent=5 // pred_check
        _
      $region10: #{tpu_custom_call.1} parent=5 // pred_check_branch
        %324 = sbr.rel (%p321) target = $region12
      $region11: #{tpu_custom_call.1} parent=5 // pred_region
        %s325 = ssub.s32 %s34, 1
        // Predicated region
        $region13: #{tpu_custom_call.1} parent=11 // pred_check
          %p326 = pneg %p133
        $region14: #{tpu_custom_call.1} parent=11 // pred_check_branch
          %328 = sbr.rel (%p326) target = $region16
        $region15: #{tpu_custom_call.1} parent=11 // pred_region
          %s330 = ssub.s32 512, 512
          %331 = vsyncadd [#allocation9], %s330
          %s332 = sshll.u32 [#allocation8], 4
          %s333 = int_to_ptr.vmem [resolvable:$true] %s332
          %338 = dma.hbm_to_vmem [thread:$0]  %s3, 512, %s333, [#allocation9], 128, 128, 8
        $region16: #{tpu_custom_call.1} parent=11 // pred_fallthru
          _
        // Predicated region
        $region17: #{tpu_custom_call.1} parent=11 // pred_check
          %p339 = pneg %p154
        $region18: #{tpu_custom_call.1} parent=11 // pred_check_branch
          %341 = sbr.rel (%p339) target = $region20
        $region19: #{tpu_custom_call.1} parent=11 // pred_region
          %s343 = ssub.s32 512, 512
          %344 = vsyncadd [#allocation9], %s343
          %s345 = sshll.u32 [#allocation10], 4
          %s346 = int_to_ptr.vmem [resolvable:$true] %s345
          %351 = dma.hbm_to_vmem [thread:$0]  %s4, 512, %s346, [#allocation9], 128, 128, 8
        $region20: #{tpu_custom_call.1} parent=11 // pred_fallthru
          _
        // Predicated region
        $region21: #{tpu_custom_call.1} parent=11 // pred_check
          %p352 = pneg %p175
        $region22: #{tpu_custom_call.1} parent=11 // pred_check_branch
          %354 = sbr.rel (%p352) target = $region24
        $region23: #{tpu_custom_call.1} parent=11 // pred_region
          %s356 = ssub.s32 512, 512
          %357 = vsyncadd [#allocation12], %s356
          %s358 = sshll.u32 [#allocation11], 4
          %s359 = int_to_ptr.vmem [resolvable:$true] %s358
          %364 = dma.hbm_to_vmem [thread:$0]  %s5, 512, %s359, [#allocation12], 128, 128, 8
        $region24: #{tpu_custom_call.1} parent=11 // pred_fallthru
          _
        // Predicated region
        $region25: #{tpu_custom_call.1} parent=11 // pred_check
          %p365 = pneg %p196
        $region26: #{tpu_custom_call.1} parent=11 // pred_check_branch
          %367 = sbr.rel (%p365) target = $region28
        $region27: #{tpu_custom_call.1} parent=11 // pred_region
          %s369 = ssub.s32 512, 512
          %370 = vsyncadd [#allocation12], %s369
          %s371 = sshll.u32 [#allocation13], 4
          %s372 = int_to_ptr.vmem [resolvable:$true] %s371
          %377 = dma.hbm_to_vmem [thread:$0]  %s6, 512, %s372, [#allocation12], 128, 128, 8
        $region28: #{tpu_custom_call.1} parent=11 // pred_fallthru
          _
        // Predicated region
        $region29: #{tpu_custom_call.1} parent=11 // pred_check
          %p378 = pneg %p217
        $region30: #{tpu_custom_call.1} parent=11 // pred_check_branch
          %380 = sbr.rel (%p378) target = $region32
        $region31: #{tpu_custom_call.1} parent=11 // pred_region
          %s382 = ssub.s32 16, 16
          %383 = vsyncadd [#allocation15], %s382
          %s385 = sshll.u32 [#allocation14], 4
          %s386 = int_to_ptr.vmem [resolvable:$true] %s385
          %388 = dma.hbm_to_vmem [thread:$0]  %s7, 16, %s386, [#allocation15]
        $region32: #{tpu_custom_call.1} parent=11 // pred_fallthru
          _
        // Predicated region
        $region33: #{tpu_custom_call.1} parent=11 // pred_check
          %p389 = pneg %p238
        $region34: #{tpu_custom_call.1} parent=11 // pred_check_branch
          %391 = sbr.rel (%p389) target = $region36
        $region35: #{tpu_custom_call.1} parent=11 // pred_region
          %s393 = ssub.s32 16, 16
          %394 = vsyncadd [#allocation15], %s393
          %s396 = sshll.u32 [#allocation16], 4
          %s397 = int_to_ptr.vmem [resolvable:$true] %s396
          %399 = dma.hbm_to_vmem [thread:$0]  %s8, 16, %s397, [#allocation15]
        $region36: #{tpu_custom_call.1} parent=11 // pred_fallthru
          _
        // Predicated region
        $region37: #{tpu_custom_call.1} parent=11 // pred_check
          %p400 = pneg %p259
        $region38: #{tpu_custom_call.1} parent=11 // pred_check_branch
          %402 = sbr.rel (%p400) target = $region40
        $region39: #{tpu_custom_call.1} parent=11 // pred_region
          %s404 = ssub.s32 16, 16
          %405 = vsyncadd [#allocation18], %s404
          %s407 = sshll.u32 [#allocation17], 4
          %s408 = int_to_ptr.vmem [resolvable:$true] %s407
          %410 = dma.hbm_to_vmem [thread:$0]  %s9, 16, %s408, [#allocation18]
        $region40: #{tpu_custom_call.1} parent=11 // pred_fallthru
          _
      $region12: #{tpu_custom_call.1} parent=5 // pred_fallthru
        _
      %p411 = scmp.lt.s32.totalorder %s34, 2
      // Predicated region
      $region41: #{tpu_custom_call.1} parent=5 // pred_check
        %p412 = pneg %p411
      $region42: #{tpu_custom_call.1} parent=5 // pred_check_branch
        %414 = sbr.rel (%p412) target = $region44
      $region43: #{tpu_custom_call.1} parent=5 // pred_region
        // Predicated region
        $region45: #{tpu_custom_call.1} parent=43 // pred_check
          %p415 = pneg %p54
        $region46: #{tpu_custom_call.1} parent=43 // pred_check_branch
          %417 = sbr.rel (%p415) target = $region48
        $region47: #{tpu_custom_call.1} parent=43 // pred_region
          %s418 = sand.u32 %s44, 1
          %s419 = scalar_lea.sflag [#allocation3], %s418
          %s420 = sand.u32 %s44, 1
          %s421 = smul.addr %s420, 16
          %s422 = scalar_lea.vmem [#allocation2], %s421
          %s424 = ssub.s32 256, 256
          %425 = vsyncadd %s419, %s424
          %s426 = smul.addr %s34, 2
          %s427 = smul.addr %s426, 128
          %s428 = scalar_lea.hbm %s0, %s427
          %s429 = sshll.u32 %s422, 4
          %s430 = int_to_ptr.vmem [resolvable:$true] %s429
          %435 = dma.hbm_to_vmem [thread:$0]  %s428, 256, %s430, %s419, 128, 128, 8
        $region48: #{tpu_custom_call.1} parent=43 // pred_fallthru
          _
        // Predicated region
        $region49: #{tpu_custom_call.1} parent=43 // pred_check
          %p436 = pneg %p80
        $region50: #{tpu_custom_call.1} parent=43 // pred_check_branch
          %438 = sbr.rel (%p436) target = $region52
        $region51: #{tpu_custom_call.1} parent=43 // pred_region
          %s439 = sand.u32 %s34, 1
          %s440 = scalar_lea.sflag [#allocation6], %s439
          %s441 = sand.u32 %s70, 1
          %s442 = smul.addr %s441, 16
          %s443 = scalar_lea.vmem [#allocation5], %s442
          %s445 = ssub.s32 256, 256
          %446 = vsyncadd %s440, %s445
          %s447 = smul.addr %s34, 2
          %s448 = smul.addr %s447, 128
          %s449 = scalar_lea.hbm %s1, %s448
          %s450 = sshll.u32 %s443, 4
          %s451 = int_to_ptr.vmem [resolvable:$true] %s450
          %456 = dma.hbm_to_vmem [thread:$0]  %s449, 256, %s451, %s440, 128, 128, 8
        $region52: #{tpu_custom_call.1} parent=43 // pred_fallthru
          _
        // Predicated region
        $region53: #{tpu_custom_call.1} parent=43 // pred_check
          %p457 = pneg %p106
        $region54: #{tpu_custom_call.1} parent=43 // pred_check_branch
          %459 = sbr.rel (%p457) target = $region56
        $region55: #{tpu_custom_call.1} parent=43 // pred_region
          %s460 = sand.u32 %s34, 1
          %s461 = scalar_lea.sflag [#allocation6], %s460
          %s462 = sand.u32 %s96, 1
          %s463 = smul.addr %s462, 16
          %s464 = scalar_lea.vmem [#allocation7], %s463
          %s466 = ssub.s32 256, 256
          %467 = vsyncadd %s461, %s466
          %s468 = smul.addr %s34, 2
          %s469 = smul.addr %s468, 128
          %s470 = scalar_lea.hbm %s2, %s469
          %s471 = sshll.u32 %s464, 4
          %s472 = int_to_ptr.vmem [resolvable:$true] %s471
          %477 = dma.hbm_to_vmem [thread:$0]  %s470, 256, %s472, %s461, 128, 128, 8
        $region56: #{tpu_custom_call.1} parent=43 // pred_fallthru
          _
      $region44: #{tpu_custom_call.1} parent=5 // pred_fallthru
        _
      %p478 = scmp.le.s32.totalorder 1, %s34
      %p479 = scmp.lt.s32.totalorder %s34, 3
      %p480 = pnand %p478, %p479
      %p481 = pneg %p480
      // Predicated region
      $region57: #{tpu_custom_call.1} parent=5 // pred_check
        _
      $region58: #{tpu_custom_call.1} parent=5 // pred_check_branch
        %483 = sbr.rel (%p480) target = $region60
      $region59: #{tpu_custom_call.1} parent=5 // pred_region
        %s484 = ssub.s32 %s34, 1
        %s485 = sand.u32 %s47, 1
        %s486 = scalar_lea.sflag [#allocation3], %s485
        %s487 = sand.u32 %s47, 1
        %s488 = smul.addr %s487, 16
        %s489 = scalar_lea.vmem [#allocation2], %s488
        // Predicated region
        $region61: #{tpu_custom_call.1} parent=59 // pred_check
          %p490 = pneg %p60
        $region62: #{tpu_custom_call.1} parent=59 // pred_check_branch
          %492 = sbr.rel (%p490) target = $region64
        $region63: #{tpu_custom_call.1} parent=59 // pred_region
          %493 = dma.done %s486, 256
        $region64: #{tpu_custom_call.1} parent=59 // pred_fallthru
          _
        %s494 = sand.u32 %s39, 1
        %s495 = scalar_lea.sflag [#allocation6], %s494
        %s496 = sand.u32 %s73, 1
        %s497 = smul.addr %s496, 16
        %s498 = scalar_lea.vmem [#allocation5], %s497
        // Predicated region
        $region65: #{tpu_custom_call.1} parent=59 // pred_check
          %p499 = pneg %p86
        $region66: #{tpu_custom_call.1} parent=59 // pred_check_branch
          %501 = sbr.rel (%p499) target = $region68
        $region67: #{tpu_custom_call.1} parent=59 // pred_region
          %502 = dma.done %s495, 256
        $region68: #{tpu_custom_call.1} parent=59 // pred_fallthru
          _
        %s503 = sand.u32 %s39, 1
        %s504 = scalar_lea.sflag [#allocation6], %s503
        %s505 = sand.u32 %s99, 1
        %s506 = smul.addr %s505, 16
        %s507 = scalar_lea.vmem [#allocation7], %s506
        // Predicated region
        $region69: #{tpu_custom_call.1} parent=59 // pred_check
          %p508 = pneg %p112
        $region70: #{tpu_custom_call.1} parent=59 // pred_check_branch
          %510 = sbr.rel (%p508) target = $region72
        $region71: #{tpu_custom_call.1} parent=59 // pred_region
          %511 = dma.done %s504, 256
        $region72: #{tpu_custom_call.1} parent=59 // pred_fallthru
          _
        // Predicated region
        $region73: #{tpu_custom_call.1} parent=59 // pred_check
          %p512 = pneg %p133
        $region74: #{tpu_custom_call.1} parent=59 // pred_check_branch
          %514 = sbr.rel (%p512) target = $region76
        $region75: #{tpu_custom_call.1} parent=59 // pred_region
          %515 = dma.done [#allocation9], 512
        $region76: #{tpu_custom_call.1} parent=59 // pred_fallthru
          _
        // Predicated region
        $region77: #{tpu_custom_call.1} parent=59 // pred_check
          %p516 = pneg %p154
        $region78: #{tpu_custom_call.1} parent=59 // pred_check_branch
          %518 = sbr.rel (%p516) target = $region80
        $region79: #{tpu_custom_call.1} parent=59 // pred_region
          %519 = dma.done [#allocation9], 512
        $region80: #{tpu_custom_call.1} parent=59 // pred_fallthru
          _
        // Predicated region
        $region81: #{tpu_custom_call.1} parent=59 // pred_check
          %p520 = pneg %p175
        $region82: #{tpu_custom_call.1} parent=59 // pred_check_branch
          %522 = sbr.rel (%p520) target = $region84
        $region83: #{tpu_custom_call.1} parent=59 // pred_region
          %523 = dma.done [#allocation12], 512
        $region84: #{tpu_custom_call.1} parent=59 // pred_fallthru
          _
        // Predicated region
        $region85: #{tpu_custom_call.1} parent=59 // pred_check
          %p524 = pneg %p196
        $region86: #{tpu_custom_call.1} parent=59 // pred_check_branch
          %526 = sbr.rel (%p524) target = $region88
        $region87: #{tpu_custom_call.1} parent=59 // pred_region
          %527 = dma.done [#allocation12], 512
        $region88: #{tpu_custom_call.1} parent=59 // pred_fallthru
          _
        // Predicated region
        $region89: #{tpu_custom_call.1} parent=59 // pred_check
          %p528 = pneg %p217
        $region90: #{tpu_custom_call.1} parent=59 // pred_check_branch
          %530 = sbr.rel (%p528) target = $region92
        $region91: #{tpu_custom_call.1} parent=59 // pred_region
          %531 = dma.done [#allocation15], 16
        $region92: #{tpu_custom_call.1} parent=59 // pred_fallthru
          _
        // Predicated region
        $region93: #{tpu_custom_call.1} parent=59 // pred_check
          %p532 = pneg %p238
        $region94: #{tpu_custom_call.1} parent=59 // pred_check_branch
          %534 = sbr.rel (%p532) target = $region96
        $region95: #{tpu_custom_call.1} parent=59 // pred_region
          %535 = dma.done [#allocation15], 16
        $region96: #{tpu_custom_call.1} parent=59 // pred_fallthru
          _
        // Predicated region
        $region97: #{tpu_custom_call.1} parent=59 // pred_check
          %p536 = pneg %p259
        $region98: #{tpu_custom_call.1} parent=59 // pred_check_branch
          %538 = sbr.rel (%p536) target = $region100
        $region99: #{tpu_custom_call.1} parent=59 // pred_region
          %539 = dma.done [#allocation18], 16
        $region100: #{tpu_custom_call.1} parent=59 // pred_fallthru
          _
        %s540 = sand.u32 %s47, 1
        %s541 = scalar_lea.sflag [#allocation3], %s540
        %s542 = sand.u32 %s47, 1
        %s543 = smul.addr %s542, 16
        %s544 = scalar_lea.vmem [#allocation2], %s543
        %p545 = pneg %p60
        %p546 = pneg %p57
        %s547 = sand.u32 %s39, 1
        %s548 = scalar_lea.sflag [#allocation6], %s547
        %s549 = sand.u32 %s73, 1
        %s550 = smul.addr %s549, 16
        %s551 = scalar_lea.vmem [#allocation5], %s550
        %p552 = pneg %p86
        %p553 = pneg %p83
        %s554 = sand.u32 %s39, 1
        %s555 = scalar_lea.sflag [#allocation6], %s554
        %s556 = sand.u32 %s99, 1
        %s557 = smul.addr %s556, 16
        %s558 = scalar_lea.vmem [#allocation7], %s557
        %p559 = pneg %p112
        %p560 = pneg %p109
        %p561 = pneg %p133
        %p562 = pneg %p130
        %p563 = pneg %p154
        %p564 = pneg %p151
        %p565 = pneg %p175
        %p566 = pneg %p172
        %p567 = pneg %p196
        %p568 = pneg %p193
        %p569 = pneg %p217
        %p570 = pneg %p214
        %p571 = pneg %p238
        %p572 = pneg %p235
        %p573 = pneg %p259
        %p574 = pneg %p256
        %p575 = pneg %p285
        %p576 = pneg %p282
        %s577 = sand.u32 %s272, 1
        %s578 = scalar_lea.sflag [#allocation4], %s577
        %s579 = sand.u32 %s272, 1
        %s580 = smul.addr %s579, 16
        %s581 = scalar_lea.vmem [#allocation19], %s580
        %p582 = pneg %p311
        %p583 = pneg %p308
        %s584 = sand.u32 %s298, 1
        %s585 = scalar_lea.sflag [#allocation21], %s584
        %s586 = sand.u32 %s298, 1
        %s587 = smul.addr %s586, 64
        %s588 = scalar_lea.vmem [#allocation20], %s587
        %v589 = vld [vmem:[%s489] sm:$0xff]
        %v590 = vld [vmem:[%s489 + $0x8] sm:$0xff]
        %v591 = vld [vmem:[%s498] sm:$0xff]
        %v592 = vld [vmem:[%s498 + $0x8] sm:$0xff]
        %v593 = vld [vmem:[%s507] sm:$0xff]
        %v594 = vld [vmem:[%s507 + $0x8] sm:$0xff]
        %v595 = vld [vmem:[#allocation8] sm:$0xff]
        %v596 = vld [vmem:[#allocation8 + $0x8] sm:$0xff]
        %v597 = vld [vmem:[#allocation8 + $0x10] sm:$0xff]
        %v598 = vld [vmem:[#allocation8 + $0x18] sm:$0xff]
        %vm599 = vcmask 261120
        %v601 = vsel %vm599, %v589, 0
        %v604 = vsel %vm599, %v590, 0
        %606 = vmatprep.subr.mxu0 0.0
        %607 = vmatpush1.msra.mxu0 %v595
        %608 = vmatprep.subr.mxu0 0.0
        %609 = vmatpush1.msra.mxu0 %v596
        %610 = vmatprep.subr.mxu0 0.0
        %611 = vmatpush1.msra.mxu0 %v597
        %612 = vmatprep.subr.mxu0 0.0
        %613 = vmatpush1.msra.mxu0 %v598
        %614 = vmatprep.subr.mxu0 0.0
        %615 = vmatpush1.msra.mxu0 0.0
        %616 = vmatprep.subr.mxu0 0.0
        %617 = vmatpush1.msra.mxu0 0.0
        %618 = vmatprep.subr.mxu0 0.0
        %619 = vmatpush1.msra.mxu0 0.0
        %620 = vmatprep.subr.mxu0 0.0
        %621 = vmatpush1.msra.mxu0 0.0
        %622 = vmatprep.subr.mxu0 0.0
        %623 = vmatpush1.msra.mxu0 0.0
        %624 = vmatprep.subr.mxu0 0.0
        %625 = vmatpush1.msra.mxu0 0.0
        %626 = vmatprep.subr.mxu0 0.0
        %627 = vmatpush1.msra.mxu0 0.0
        %628 = vmatprep.subr.mxu0 0.0
        %629 = vmatpush1.msra.mxu0 0.0
        %630 = vmatprep.subr.mxu0 0.0
        %631 = vmatpush1.msra.mxu0 0.0
        %632 = vmatprep.subr.mxu0 0.0
        %633 = vmatpush1.msra.mxu0 0.0
        %634 = vmatprep.subr.mxu0 0.0
        %635 = vmatpush1.msra.mxu0 0.0
        %636 = vmatprep.subr.mxu0 0.0
        %637 = vmatpush1.msra.mxu0 0.0
        %638 = vmatprep.subr.mxu0 0.0
        %639 = vmatpush1.msra.mxu0 0.0
        %640 = vmatprep.subr.mxu0 0.0
        %641 = vmatpush1.msra.mxu0 0.0
        %642 = vmatprep.subr.mxu0 0.0
        %643 = vmatpush1.msra.mxu0 0.0
        %644 = vmatprep.subr.mxu0 0.0
        %645 = vmatpush1.msra.mxu0 0.0
        %646 = vmatprep.subr.mxu0 0.0
        %647 = vmatpush1.msra.mxu0 0.0
        %648 = vmatprep.subr.mxu0 0.0
        %649 = vmatpush1.msra.mxu0 0.0
        %650 = vmatprep.subr.mxu0 0.0
        %651 = vmatpush1.msra.mxu0 0.0
        %652 = vmatprep.subr.mxu0 0.0
        %653 = vmatpush1.msra.mxu0 0.0
        %654 = vmatprep.subr.mxu0 0.0
        %655 = vmatpush1.msra.mxu0 0.0
        %656 = vmatprep.subr.mxu0 0.0
        %657 = vmatpush1.msra.mxu0 0.0
        %658 = vmatprep.subr.mxu0 0.0
        %659 = vmatpush1.msra.mxu0 0.0
        %660 = vmatprep.subr.mxu0 0.0
        %661 = vmatpush1.msra.mxu0 0.0
        %662 = vmatprep.subr.mxu0 0.0
        %663 = vmatpush1.msra.mxu0 0.0
        %664 = vmatprep.subr.mxu0 0.0
        %665 = vmatpush1.msra.mxu0 0.0
        %666 = vmatprep.subr.mxu0 0.0
        %667 = vmatpush1.msra.mxu0 0.0
        %668 = vmatprep.subr.mxu0 0.0
        %669 = vmatpush1.msra.mxu0 0.0
        %670 = vmatprep.mubr.f32.mxu0 0.0
        %671 = vmatmul.mubr.f32.gmra.mrb[0].mxu0 %v601
        %v672 = vpop.f32.mrb[0].mxu0
        %v673 = vadd.f32 0.0, %v672
        %v674 = vpop.f32.mrb[0].mxu0
        %675 = vmatprep.mubr.f32.mxu0 0.0
        %676 = vmatmul.mubr.f32.gmra.mrb[0].mxu0 %v604
        %v677 = vpop.f32.mrb[0].mxu0
        %v678 = vadd.f32 0.0, %v677
        %v679 = vpop.f32.mrb[0].mxu0
        %680 = vdwg.mxu0
        %v681 = vld [vmem:[#allocation10] sm:$0xff]
        %v682 = vld [vmem:[#allocation10 + $0x8] sm:$0xff]
        %v683 = vld [vmem:[#allocation10 + $0x10] sm:$0xff]
        %v684 = vld [vmem:[#allocation10 + $0x18] sm:$0xff]
        %v686 = vsel %vm599, %v591, 0
        %v689 = vsel %vm599, %v592, 0
        %691 = vmatprep.subr.mxu0 0.0
        %692 = vmatpush1.msra.mxu0 %v681
        %693 = vmatprep.subr.mxu0 0.0
        %694 = vmatpush1.msra.mxu0 %v682
        %695 = vmatprep.subr.mxu0 0.0
        %696 = vmatpush1.msra.mxu0 %v683
        %697 = vmatprep.subr.mxu0 0.0
        %698 = vmatpush1.msra.mxu0 %v684
        %699 = vmatprep.subr.mxu0 0.0
        %700 = vmatpush1.msra.mxu0 0.0
        %701 = vmatprep.subr.mxu0 0.0
        %702 = vmatpush1.msra.mxu0 0.0
        %703 = vmatprep.subr.mxu0 0.0
        %704 = vmatpush1.msra.mxu0 0.0
        %705 = vmatprep.subr.mxu0 0.0
        %706 = vmatpush1.msra.mxu0 0.0
        %707 = vmatprep.subr.mxu0 0.0
        %708 = vmatpush1.msra.mxu0 0.0
        %709 = vmatprep.subr.mxu0 0.0
        %710 = vmatpush1.msra.mxu0 0.0
        %711 = vmatprep.subr.mxu0 0.0
        %712 = vmatpush1.msra.mxu0 0.0
        %713 = vmatprep.subr.mxu0 0.0
        %714 = vmatpush1.msra.mxu0 0.0
        %715 = vmatprep.subr.mxu0 0.0
        %716 = vmatpush1.msra.mxu0 0.0
        %717 = vmatprep.subr.mxu0 0.0
        %718 = vmatpush1.msra.mxu0 0.0
        %719 = vmatprep.subr.mxu0 0.0
        %720 = vmatpush1.msra.mxu0 0.0
        %721 = vmatprep.subr.mxu0 0.0
        %722 = vmatpush1.msra.mxu0 0.0
        %723 = vmatprep.subr.mxu0 0.0
        %724 = vmatpush1.msra.mxu0 0.0
        %725 = vmatprep.subr.mxu0 0.0
        %726 = vmatpush1.msra.mxu0 0.0
        %727 = vmatprep.subr.mxu0 0.0
        %728 = vmatpush1.msra.mxu0 0.0
        %729 = vmatprep.subr.mxu0 0.0
        %730 = vmatpush1.msra.mxu0 0.0
        %731 = vmatprep.subr.mxu0 0.0
        %732 = vmatpush1.msra.mxu0 0.0
        %733 = vmatprep.subr.mxu0 0.0
        %734 = vmatpush1.msra.mxu0 0.0
        %735 = vmatprep.subr.mxu0 0.0
        %736 = vmatpush1.msra.mxu0 0.0
        %737 = vmatprep.subr.mxu0 0.0
        %738 = vmatpush1.msra.mxu0 0.0
        %739 = vmatprep.subr.mxu0 0.0
        %740 = vmatpush1.msra.mxu0 0.0
        %741 = vmatprep.subr.mxu0 0.0
        %742 = vmatpush1.msra.mxu0 0.0
        %743 = vmatprep.subr.mxu0 0.0
        %744 = vmatpush1.msra.mxu0 0.0
        %745 = vmatprep.subr.mxu0 0.0
        %746 = vmatpush1.msra.mxu0 0.0
        %747 = vmatprep.subr.mxu0 0.0
        %748 = vmatpush1.msra.mxu0 0.0
        %749 = vmatprep.subr.mxu0 0.0
        %750 = vmatpush1.msra.mxu0 0.0
        %751 = vmatprep.subr.mxu0 0.0
        %752 = vmatpush1.msra.mxu0 0.0
        %753 = vmatprep.subr.mxu0 0.0
        %754 = vmatpush1.msra.mxu0 0.0
        %755 = vmatprep.mubr.f32.mxu0 0.0
        %756 = vmatmul.mubr.f32.gmra.mrb[0].mxu0 %v686
        %v757 = vpop.f32.mrb[0].mxu0
        %v758 = vadd.f32 0.0, %v757
        %v759 = vpop.f32.mrb[0].mxu0
        %760 = vmatprep.mubr.f32.mxu0 0.0
        %761 = vmatmul.mubr.f32.gmra.mrb[0].mxu0 %v689
        %v762 = vpop.f32.mrb[0].mxu0
        %v763 = vadd.f32 0.0, %v762
        %v764 = vpop.f32.mrb[0].mxu0
        %765 = vdwg.mxu0
        %v766 = vld [vmem:[#allocation11] sm:$0xff]
        %v767 = vld [vmem:[#allocation11 + $0x8] sm:$0xff]
        %v768 = vld [vmem:[#allocation11 + $0x10] sm:$0xff]
        %v769 = vld [vmem:[#allocation11 + $0x18] sm:$0xff]
        %v771 = vsel %vm599, %v593, 0
        %v774 = vsel %vm599, %v594, 0
        %776 = vmatprep.subr.mxu0 0.0
        %777 = vmatpush1.msra.mxu0 %v766
        %778 = vmatprep.subr.mxu0 0.0
        %779 = vmatpush1.msra.mxu0 %v767
        %780 = vmatprep.subr.mxu0 0.0
        %781 = vmatpush1.msra.mxu0 %v768
        %782 = vmatprep.subr.mxu0 0.0
        %783 = vmatpush1.msra.mxu0 %v769
        %784 = vmatprep.subr.mxu0 0.0
        %785 = vmatpush1.msra.mxu0 0.0
        %786 = vmatprep.subr.mxu0 0.0
        %787 = vmatpush1.msra.mxu0 0.0
        %788 = vmatprep.subr.mxu0 0.0
        %789 = vmatpush1.msra.mxu0 0.0
        %790 = vmatprep.subr.mxu0 0.0
        %791 = vmatpush1.msra.mxu0 0.0
        %792 = vmatprep.subr.mxu0 0.0
        %793 = vmatpush1.msra.mxu0 0.0
        %794 = vmatprep.subr.mxu0 0.0
        %795 = vmatpush1.msra.mxu0 0.0
        %796 = vmatprep.subr.mxu0 0.0
        %797 = vmatpush1.msra.mxu0 0.0
        %798 = vmatprep.subr.mxu0 0.0
        %799 = vmatpush1.msra.mxu0 0.0
        %800 = vmatprep.subr.mxu0 0.0
        %801 = vmatpush1.msra.mxu0 0.0
        %802 = vmatprep.subr.mxu0 0.0
        %803 = vmatpush1.msra.mxu0 0.0
        %804 = vmatprep.subr.mxu0 0.0
        %805 = vmatpush1.msra.mxu0 0.0
        %806 = vmatprep.subr.mxu0 0.0
        %807 = vmatpush1.msra.mxu0 0.0
        %808 = vmatprep.subr.mxu0 0.0
        %809 = vmatpush1.msra.mxu0 0.0
        %810 = vmatprep.subr.mxu0 0.0
        %811 = vmatpush1.msra.mxu0 0.0
        %812 = vmatprep.subr.mxu0 0.0
        %813 = vmatpush1.msra.mxu0 0.0
        %814 = vmatprep.subr.mxu0 0.0
        %815 = vmatpush1.msra.mxu0 0.0
        %816 = vmatprep.subr.mxu0 0.0
        %817 = vmatpush1.msra.mxu0 0.0
        %818 = vmatprep.subr.mxu0 0.0
        %819 = vmatpush1.msra.mxu0 0.0
        %820 = vmatprep.subr.mxu0 0.0
        %821 = vmatpush1.msra.mxu0 0.0
        %822 = vmatprep.subr.mxu0 0.0
        %823 = vmatpush1.msra.mxu0 0.0
        %824 = vmatprep.subr.mxu0 0.0
        %825 = vmatpush1.msra.mxu0 0.0
        %826 = vmatprep.subr.mxu0 0.0
        %827 = vmatpush1.msra.mxu0 0.0
        %828 = vmatprep.subr.mxu0 0.0
        %829 = vmatpush1.msra.mxu0 0.0
        %830 = vmatprep.subr.mxu0 0.0
        %831 = vmatpush1.msra.mxu0 0.0
        %832 = vmatprep.subr.mxu0 0.0
        %833 = vmatpush1.msra.mxu0 0.0
        %834 = vmatprep.subr.mxu0 0.0
        %835 = vmatpush1.msra.mxu0 0.0
        %836 = vmatprep.subr.mxu0 0.0
        %837 = vmatpush1.msra.mxu0 0.0
        %838 = vmatprep.subr.mxu0 0.0
        %839 = vmatpush1.msra.mxu0 0.0
        %840 = vmatprep.mubr.f32.mxu0 0.0
        %841 = vmatmul.mubr.f32.gmra.mrb[0].mxu0 %v771
        %v842 = vpop.f32.mrb[0].mxu0
        %v843 = vadd.f32 0.0, %v842
        %v844 = vpop.f32.mrb[0].mxu0
        %845 = vmatprep.mubr.f32.mxu0 0.0
        %846 = vmatmul.mubr.f32.gmra.mrb[0].mxu0 %v774
        %v847 = vpop.f32.mrb[0].mxu0
        %v848 = vadd.f32 0.0, %v847
        %v849 = vpop.f32.mrb[0].mxu0
        %850 = vdwg.mxu0
        %v851 = vlaneseq
        %v852 = vand.u32 %v851, 127
        %v853 = vsub.s32 15, %v852
        %vm854 = vcmask 64512
        %v856 = vsel %vm854, %v673, 0
        %v859 = vsel %vm854, %v678, 0
        %v862 = vsel %vm854, %v758, 0
        %v865 = vsel %vm854, %v763, 0
        %867 = vmatprep.subr.mxu0 0.0
        %868 = vmatpush1.xpose.msra.mxu0 %v862
        %869 = vmatprep.subr.mxu0 0.0
        %870 = vmatpush1.xpose.msra.mxu0 %v865
        %871 = vmatprep.subr.mxu0 0.0
        %872 = vmatpush1.xpose.msra.mxu0 0.0
        %873 = vmatprep.subr.mxu0 0.0
        %874 = vmatpush1.xpose.msra.mxu0 0.0
        %875 = vmatprep.subr.mxu0 0.0
        %876 = vmatpush1.xpose.msra.mxu0 0.0
        %877 = vmatprep.subr.mxu0 0.0
        %878 = vmatpush1.xpose.msra.mxu0 0.0
        %879 = vmatprep.subr.mxu0 0.0
        %880 = vmatpush1.xpose.msra.mxu0 0.0
        %881 = vmatprep.subr.mxu0 0.0
        %882 = vmatpush1.xpose.msra.mxu0 0.0
        %883 = vmatprep.subr.mxu0 0.0
        %884 = vmatpush1.xpose.msra.mxu0 0.0
        %885 = vmatprep.subr.mxu0 0.0
        %886 = vmatpush1.xpose.msra.mxu0 0.0
        %887 = vmatprep.subr.mxu0 0.0
        %888 = vmatpush1.xpose.msra.mxu0 0.0
        %889 = vmatprep.subr.mxu0 0.0
        %890 = vmatpush1.xpose.msra.mxu0 0.0
        %891 = vmatprep.subr.mxu0 0.0
        %892 = vmatpush1.xpose.msra.mxu0 0.0
        %893 = vmatprep.subr.mxu0 0.0
        %894 = vmatpush1.xpose.msra.mxu0 0.0
        %895 = vmatprep.subr.mxu0 0.0
        %896 = vmatpush1.xpose.msra.mxu0 0.0
        %897 = vmatprep.subr.mxu0 0.0
        %898 = vmatpush1.xpose.msra.mxu0 0.0
        %899 = vmatprep.subr.mxu0 0.0
        %900 = vmatpush1.xpose.msra.mxu0 0.0
        %901 = vmatprep.subr.mxu0 0.0
        %902 = vmatpush1.xpose.msra.mxu0 0.0
        %903 = vmatprep.subr.mxu0 0.0
        %904 = vmatpush1.xpose.msra.mxu0 0.0
        %905 = vmatprep.subr.mxu0 0.0
        %906 = vmatpush1.xpose.msra.mxu0 0.0
        %907 = vmatprep.subr.mxu0 0.0
        %908 = vmatpush1.xpose.msra.mxu0 0.0
        %909 = vmatprep.subr.mxu0 0.0
        %910 = vmatpush1.xpose.msra.mxu0 0.0
        %911 = vmatprep.subr.mxu0 0.0
        %912 = vmatpush1.xpose.msra.mxu0 0.0
        %913 = vmatprep.subr.mxu0 0.0
        %914 = vmatpush1.xpose.msra.mxu0 0.0
        %915 = vmatprep.subr.mxu0 0.0
        %916 = vmatpush1.xpose.msra.mxu0 0.0
        %917 = vmatprep.subr.mxu0 0.0
        %918 = vmatpush1.xpose.msra.mxu0 0.0
        %919 = vmatprep.subr.mxu0 0.0
        %920 = vmatpush1.xpose.msra.mxu0 0.0
        %921 = vmatprep.subr.mxu0 0.0
        %922 = vmatpush1.xpose.msra.mxu0 0.0
        %923 = vmatprep.subr.mxu0 0.0
        %924 = vmatpush1.xpose.msra.mxu0 0.0
        %925 = vmatprep.subr.mxu0 0.0
        %926 = vmatpush1.xpose.msra.mxu0 0.0
        %927 = vmatprep.subr.mxu0 0.0
        %928 = vmatpush1.xpose.msra.mxu0 0.0
        %929 = vmatprep.subr.mxu0 0.0
        %930 = vmatpush1.xpose.msra.mxu0 0.0
        %931 = vmatprep.mubr.f32.mxu0 0.0
        %932 = vmatmul.mubr.f32.gmra.mrb[0].mxu0 %v856
        %v933 = vpop.f32.mrb[0].mxu0
        %v934 = vadd.f32 0.0, %v933
        %v935 = vpop.f32.mrb[0].mxu0
        %936 = vmatprep.mubr.f32.mxu0 0.0
        %937 = vmatmul.mubr.f32.gmra.mrb[0].mxu0 %v859
        %v938 = vpop.f32.mrb[0].mxu0
        %v939 = vadd.f32 0.0, %v938
        %v940 = vpop.f32.mrb[0].mxu0
        %941 = vdwg.mxu0
        %vm944 = vcmp.lt.s32.totalorder %v934, 0
        %vm945 = vcmp.lt.s32.totalorder %v939, 0
        %v946 = vxor.u32 %v934, 2147483647
        %v947 = vxor.u32 %v939, 2147483647
        %v948 = vsel %vm944, %v946, %v934
        %v949 = vsel %vm945, %v947, %v939
        %v950 = vand.u32 %v948, 4294967280
        %v951 = vand.u32 %v949, 4294967280
        %v952 = vor.u32 %v950, %v853
        %v953 = vor.u32 %v951, %v853
        %vm954 = vcmask 130048
        %v955 = vsel %vm954, %v952, 2147483648
        %v956 = vand.u32 %v955, 65535
        %v957 = vshra.s32 %v955, 16
        %v958 = vcvt.s32.f32 %v956
        %v959 = vcvt.s32.f32 %v957
        %960 = vmax.xlane.f32.xlu0 %v959
        %v961 = vpop.xlane.xlu0 %960
        %vm962 = vcmp.eq.f32.partialorder %v959, %v961
        %v963 = vsel %vm962, %v958, -inf
        %964 = vmax.xlane.f32.xlu0 %v963
        %v965 = vpop.xlane.xlu0 %964
        %v966 = vcvt.f32.s32 %v965
        %v967 = vcvt.f32.s32 %v961
        %v968 = vshll.u32 %v967, 16
        %v969 = vadd.s32 %v968, %v966
        %v970 = vsel %vm954, %v953, 2147483648
        %v971 = vand.u32 %v970, 65535
        %v972 = vshra.s32 %v970, 16
        %v973 = vcvt.s32.f32 %v971
        %v974 = vcvt.s32.f32 %v972
        %975 = vmax.xlane.f32.xlu0 %v974
        %v976 = vpop.xlane.xlu0 %975
        %vm977 = vcmp.eq.f32.partialorder %v974, %v976
        %v978 = vsel %vm977, %v973, -inf
        %979 = vmax.xlane.f32.xlu0 %v978
        %v980 = vpop.xlane.xlu0 %979
        %v981 = vcvt.f32.s32 %v980
        %v982 = vcvt.f32.s32 %v976
        %v983 = vshll.u32 %v982, 16
        %v984 = vadd.s32 %v983, %v981
        %vm985 = vcmp.eq.s32.totalorder %v952, %v969
        %vm986 = vcmp.eq.s32.totalorder %v953, %v984
        %v987 = vand.u32 %v969, 4294967280
        %v988 = vand.u32 %v984, 4294967280
        %vm989 = vcmp.lt.s32.totalorder %v987, 0
        %vm990 = vcmp.lt.s32.totalorder %v988, 0
        %v991 = vxor.u32 %v987, 2147483647
        %v992 = vxor.u32 %v988, 2147483647
        %v993 = vsel %vm989, %v991, %v987
        %v994 = vsel %vm990, %v992, %v988
        %v997 = vsel %vm985, 1.0, 0.0
        %v998 = vsel %vm986, 1.0, 0.0
        %v999 = vadd.f32 %v997, 0.0
        %v1000 = vadd.f32 %v998, 0.0
        %v1001 = vsel %vm985, 2147483648, %v952
        %v1002 = vsel %vm986, 2147483648, %v953
        %v1003 = vsel %vm954, %v1001, 2147483648
        %v1004 = vand.u32 %v1003, 65535
        %v1005 = vshra.s32 %v1003, 16
        %v1006 = vcvt.s32.f32 %v1004
        %v1007 = vcvt.s32.f32 %v1005
        %1008 = vmax.xlane.f32.xlu0 %v1007
        %v1009 = vpop.xlane.xlu0 %1008
        %vm1010 = vcmp.eq.f32.partialorder %v1007, %v1009
        %v1011 = vsel %vm1010, %v1006, -inf
        %1012 = vmax.xlane.f32.xlu0 %v1011
        %v1013 = vpop.xlane.xlu0 %1012
        %v1014 = vcvt.f32.s32 %v1013
        %v1015 = vcvt.f32.s32 %v1009
        %v1016 = vshll.u32 %v1015, 16
        %v1017 = vadd.s32 %v1016, %v1014
        %v1018 = vsel %vm954, %v1002, 2147483648
        %v1019 = vand.u32 %v1018, 65535
        %v1020 = vshra.s32 %v1018, 16
        %v1021 = vcvt.s32.f32 %v1019
        %v1022 = vcvt.s32.f32 %v1020
        %1023 = vmax.xlane.f32.xlu0 %v1022
        %v1024 = vpop.xlane.xlu0 %1023
        %vm1025 = vcmp.eq.f32.partialorder %v1022, %v1024
        %v1026 = vsel %vm1025, %v1021, -inf
        %1027 = vmax.xlane.f32.xlu0 %v1026
        %v1028 = vpop.xlane.xlu0 %1027
        %v1029 = vcvt.f32.s32 %v1028
        %v1030 = vcvt.f32.s32 %v1024
        %v1031 = vshll.u32 %v1030, 16
        %v1032 = vadd.s32 %v1031, %v1029
        %vm1033 = vcmp.eq.s32.totalorder %v1001, %v1017
        %vm1034 = vcmp.eq.s32.totalorder %v1002, %v1032
        %v1035 = vand.u32 %v1017, 4294967280
        %v1036 = vand.u32 %v1032, 4294967280
        %vm1037 = vcmp.lt.s32.totalorder %v1035, 0
        %vm1038 = vcmp.lt.s32.totalorder %v1036, 0
        %v1039 = vxor.u32 %v1035, 2147483647
        %v1040 = vxor.u32 %v1036, 2147483647
        %v1041 = vsel %vm1037, %v1039, %v1035
        %v1042 = vsel %vm1038, %v1040, %v1036
        %v1045 = vsub.f32 %v1041, %v993
        %v1046 = vsub.f32 %v1042, %v994
        %v1047 = vmul.f32 %v1045, 1.442695
        %v1048 = vpow.pop %v1047
        %v1049 = vmul.f32 %v1046, 1.442695
        %v1050 = vpow.pop %v1049
        %v1051 = vadd.f32 %v1048, 1.0
        %v1052 = vadd.f32 %v1050, 1.0
        %v1053 = vsel %vm1033, %v1048, 0.0
        %v1054 = vsel %vm1034, %v1050, 0.0
        %v1055 = vadd.f32 %v999, %v1053
        %v1056 = vadd.f32 %v1000, %v1054
        %v1057 = vsel %vm1033, 2147483648, %v1001
        %v1058 = vsel %vm1034, 2147483648, %v1002
        %v1059 = vsel %vm954, %v1057, 2147483648
        %v1060 = vand.u32 %v1059, 65535
        %v1061 = vshra.s32 %v1059, 16
        %v1062 = vcvt.s32.f32 %v1060
        %v1063 = vcvt.s32.f32 %v1061
        %1064 = vmax.xlane.f32.xlu0 %v1063
        %v1065 = vpop.xlane.xlu0 %1064
        %vm1066 = vcmp.eq.f32.partialorder %v1063, %v1065
        %v1067 = vsel %vm1066, %v1062, -inf
        %1068 = vmax.xlane.f32.xlu0 %v1067
        %v1069 = vpop.xlane.xlu0 %1068
        %v1070 = vcvt.f32.s32 %v1069
        %v1071 = vcvt.f32.s32 %v1065
        %v1072 = vshll.u32 %v1071, 16
        %v1073 = vadd.s32 %v1072, %v1070
        %v1074 = vsel %vm954, %v1058, 2147483648
        %v1075 = vand.u32 %v1074, 65535
        %v1076 = vshra.s32 %v1074, 16
        %v1077 = vcvt.s32.f32 %v1075
        %v1078 = vcvt.s32.f32 %v1076
        %1079 = vmax.xlane.f32.xlu0 %v1078
        %v1080 = vpop.xlane.xlu0 %1079
        %vm1081 = vcmp.eq.f32.partialorder %v1078, %v1080
        %v1082 = vsel %vm1081, %v1077, -inf
        %1083 = vmax.xlane.f32.xlu0 %v1082
        %v1084 = vpop.xlane.xlu0 %1083
        %v1085 = vcvt.f32.s32 %v1084
        %v1086 = vcvt.f32.s32 %v1080
        %v1087 = vshll.u32 %v1086, 16
        %v1088 = vadd.s32 %v1087, %v1085
        %vm1089 = vcmp.eq.s32.totalorder %v1057, %v1073
        %vm1090 = vcmp.eq.s32.totalorder %v1058, %v1088
        %v1091 = vand.u32 %v1073, 4294967280
        %v1092 = vand.u32 %v1088, 4294967280
        %vm1093 = vcmp.lt.s32.totalorder %v1091, 0
        %vm1094 = vcmp.lt.s32.totalorder %v1092, 0
        %v1095 = vxor.u32 %v1091, 2147483647
        %v1096 = vxor.u32 %v1092, 2147483647
        %v1097 = vsel %vm1093, %v1095, %v1091
        %v1098 = vsel %vm1094, %v1096, %v1092
        %v1101 = vsub.f32 %v1097, %v993
        %v1102 = vsub.f32 %v1098, %v994
        %v1103 = vmul.f32 %v1101, 1.442695
        %v1104 = vpow.pop %v1103
        %v1105 = vmul.f32 %v1102, 1.442695
        %v1106 = vpow.pop %v1105
        %v1107 = vadd.f32 %v1051, %v1104
        %v1108 = vadd.f32 %v1052, %v1106
        %v1109 = vsel %vm1089, %v1104, 0.0
        %v1110 = vsel %vm1090, %v1106, 0.0
        %v1111 = vadd.f32 %v1055, %v1109
        %v1112 = vadd.f32 %v1056, %v1110
        %v1113 = vsel %vm1089, 2147483648, %v1057
        %v1114 = vsel %vm1090, 2147483648, %v1058
        %v1115 = vsel %vm954, %v1113, 2147483648
        %v1116 = vand.u32 %v1115, 65535
        %v1117 = vshra.s32 %v1115, 16
        %v1118 = vcvt.s32.f32 %v1116
        %v1119 = vcvt.s32.f32 %v1117
        %1120 = vmax.xlane.f32.xlu0 %v1119
        %v1121 = vpop.xlane.xlu0 %1120
        %vm1122 = vcmp.eq.f32.partialorder %v1119, %v1121
        %v1123 = vsel %vm1122, %v1118, -inf
        %1124 = vmax.xlane.f32.xlu0 %v1123
        %v1125 = vpop.xlane.xlu0 %1124
        %v1126 = vcvt.f32.s32 %v1125
        %v1127 = vcvt.f32.s32 %v1121
        %v1128 = vshll.u32 %v1127, 16
        %v1129 = vadd.s32 %v1128, %v1126
        %v1130 = vsel %vm954, %v1114, 2147483648
        %v1131 = vand.u32 %v1130, 65535
        %v1132 = vshra.s32 %v1130, 16
        %v1133 = vcvt.s32.f32 %v1131
        %v1134 = vcvt.s32.f32 %v1132
        %1135 = vmax.xlane.f32.xlu0 %v1134
        %v1136 = vpop.xlane.xlu0 %1135
        %vm1137 = vcmp.eq.f32.partialorder %v1134, %v1136
        %v1138 = vsel %vm1137, %v1133, -inf
        %1139 = vmax.xlane.f32.xlu0 %v1138
        %v1140 = vpop.xlane.xlu0 %1139
        %v1141 = vcvt.f32.s32 %v1140
        %v1142 = vcvt.f32.s32 %v1136
        %v1143 = vshll.u32 %v1142, 16
        %v1144 = vadd.s32 %v1143, %v1141
        %vm1145 = vcmp.eq.s32.totalorder %v1113, %v1129
        %vm1146 = vcmp.eq.s32.totalorder %v1114, %v1144
        %v1147 = vand.u32 %v1129, 4294967280
        %v1148 = vand.u32 %v1144, 4294967280
        %vm1149 = vcmp.lt.s32.totalorder %v1147, 0
        %vm1150 = vcmp.lt.s32.totalorder %v1148, 0
        %v1151 = vxor.u32 %v1147, 2147483647
        %v1152 = vxor.u32 %v1148, 2147483647
        %v1153 = vsel %vm1149, %v1151, %v1147
        %v1154 = vsel %vm1150, %v1152, %v1148
        %v1157 = vsub.f32 %v1153, %v993
        %v1158 = vsub.f32 %v1154, %v994
        %v1159 = vmul.f32 %v1157, 1.442695
        %v1160 = vpow.pop %v1159
        %v1161 = vmul.f32 %v1158, 1.442695
        %v1162 = vpow.pop %v1161
        %v1163 = vadd.f32 %v1107, %v1160
        %v1164 = vadd.f32 %v1108, %v1162
        %v1165 = vsel %vm1145, %v1160, 0.0
        %v1166 = vsel %vm1146, %v1162, 0.0
        %v1167 = vadd.f32 %v1111, %v1165
        %v1168 = vadd.f32 %v1112, %v1166
        %v1169 = vsel %vm1145, 2147483648, %v1113
        %v1170 = vsel %vm1146, 2147483648, %v1114
        %v1171 = vsel %vm954, %v1169, 2147483648
        %v1172 = vand.u32 %v1171, 65535
        %v1173 = vshra.s32 %v1171, 16
        %v1174 = vcvt.s32.f32 %v1172
        %v1175 = vcvt.s32.f32 %v1173
        %1176 = vmax.xlane.f32.xlu0 %v1175
        %v1177 = vpop.xlane.xlu0 %1176
        %vm1178 = vcmp.eq.f32.partialorder %v1175, %v1177
        %v1179 = vsel %vm1178, %v1174, -inf
        %1180 = vmax.xlane.f32.xlu0 %v1179
        %v1181 = vpop.xlane.xlu0 %1180
        %v1182 = vcvt.f32.s32 %v1181
        %v1183 = vcvt.f32.s32 %v1177
        %v1184 = vshll.u32 %v1183, 16
        %v1185 = vadd.s32 %v1184, %v1182
        %v1186 = vsel %vm954, %v1170, 2147483648
        %v1187 = vand.u32 %v1186, 65535
        %v1188 = vshra.s32 %v1186, 16
        %v1189 = vcvt.s32.f32 %v1187
        %v1190 = vcvt.s32.f32 %v1188
        %1191 = vmax.xlane.f32.xlu0 %v1190
        %v1192 = vpop.xlane.xlu0 %1191
        %vm1193 = vcmp.eq.f32.partialorder %v1190, %v1192
        %v1194 = vsel %vm1193, %v1189, -inf
        %1195 = vmax.xlane.f32.xlu0 %v1194
        %v1196 = vpop.xlane.xlu0 %1195
        %v1197 = vcvt.f32.s32 %v1196
        %v1198 = vcvt.f32.s32 %v1192
        %v1199 = vshll.u32 %v1198, 16
        %v1200 = vadd.s32 %v1199, %v1197
        %vm1201 = vcmp.eq.s32.totalorder %v1169, %v1185
        %vm1202 = vcmp.eq.s32.totalorder %v1170, %v1200
        %v1203 = vand.u32 %v1185, 4294967280
        %v1204 = vand.u32 %v1200, 4294967280
        %vm1205 = vcmp.lt.s32.totalorder %v1203, 0
        %vm1206 = vcmp.lt.s32.totalorder %v1204, 0
        %v1207 = vxor.u32 %v1203, 2147483647
        %v1208 = vxor.u32 %v1204, 2147483647
        %v1209 = vsel %vm1205, %v1207, %v1203
        %v1210 = vsel %vm1206, %v1208, %v1204
        %v1213 = vsub.f32 %v1209, %v993
        %v1214 = vsub.f32 %v1210, %v994
        %v1215 = vmul.f32 %v1213, 1.442695
        %v1216 = vpow.pop %v1215
        %v1217 = vmul.f32 %v1214, 1.442695
        %v1218 = vpow.pop %v1217
        %v1219 = vadd.f32 %v1163, %v1216
        %v1220 = vadd.f32 %v1164, %v1218
        %v1221 = vsel %vm1201, %v1216, 0.0
        %v1222 = vsel %vm1202, %v1218, 0.0
        %v1223 = vadd.f32 %v1167, %v1221
        %v1224 = vadd.f32 %v1168, %v1222
        %v1225 = vsel %vm1201, 2147483648, %v1169
        %v1226 = vsel %vm1202, 2147483648, %v1170
        %v1227 = vsel %vm954, %v1225, 2147483648
        %v1228 = vand.u32 %v1227, 65535
        %v1229 = vshra.s32 %v1227, 16
        %v1230 = vcvt.s32.f32 %v1228
        %v1231 = vcvt.s32.f32 %v1229
        %1232 = vmax.xlane.f32.xlu0 %v1231
        %v1233 = vpop.xlane.xlu0 %1232
        %vm1234 = vcmp.eq.f32.partialorder %v1231, %v1233
        %v1235 = vsel %vm1234, %v1230, -inf
        %1236 = vmax.xlane.f32.xlu0 %v1235
        %v1237 = vpop.xlane.xlu0 %1236
        %v1238 = vcvt.f32.s32 %v1237
        %v1239 = vcvt.f32.s32 %v1233
        %v1240 = vshll.u32 %v1239, 16
        %v1241 = vadd.s32 %v1240, %v1238
        %v1242 = vsel %vm954, %v1226, 2147483648
        %v1243 = vand.u32 %v1242, 65535
        %v1244 = vshra.s32 %v1242, 16
        %v1245 = vcvt.s32.f32 %v1243
        %v1246 = vcvt.s32.f32 %v1244
        %1247 = vmax.xlane.f32.xlu0 %v1246
        %v1248 = vpop.xlane.xlu0 %1247
        %vm1249 = vcmp.eq.f32.partialorder %v1246, %v1248
        %v1250 = vsel %vm1249, %v1245, -inf
        %1251 = vmax.xlane.f32.xlu0 %v1250
        %v1252 = vpop.xlane.xlu0 %1251
        %v1253 = vcvt.f32.s32 %v1252
        %v1254 = vcvt.f32.s32 %v1248
        %v1255 = vshll.u32 %v1254, 16
        %v1256 = vadd.s32 %v1255, %v1253
        %vm1257 = vcmp.eq.s32.totalorder %v1225, %v1241
        %vm1258 = vcmp.eq.s32.totalorder %v1226, %v1256
        %v1259 = vand.u32 %v1241, 4294967280
        %v1260 = vand.u32 %v1256, 4294967280
        %vm1261 = vcmp.lt.s32.totalorder %v1259, 0
        %vm1262 = vcmp.lt.s32.totalorder %v1260, 0
        %v1263 = vxor.u32 %v1259, 2147483647
        %v1264 = vxor.u32 %v1260, 2147483647
        %v1265 = vsel %vm1261, %v1263, %v1259
        %v1266 = vsel %vm1262, %v1264, %v1260
        %v1269 = vsub.f32 %v1265, %v993
        %v1270 = vsub.f32 %v1266, %v994
        %v1271 = vmul.f32 %v1269, 1.442695
        %v1272 = vpow.pop %v1271
        %v1273 = vmul.f32 %v1270, 1.442695
        %v1274 = vpow.pop %v1273
        %v1275 = vadd.f32 %v1219, %v1272
        %v1276 = vadd.f32 %v1220, %v1274
        %v1277 = vsel %vm1257, %v1272, 0.0
        %v1278 = vsel %vm1258, %v1274, 0.0
        %v1279 = vadd.f32 %v1223, %v1277
        %v1280 = vadd.f32 %v1224, %v1278
        %v1281 = vsel %vm1257, 2147483648, %v1225
        %v1282 = vsel %vm1258, 2147483648, %v1226
        %v1283 = vsel %vm954, %v1281, 2147483648
        %v1284 = vand.u32 %v1283, 65535
        %v1285 = vshra.s32 %v1283, 16
        %v1286 = vcvt.s32.f32 %v1284
        %v1287 = vcvt.s32.f32 %v1285
        %1288 = vmax.xlane.f32.xlu0 %v1287
        %v1289 = vpop.xlane.xlu0 %1288
        %vm1290 = vcmp.eq.f32.partialorder %v1287, %v1289
        %v1291 = vsel %vm1290, %v1286, -inf
        %1292 = vmax.xlane.f32.xlu0 %v1291
        %v1293 = vpop.xlane.xlu0 %1292
        %v1294 = vcvt.f32.s32 %v1293
        %v1295 = vcvt.f32.s32 %v1289
        %v1296 = vshll.u32 %v1295, 16
        %v1297 = vadd.s32 %v1296, %v1294
        %v1298 = vsel %vm954, %v1282, 2147483648
        %v1299 = vand.u32 %v1298, 65535
        %v1300 = vshra.s32 %v1298, 16
        %v1301 = vcvt.s32.f32 %v1299
        %v1302 = vcvt.s32.f32 %v1300
        %1303 = vmax.xlane.f32.xlu0 %v1302
        %v1304 = vpop.xlane.xlu0 %1303
        %vm1305 = vcmp.eq.f32.partialorder %v1302, %v1304
        %v1306 = vsel %vm1305, %v1301, -inf
        %1307 = vmax.xlane.f32.xlu0 %v1306
        %v1308 = vpop.xlane.xlu0 %1307
        %v1309 = vcvt.f32.s32 %v1308
        %v1310 = vcvt.f32.s32 %v1304
        %v1311 = vshll.u32 %v1310, 16
        %v1312 = vadd.s32 %v1311, %v1309
        %vm1313 = vcmp.eq.s32.totalorder %v1281, %v1297
        %vm1314 = vcmp.eq.s32.totalorder %v1282, %v1312
        %v1315 = vand.u32 %v1297, 4294967280
        %v1316 = vand.u32 %v1312, 4294967280
        %vm1317 = vcmp.lt.s32.totalorder %v1315, 0
        %vm1318 = vcmp.lt.s32.totalorder %v1316, 0
        %v1319 = vxor.u32 %v1315, 2147483647
        %v1320 = vxor.u32 %v1316, 2147483647
        %v1321 = vsel %vm1317, %v1319, %v1315
        %v1322 = vsel %vm1318, %v1320, %v1316
        %v1325 = vsub.f32 %v1321, %v993
        %v1326 = vsub.f32 %v1322, %v994
        %v1327 = vmul.f32 %v1325, 1.442695
        %v1328 = vpow.pop %v1327
        %v1329 = vmul.f32 %v1326, 1.442695
        %v1330 = vpow.pop %v1329
        %v1331 = vadd.f32 %v1275, %v1328
        %v1332 = vadd.f32 %v1276, %v1330
        %v1333 = vsel %vm1313, %v1328, 0.0
        %v1334 = vsel %vm1314, %v1330, 0.0
        %v1335 = vadd.f32 %v1279, %v1333
        %v1336 = vadd.f32 %v1280, %v1334
        %v1337 = vsel %vm1313, 2147483648, %v1281
        %v1338 = vsel %vm1314, 2147483648, %v1282
        %v1339 = vsel %vm954, %v1337, 2147483648
        %v1340 = vand.u32 %v1339, 65535
        %v1341 = vshra.s32 %v1339, 16
        %v1342 = vcvt.s32.f32 %v1340
        %v1343 = vcvt.s32.f32 %v1341
        %1344 = vmax.xlane.f32.xlu0 %v1343
        %v1345 = vpop.xlane.xlu0 %1344
        %vm1346 = vcmp.eq.f32.partialorder %v1343, %v1345
        %v1347 = vsel %vm1346, %v1342, -inf
        %1348 = vmax.xlane.f32.xlu0 %v1347
        %v1349 = vpop.xlane.xlu0 %1348
        %v1350 = vcvt.f32.s32 %v1349
        %v1351 = vcvt.f32.s32 %v1345
        %v1352 = vshll.u32 %v1351, 16
        %v1353 = vadd.s32 %v1352, %v1350
        %v1354 = vsel %vm954, %v1338, 2147483648
        %v1355 = vand.u32 %v1354, 65535
        %v1356 = vshra.s32 %v1354, 16
        %v1357 = vcvt.s32.f32 %v1355
        %v1358 = vcvt.s32.f32 %v1356
        %1359 = vmax.xlane.f32.xlu0 %v1358
        %v1360 = vpop.xlane.xlu0 %1359
        %vm1361 = vcmp.eq.f32.partialorder %v1358, %v1360
        %v1362 = vsel %vm1361, %v1357, -inf
        %1363 = vmax.xlane.f32.xlu0 %v1362
        %v1364 = vpop.xlane.xlu0 %1363
        %v1365 = vcvt.f32.s32 %v1364
        %v1366 = vcvt.f32.s32 %v1360
        %v1367 = vshll.u32 %v1366, 16
        %v1368 = vadd.s32 %v1367, %v1365
        %vm1369 = vcmp.eq.s32.totalorder %v1337, %v1353
        %vm1370 = vcmp.eq.s32.totalorder %v1338, %v1368
        %v1371 = vand.u32 %v1353, 4294967280
        %v1372 = vand.u32 %v1368, 4294967280
        %vm1373 = vcmp.lt.s32.totalorder %v1371, 0
        %vm1374 = vcmp.lt.s32.totalorder %v1372, 0
        %v1375 = vxor.u32 %v1371, 2147483647
        %v1376 = vxor.u32 %v1372, 2147483647
        %v1377 = vsel %vm1373, %v1375, %v1371
        %v1378 = vsel %vm1374, %v1376, %v1372
        %v1381 = vsub.f32 %v1377, %v993
        %v1382 = vsub.f32 %v1378, %v994
        %v1383 = vmul.f32 %v1381, 1.442695
        %v1384 = vpow.pop %v1383
        %v1385 = vmul.f32 %v1382, 1.442695
        %v1386 = vpow.pop %v1385
        %v1387 = vadd.f32 %v1331, %v1384
        %v1388 = vadd.f32 %v1332, %v1386
        %v1389 = vsel %vm1369, %v1384, 0.0
        %v1390 = vsel %vm1370, %v1386, 0.0
        %v1391 = vadd.f32 %v1335, %v1389
        %v1392 = vadd.f32 %v1336, %v1390
        %v1393 = vrcp.pop %v1387
        %v1394 = vrcp.pop %v1388
        %v1395 = vmul.f32 %v1387, %v1393
        %v1396 = vmul.f32 %v1388, %v1394
        %v1397 = vsub.f32 2.0, %v1395
        %v1398 = vsub.f32 2.0, %v1396
        %v1399 = vmul.f32 %v1393, %v1397
        %v1400 = vmul.f32 %v1394, %v1398
        %v1401 = vmul.f32 %v1391, %v1399
        %v1402 = vmul.f32 %v1392, %v1400
        %vm1403 = vcmask 7168
        %v1404 = vsel %vm1403, 1.0, %v1048
        %v1405 = vsel %vm1403, 1.0, %v1050
        %vm1406 = vcmask 15360
        %v1407 = vsel %vm1406, %v1404, %v1104
        %v1408 = vsel %vm1406, %v1405, %v1106
        %vm1409 = vcmask 23552
        %v1410 = vsel %vm1409, %v1407, %v1160
        %v1411 = vsel %vm1409, %v1408, %v1162
        %vm1412 = vcmask 31744
        %v1413 = vsel %vm1412, %v1410, %v1216
        %v1414 = vsel %vm1412, %v1411, %v1218
        %vm1415 = vcmask 39936
        %v1416 = vsel %vm1415, %v1413, %v1272
        %v1417 = vsel %vm1415, %v1414, %v1274
        %vm1418 = vcmask 48128
        %v1419 = vsel %vm1418, %v1416, %v1328
        %v1420 = vsel %vm1418, %v1417, %v1330
        %vm1421 = vcmask 56320
        %v1422 = vsel %vm1421, %v1419, %v1384
        %v1423 = vsel %vm1421, %v1420, %v1386
        %v1424 = vmul.f32 %v1422, %v1399
        %v1425 = vmul.f32 %v1423, %v1400
        %1426 = vst.msk [vmem:[%s588] sm:$0xff] %vm854, %v1424
        %1427 = vst.msk [vmem:[%s588 + $0x8] sm:$0xff] %vm854, %v1425
        %v1429 = vsel %vm954, %v1401, 0
        %v1432 = vsel %vm954, %v1402, 0
        %1434 = vmatprep.subr.mxu0 0.0
        %1435 = vmatpush1.msra.mxu0 %v843
        %1436 = vmatprep.subr.mxu0 0.0
        %1437 = vmatpush1.msra.mxu0 %v848
        %1438 = vmatprep.subr.mxu0 0.0
        %1439 = vmatpush1.msra.mxu0 0.0
        %1440 = vmatprep.subr.mxu0 0.0
        %1441 = vmatpush1.msra.mxu0 0.0
        %1442 = vmatprep.subr.mxu0 0.0
        %1443 = vmatpush1.msra.mxu0 0.0
        %1444 = vmatprep.subr.mxu0 0.0
        %1445 = vmatpush1.msra.mxu0 0.0
        %1446 = vmatprep.subr.mxu0 0.0
        %1447 = vmatpush1.msra.mxu0 0.0
        %1448 = vmatprep.subr.mxu0 0.0
        %1449 = vmatpush1.msra.mxu0 0.0
        %1450 = vmatprep.subr.mxu0 0.0
        %1451 = vmatpush1.msra.mxu0 0.0
        %1452 = vmatprep.subr.mxu0 0.0
        %1453 = vmatpush1.msra.mxu0 0.0
        %1454 = vmatprep.subr.mxu0 0.0
        %1455 = vmatpush1.msra.mxu0 0.0
        %1456 = vmatprep.subr.mxu0 0.0
        %1457 = vmatpush1.msra.mxu0 0.0
        %1458 = vmatprep.subr.mxu0 0.0
        %1459 = vmatpush1.msra.mxu0 0.0
        %1460 = vmatprep.subr.mxu0 0.0
        %1461 = vmatpush1.msra.mxu0 0.0
        %1462 = vmatprep.subr.mxu0 0.0
        %1463 = vmatpush1.msra.mxu0 0.0
        %1464 = vmatprep.subr.mxu0 0.0
        %1465 = vmatpush1.msra.mxu0 0.0
        %1466 = vmatprep.subr.mxu0 0.0
        %1467 = vmatpush1.msra.mxu0 0.0
        %1468 = vmatprep.subr.mxu0 0.0
        %1469 = vmatpush1.msra.mxu0 0.0
        %1470 = vmatprep.subr.mxu0 0.0
        %1471 = vmatpush1.msra.mxu0 0.0
        %1472 = vmatprep.subr.mxu0 0.0
        %1473 = vmatpush1.msra.mxu0 0.0
        %1474 = vmatprep.subr.mxu0 0.0
        %1475 = vmatpush1.msra.mxu0 0.0
        %1476 = vmatprep.subr.mxu0 0.0
        %1477 = vmatpush1.msra.mxu0 0.0
        %1478 = vmatprep.subr.mxu0 0.0
        %1479 = vmatpush1.msra.mxu0 0.0
        %1480 = vmatprep.subr.mxu0 0.0
        %1481 = vmatpush1.msra.mxu0 0.0
        %1482 = vmatprep.subr.mxu0 0.0
        %1483 = vmatpush1.msra.mxu0 0.0
        %1484 = vmatprep.subr.mxu0 0.0
        %1485 = vmatpush1.msra.mxu0 0.0
        %1486 = vmatprep.subr.mxu0 0.0
        %1487 = vmatpush1.msra.mxu0 0.0
        %1488 = vmatprep.subr.mxu0 0.0
        %1489 = vmatpush1.msra.mxu0 0.0
        %1490 = vmatprep.subr.mxu0 0.0
        %1491 = vmatpush1.msra.mxu0 0.0
        %1492 = vmatprep.subr.mxu0 0.0
        %1493 = vmatpush1.msra.mxu0 0.0
        %1494 = vmatprep.subr.mxu0 0.0
        %1495 = vmatpush1.msra.mxu0 0.0
        %1496 = vmatprep.subr.mxu0 0.0
        %1497 = vmatpush1.msra.mxu0 0.0
        %1498 = vmatprep.mubr.f32.mxu0 0.0
        %1499 = vmatmul.mubr.f32.gmra.mrb[0].mxu0 %v1429
        %v1500 = vpop.f32.mrb[0].mxu0
        %v1501 = vadd.f32 0.0, %v1500
        %v1502 = vpop.f32.mrb[0].mxu0
        %1503 = vmatprep.mubr.f32.mxu0 0.0
        %1504 = vmatmul.mubr.f32.gmra.mrb[0].mxu0 %v1432
        %v1505 = vpop.f32.mrb[0].mxu0
        %v1506 = vadd.f32 0.0, %v1505
        %v1507 = vpop.f32.mrb[0].mxu0
        %1508 = vdwg.mxu0
        %1509 = vrot.lane.b32.xlu0 %v673, 120
        %v1510 = vpop.permute.xlu0 %1509
        %1511 = vrot.lane.b32.xlu0 %v678, 120
        %v1512 = vpop.permute.xlu0 %1511
        %1513 = vrot.lane.b32.xlu0 %v758, 120
        %v1514 = vpop.permute.xlu0 %1513
        %1515 = vrot.lane.b32.xlu0 %v763, 120
        %v1516 = vpop.permute.xlu0 %1515
        %v1517 = vsel %vm854, %v1510, 0
        %v1519 = vsel %vm854, %v1512, 0
        %v1521 = vsel %vm854, %v1514, 0
        %v1523 = vsel %vm854, %v1516, 0
        %1525 = vmatprep.subr.mxu0 0.0
        %1526 = vmatpush1.xpose.msra.mxu0 %v1521
        %1527 = vmatprep.subr.mxu0 0.0
        %1528 = vmatpush1.xpose.msra.mxu0 %v1523
        %1529 = vmatprep.subr.mxu0 0.0
        %1530 = vmatpush1.xpose.msra.mxu0 0.0
        %1531 = vmatprep.subr.mxu0 0.0
        %1532 = vmatpush1.xpose.msra.mxu0 0.0
        %1533 = vmatprep.subr.mxu0 0.0
        %1534 = vmatpush1.xpose.msra.mxu0 0.0
        %1535 = vmatprep.subr.mxu0 0.0
        %1536 = vmatpush1.xpose.msra.mxu0 0.0
        %1537 = vmatprep.subr.mxu0 0.0
        %1538 = vmatpush1.xpose.msra.mxu0 0.0
        %1539 = vmatprep.subr.mxu0 0.0
        %1540 = vmatpush1.xpose.msra.mxu0 0.0
        %1541 = vmatprep.subr.mxu0 0.0
        %1542 = vmatpush1.xpose.msra.mxu0 0.0
        %1543 = vmatprep.subr.mxu0 0.0
        %1544 = vmatpush1.xpose.msra.mxu0 0.0
        %1545 = vmatprep.subr.mxu0 0.0
        %1546 = vmatpush1.xpose.msra.mxu0 0.0
        %1547 = vmatprep.subr.mxu0 0.0
        %1548 = vmatpush1.xpose.msra.mxu0 0.0
        %1549 = vmatprep.subr.mxu0 0.0
        %1550 = vmatpush1.xpose.msra.mxu0 0.0
        %1551 = vmatprep.subr.mxu0 0.0
        %1552 = vmatpush1.xpose.msra.mxu0 0.0
        %1553 = vmatprep.subr.mxu0 0.0
        %1554 = vmatpush1.xpose.msra.mxu0 0.0
        %1555 = vmatprep.subr.mxu0 0.0
        %1556 = vmatpush1.xpose.msra.mxu0 0.0
        %1557 = vmatprep.subr.mxu0 0.0
        %1558 = vmatpush1.xpose.msra.mxu0 0.0
        %1559 = vmatprep.subr.mxu0 0.0
        %1560 = vmatpush1.xpose.msra.mxu0 0.0
        %1561 = vmatprep.subr.mxu0 0.0
        %1562 = vmatpush1.xpose.msra.mxu0 0.0
        %1563 = vmatprep.subr.mxu0 0.0
        %1564 = vmatpush1.xpose.msra.mxu0 0.0
        %1565 = vmatprep.subr.mxu0 0.0
        %1566 = vmatpush1.xpose.msra.mxu0 0.0
        %1567 = vmatprep.subr.mxu0 0.0
        %1568 = vmatpush1.xpose.msra.mxu0 0.0
        %1569 = vmatprep.subr.mxu0 0.0
        %1570 = vmatpush1.xpose.msra.mxu0 0.0
        %1571 = vmatprep.subr.mxu0 0.0
        %1572 = vmatpush1.xpose.msra.mxu0 0.0
        %1573 = vmatprep.subr.mxu0 0.0
        %1574 = vmatpush1.xpose.msra.mxu0 0.0
        %1575 = vmatprep.subr.mxu0 0.0
        %1576 = vmatpush1.xpose.msra.mxu0 0.0
        %1577 = vmatprep.subr.mxu0 0.0
        %1578 = vmatpush1.xpose.msra.mxu0 0.0
        %1579 = vmatprep.subr.mxu0 0.0
        %1580 = vmatpush1.xpose.msra.mxu0 0.0
        %1581 = vmatprep.subr.mxu0 0.0
        %1582 = vmatpush1.xpose.msra.mxu0 0.0
        %1583 = vmatprep.subr.mxu0 0.0
        %1584 = vmatpush1.xpose.msra.mxu0 0.0
        %1585 = vmatprep.subr.mxu0 0.0
        %1586 = vmatpush1.xpose.msra.mxu0 0.0
        %1587 = vmatprep.subr.mxu0 0.0
        %1588 = vmatpush1.xpose.msra.mxu0 0.0
        %1589 = vmatprep.mubr.f32.mxu0 0.0
        %1590 = vmatmul.mubr.f32.gmra.mrb[0].mxu0 %v1517
        %v1591 = vpop.f32.mrb[0].mxu0
        %v1592 = vadd.f32 0.0, %v1591
        %v1593 = vpop.f32.mrb[0].mxu0
        %1594 = vmatprep.mubr.f32.mxu0 0.0
        %1595 = vmatmul.mubr.f32.gmra.mrb[0].mxu0 %v1519
        %v1596 = vpop.f32.mrb[0].mxu0
        %v1597 = vadd.f32 0.0, %v1596
        %v1598 = vpop.f32.mrb[0].mxu0
        %1599 = vdwg.mxu0
        %vm1602 = vcmp.lt.s32.totalorder %v1592, 0
        %vm1603 = vcmp.lt.s32.totalorder %v1597, 0
        %v1604 = vxor.u32 %v1592, 2147483647
        %v1605 = vxor.u32 %v1597, 2147483647
        %v1606 = vsel %vm1602, %v1604, %v1592
        %v1607 = vsel %vm1603, %v1605, %v1597
        %v1608 = vand.u32 %v1606, 4294967280
        %v1609 = vand.u32 %v1607, 4294967280
        %v1610 = vor.u32 %v1608, %v853
        %v1611 = vor.u32 %v1609, %v853
        %v1612 = vsel %vm954, %v1610, 2147483648
        %v1613 = vand.u32 %v1612, 65535
        %v1614 = vshra.s32 %v1612, 16
        %v1615 = vcvt.s32.f32 %v1613
        %v1616 = vcvt.s32.f32 %v1614
        %1617 = vmax.xlane.f32.xlu0 %v1616
        %v1618 = vpop.xlane.xlu0 %1617
        %vm1619 = vcmp.eq.f32.partialorder %v1616, %v1618
        %v1620 = vsel %vm1619, %v1615, -inf
        %1621 = vmax.xlane.f32.xlu0 %v1620
        %v1622 = vpop.xlane.xlu0 %1621
        %v1623 = vcvt.f32.s32 %v1622
        %v1624 = vcvt.f32.s32 %v1618
        %v1625 = vshll.u32 %v1624, 16
        %v1626 = vadd.s32 %v1625, %v1623
        %v1627 = vsel %vm954, %v1611, 2147483648
        %v1628 = vand.u32 %v1627, 65535
        %v1629 = vshra.s32 %v1627, 16
        %v1630 = vcvt.s32.f32 %v1628
        %v1631 = vcvt.s32.f32 %v1629
        %1632 = vmax.xlane.f32.xlu0 %v1631
        %v1633 = vpop.xlane.xlu0 %1632
        %vm1634 = vcmp.eq.f32.partialorder %v1631, %v1633
        %v1635 = vsel %vm1634, %v1630, -inf
        %1636 = vmax.xlane.f32.xlu0 %v1635
        %v1637 = vpop.xlane.xlu0 %1636
        %v1638 = vcvt.f32.s32 %v1637
        %v1639 = vcvt.f32.s32 %v1633
        %v1640 = vshll.u32 %v1639, 16
        %v1641 = vadd.s32 %v1640, %v1638
        %vm1642 = vcmp.eq.s32.totalorder %v1610, %v1626
        %vm1643 = vcmp.eq.s32.totalorder %v1611, %v1641
        %v1644 = vand.u32 %v1626, 4294967280
        %v1645 = vand.u32 %v1641, 4294967280
        %vm1646 = vcmp.lt.s32.totalorder %v1644, 0
        %vm1647 = vcmp.lt.s32.totalorder %v1645, 0
        %v1648 = vxor.u32 %v1644, 2147483647
        %v1649 = vxor.u32 %v1645, 2147483647
        %v1650 = vsel %vm1646, %v1648, %v1644
        %v1651 = vsel %vm1647, %v1649, %v1645
        %v1654 = vsel %vm1642, 1.0, 0.0
        %v1655 = vsel %vm1643, 1.0, 0.0
        %v1656 = vadd.f32 %v1654, 0.0
        %v1657 = vadd.f32 %v1655, 0.0
        %v1658 = vsel %vm1642, 2147483648, %v1610
        %v1659 = vsel %vm1643, 2147483648, %v1611
        %v1660 = vsel %vm954, %v1658, 2147483648
        %v1661 = vand.u32 %v1660, 65535
        %v1662 = vshra.s32 %v1660, 16
        %v1663 = vcvt.s32.f32 %v1661
        %v1664 = vcvt.s32.f32 %v1662
        %1665 = vmax.xlane.f32.xlu0 %v1664
        %v1666 = vpop.xlane.xlu0 %1665
        %vm1667 = vcmp.eq.f32.partialorder %v1664, %v1666
        %v1668 = vsel %vm1667, %v1663, -inf
        %1669 = vmax.xlane.f32.xlu0 %v1668
        %v1670 = vpop.xlane.xlu0 %1669
        %v1671 = vcvt.f32.s32 %v1670
        %v1672 = vcvt.f32.s32 %v1666
        %v1673 = vshll.u32 %v1672, 16
        %v1674 = vadd.s32 %v1673, %v1671
        %v1675 = vsel %vm954, %v1659, 2147483648
        %v1676 = vand.u32 %v1675, 65535
        %v1677 = vshra.s32 %v1675, 16
        %v1678 = vcvt.s32.f32 %v1676
        %v1679 = vcvt.s32.f32 %v1677
        %1680 = vmax.xlane.f32.xlu0 %v1679
        %v1681 = vpop.xlane.xlu0 %1680
        %vm1682 = vcmp.eq.f32.partialorder %v1679, %v1681
        %v1683 = vsel %vm1682, %v1678, -inf
        %1684 = vmax.xlane.f32.xlu0 %v1683
        %v1685 = vpop.xlane.xlu0 %1684
        %v1686 = vcvt.f32.s32 %v1685
        %v1687 = vcvt.f32.s32 %v1681
        %v1688 = vshll.u32 %v1687, 16
        %v1689 = vadd.s32 %v1688, %v1686
        %vm1690 = vcmp.eq.s32.totalorder %v1658, %v1674
        %vm1691 = vcmp.eq.s32.totalorder %v1659, %v1689
        %v1692 = vand.u32 %v1674, 4294967280
        %v1693 = vand.u32 %v1689, 4294967280
        %vm1694 = vcmp.lt.s32.totalorder %v1692, 0
        %vm1695 = vcmp.lt.s32.totalorder %v1693, 0
        %v1696 = vxor.u32 %v1692, 2147483647
        %v1697 = vxor.u32 %v1693, 2147483647
        %v1698 = vsel %vm1694, %v1696, %v1692
        %v1699 = vsel %vm1695, %v1697, %v1693
        %v1702 = vsub.f32 %v1698, %v1650
        %v1703 = vsub.f32 %v1699, %v1651
        %v1704 = vmul.f32 %v1702, 1.442695
        %v1705 = vpow.pop %v1704
        %v1706 = vmul.f32 %v1703, 1.442695
        %v1707 = vpow.pop %v1706
        %v1708 = vadd.f32 %v1705, 1.0
        %v1709 = vadd.f32 %v1707, 1.0
        %v1710 = vsel %vm1690, %v1705, 0.0
        %v1711 = vsel %vm1691, %v1707, 0.0
        %v1712 = vadd.f32 %v1656, %v1710
        %v1713 = vadd.f32 %v1657, %v1711
        %v1714 = vsel %vm1690, 2147483648, %v1658
        %v1715 = vsel %vm1691, 2147483648, %v1659
        %v1716 = vsel %vm954, %v1714, 2147483648
        %v1717 = vand.u32 %v1716, 65535
        %v1718 = vshra.s32 %v1716, 16
        %v1719 = vcvt.s32.f32 %v1717
        %v1720 = vcvt.s32.f32 %v1718
        %1721 = vmax.xlane.f32.xlu0 %v1720
        %v1722 = vpop.xlane.xlu0 %1721
        %vm1723 = vcmp.eq.f32.partialorder %v1720, %v1722
        %v1724 = vsel %vm1723, %v1719, -inf
        %1725 = vmax.xlane.f32.xlu0 %v1724
        %v1726 = vpop.xlane.xlu0 %1725
        %v1727 = vcvt.f32.s32 %v1726
        %v1728 = vcvt.f32.s32 %v1722
        %v1729 = vshll.u32 %v1728, 16
        %v1730 = vadd.s32 %v1729, %v1727
        %v1731 = vsel %vm954, %v1715, 2147483648
        %v1732 = vand.u32 %v1731, 65535
        %v1733 = vshra.s32 %v1731, 16
        %v1734 = vcvt.s32.f32 %v1732
        %v1735 = vcvt.s32.f32 %v1733
        %1736 = vmax.xlane.f32.xlu0 %v1735
        %v1737 = vpop.xlane.xlu0 %1736
        %vm1738 = vcmp.eq.f32.partialorder %v1735, %v1737
        %v1739 = vsel %vm1738, %v1734, -inf
        %1740 = vmax.xlane.f32.xlu0 %v1739
        %v1741 = vpop.xlane.xlu0 %1740
        %v1742 = vcvt.f32.s32 %v1741
        %v1743 = vcvt.f32.s32 %v1737
        %v1744 = vshll.u32 %v1743, 16
        %v1745 = vadd.s32 %v1744, %v1742
        %vm1746 = vcmp.eq.s32.totalorder %v1714, %v1730
        %vm1747 = vcmp.eq.s32.totalorder %v1715, %v1745
        %v1748 = vand.u32 %v1730, 4294967280
        %v1749 = vand.u32 %v1745, 4294967280
        %vm1750 = vcmp.lt.s32.totalorder %v1748, 0
        %vm1751 = vcmp.lt.s32.totalorder %v1749, 0
        %v1752 = vxor.u32 %v1748, 2147483647
        %v1753 = vxor.u32 %v1749, 2147483647
        %v1754 = vsel %vm1750, %v1752, %v1748
        %v1755 = vsel %vm1751, %v1753, %v1749
        %v1758 = vsub.f32 %v1754, %v1650
        %v1759 = vsub.f32 %v1755, %v1651
        %v1760 = vmul.f32 %v1758, 1.442695
        %v1761 = vpow.pop %v1760
        %v1762 = vmul.f32 %v1759, 1.442695
        %v1763 = vpow.pop %v1762
        %v1764 = vadd.f32 %v1708, %v1761
        %v1765 = vadd.f32 %v1709, %v1763
        %v1766 = vsel %vm1746, %v1761, 0.0
        %v1767 = vsel %vm1747, %v1763, 0.0
        %v1768 = vadd.f32 %v1712, %v1766
        %v1769 = vadd.f32 %v1713, %v1767
        %v1770 = vsel %vm1746, 2147483648, %v1714
        %v1771 = vsel %vm1747, 2147483648, %v1715
        %v1772 = vsel %vm954, %v1770, 2147483648
        %v1773 = vand.u32 %v1772, 65535
        %v1774 = vshra.s32 %v1772, 16
        %v1775 = vcvt.s32.f32 %v1773
        %v1776 = vcvt.s32.f32 %v1774
        %1777 = vmax.xlane.f32.xlu0 %v1776
        %v1778 = vpop.xlane.xlu0 %1777
        %vm1779 = vcmp.eq.f32.partialorder %v1776, %v1778
        %v1780 = vsel %vm1779, %v1775, -inf
        %1781 = vmax.xlane.f32.xlu0 %v1780
        %v1782 = vpop.xlane.xlu0 %1781
        %v1783 = vcvt.f32.s32 %v1782
        %v1784 = vcvt.f32.s32 %v1778
        %v1785 = vshll.u32 %v1784, 16
        %v1786 = vadd.s32 %v1785, %v1783
        %v1787 = vsel %vm954, %v1771, 2147483648
        %v1788 = vand.u32 %v1787, 65535
        %v1789 = vshra.s32 %v1787, 16
        %v1790 = vcvt.s32.f32 %v1788
        %v1791 = vcvt.s32.f32 %v1789
        %1792 = vmax.xlane.f32.xlu0 %v1791
        %v1793 = vpop.xlane.xlu0 %1792
        %vm1794 = vcmp.eq.f32.partialorder %v1791, %v1793
        %v1795 = vsel %vm1794, %v1790, -inf
        %1796 = vmax.xlane.f32.xlu0 %v1795
        %v1797 = vpop.xlane.xlu0 %1796
        %v1798 = vcvt.f32.s32 %v1797
        %v1799 = vcvt.f32.s32 %v1793
        %v1800 = vshll.u32 %v1799, 16
        %v1801 = vadd.s32 %v1800, %v1798
        %vm1802 = vcmp.eq.s32.totalorder %v1770, %v1786
        %vm1803 = vcmp.eq.s32.totalorder %v1771, %v1801
        %v1804 = vand.u32 %v1786, 4294967280
        %v1805 = vand.u32 %v1801, 4294967280
        %vm1806 = vcmp.lt.s32.totalorder %v1804, 0
        %vm1807 = vcmp.lt.s32.totalorder %v1805, 0
        %v1808 = vxor.u32 %v1804, 2147483647
        %v1809 = vxor.u32 %v1805, 2147483647
        %v1810 = vsel %vm1806, %v1808, %v1804
        %v1811 = vsel %vm1807, %v1809, %v1805
        %v1814 = vsub.f32 %v1810, %v1650
        %v1815 = vsub.f32 %v1811, %v1651
        %v1816 = vmul.f32 %v1814, 1.442695
        %v1817 = vpow.pop %v1816
        %v1818 = vmul.f32 %v1815, 1.442695
        %v1819 = vpow.pop %v1818
        %v1820 = vadd.f32 %v1764, %v1817
        %v1821 = vadd.f32 %v1765, %v1819
        %v1822 = vsel %vm1802, %v1817, 0.0
        %v1823 = vsel %vm1803, %v1819, 0.0
        %v1824 = vadd.f32 %v1768, %v1822
        %v1825 = vadd.f32 %v1769, %v1823
        %v1826 = vsel %vm1802, 2147483648, %v1770
        %v1827 = vsel %vm1803, 2147483648, %v1771
        %v1828 = vsel %vm954, %v1826, 2147483648
        %v1829 = vand.u32 %v1828, 65535
        %v1830 = vshra.s32 %v1828, 16
        %v1831 = vcvt.s32.f32 %v1829
        %v1832 = vcvt.s32.f32 %v1830
        %1833 = vmax.xlane.f32.xlu0 %v1832
        %v1834 = vpop.xlane.xlu0 %1833
        %vm1835 = vcmp.eq.f32.partialorder %v1832, %v1834
        %v1836 = vsel %vm1835, %v1831, -inf
        %1837 = vmax.xlane.f32.xlu0 %v1836
        %v1838 = vpop.xlane.xlu0 %1837
        %v1839 = vcvt.f32.s32 %v1838
        %v1840 = vcvt.f32.s32 %v1834
        %v1841 = vshll.u32 %v1840, 16
        %v1842 = vadd.s32 %v1841, %v1839
        %v1843 = vsel %vm954, %v1827, 2147483648
        %v1844 = vand.u32 %v1843, 65535
        %v1845 = vshra.s32 %v1843, 16
        %v1846 = vcvt.s32.f32 %v1844
        %v1847 = vcvt.s32.f32 %v1845
        %1848 = vmax.xlane.f32.xlu0 %v1847
        %v1849 = vpop.xlane.xlu0 %1848
        %vm1850 = vcmp.eq.f32.partialorder %v1847, %v1849
        %v1851 = vsel %vm1850, %v1846, -inf
        %1852 = vmax.xlane.f32.xlu0 %v1851
        %v1853 = vpop.xlane.xlu0 %1852
        %v1854 = vcvt.f32.s32 %v1853
        %v1855 = vcvt.f32.s32 %v1849
        %v1856 = vshll.u32 %v1855, 16
        %v1857 = vadd.s32 %v1856, %v1854
        %vm1858 = vcmp.eq.s32.totalorder %v1826, %v1842
        %vm1859 = vcmp.eq.s32.totalorder %v1827, %v1857
        %v1860 = vand.u32 %v1842, 4294967280
        %v1861 = vand.u32 %v1857, 4294967280
        %vm1862 = vcmp.lt.s32.totalorder %v1860, 0
        %vm1863 = vcmp.lt.s32.totalorder %v1861, 0
        %v1864 = vxor.u32 %v1860, 2147483647
        %v1865 = vxor.u32 %v1861, 2147483647
        %v1866 = vsel %vm1862, %v1864, %v1860
        %v1867 = vsel %vm1863, %v1865, %v1861
        %v1870 = vsub.f32 %v1866, %v1650
        %v1871 = vsub.f32 %v1867, %v1651
        %v1872 = vmul.f32 %v1870, 1.442695
        %v1873 = vpow.pop %v1872
        %v1874 = vmul.f32 %v1871, 1.442695
        %v1875 = vpow.pop %v1874
        %v1876 = vadd.f32 %v1820, %v1873
        %v1877 = vadd.f32 %v1821, %v1875
        %v1878 = vsel %vm1858, %v1873, 0.0
        %v1879 = vsel %vm1859, %v1875, 0.0
        %v1880 = vadd.f32 %v1824, %v1878
        %v1881 = vadd.f32 %v1825, %v1879
        %v1882 = vsel %vm1858, 2147483648, %v1826
        %v1883 = vsel %vm1859, 2147483648, %v1827
        %v1884 = vsel %vm954, %v1882, 2147483648
        %v1885 = vand.u32 %v1884, 65535
        %v1886 = vshra.s32 %v1884, 16
        %v1887 = vcvt.s32.f32 %v1885
        %v1888 = vcvt.s32.f32 %v1886
        %1889 = vmax.xlane.f32.xlu0 %v1888
        %v1890 = vpop.xlane.xlu0 %1889
        %vm1891 = vcmp.eq.f32.partialorder %v1888, %v1890
        %v1892 = vsel %vm1891, %v1887, -inf
        %1893 = vmax.xlane.f32.xlu0 %v1892
        %v1894 = vpop.xlane.xlu0 %1893
        %v1895 = vcvt.f32.s32 %v1894
        %v1896 = vcvt.f32.s32 %v1890
        %v1897 = vshll.u32 %v1896, 16
        %v1898 = vadd.s32 %v1897, %v1895
        %v1899 = vsel %vm954, %v1883, 2147483648
        %v1900 = vand.u32 %v1899, 65535
        %v1901 = vshra.s32 %v1899, 16
        %v1902 = vcvt.s32.f32 %v1900
        %v1903 = vcvt.s32.f32 %v1901
        %1904 = vmax.xlane.f32.xlu0 %v1903
        %v1905 = vpop.xlane.xlu0 %1904
        %vm1906 = vcmp.eq.f32.partialorder %v1903, %v1905
        %v1907 = vsel %vm1906, %v1902, -inf
        %1908 = vmax.xlane.f32.xlu0 %v1907
        %v1909 = vpop.xlane.xlu0 %1908
        %v1910 = vcvt.f32.s32 %v1909
        %v1911 = vcvt.f32.s32 %v1905
        %v1912 = vshll.u32 %v1911, 16
        %v1913 = vadd.s32 %v1912, %v1910
        %vm1914 = vcmp.eq.s32.totalorder %v1882, %v1898
        %vm1915 = vcmp.eq.s32.totalorder %v1883, %v1913
        %v1916 = vand.u32 %v1898, 4294967280
        %v1917 = vand.u32 %v1913, 4294967280
        %vm1918 = vcmp.lt.s32.totalorder %v1916, 0
        %vm1919 = vcmp.lt.s32.totalorder %v1917, 0
        %v1920 = vxor.u32 %v1916, 2147483647
        %v1921 = vxor.u32 %v1917, 2147483647
        %v1922 = vsel %vm1918, %v1920, %v1916
        %v1923 = vsel %vm1919, %v1921, %v1917
        %v1926 = vsub.f32 %v1922, %v1650
        %v1927 = vsub.f32 %v1923, %v1651
        %v1928 = vmul.f32 %v1926, 1.442695
        %v1929 = vpow.pop %v1928
        %v1930 = vmul.f32 %v1927, 1.442695
        %v1931 = vpow.pop %v1930
        %v1932 = vadd.f32 %v1876, %v1929
        %v1933 = vadd.f32 %v1877, %v1931
        %v1934 = vsel %vm1914, %v1929, 0.0
        %v1935 = vsel %vm1915, %v1931, 0.0
        %v1936 = vadd.f32 %v1880, %v1934
        %v1937 = vadd.f32 %v1881, %v1935
        %v1938 = vsel %vm1914, 2147483648, %v1882
        %v1939 = vsel %vm1915, 2147483648, %v1883
        %v1940 = vsel %vm954, %v1938, 2147483648
        %v1941 = vand.u32 %v1940, 65535
        %v1942 = vshra.s32 %v1940, 16
        %v1943 = vcvt.s32.f32 %v1941
        %v1944 = vcvt.s32.f32 %v1942
        %1945 = vmax.xlane.f32.xlu0 %v1944
        %v1946 = vpop.xlane.xlu0 %1945
        %vm1947 = vcmp.eq.f32.partialorder %v1944, %v1946
        %v1948 = vsel %vm1947, %v1943, -inf
        %1949 = vmax.xlane.f32.xlu0 %v1948
        %v1950 = vpop.xlane.xlu0 %1949
        %v1951 = vcvt.f32.s32 %v1950
        %v1952 = vcvt.f32.s32 %v1946
        %v1953 = vshll.u32 %v1952, 16
        %v1954 = vadd.s32 %v1953, %v1951
        %v1955 = vsel %vm954, %v1939, 2147483648
        %v1956 = vand.u32 %v1955, 65535
        %v1957 = vshra.s32 %v1955, 16
        %v1958 = vcvt.s32.f32 %v1956
        %v1959 = vcvt.s32.f32 %v1957
        %1960 = vmax.xlane.f32.xlu0 %v1959
        %v1961 = vpop.xlane.xlu0 %1960
        %vm1962 = vcmp.eq.f32.partialorder %v1959, %v1961
        %v1963 = vsel %vm1962, %v1958, -inf
        %1964 = vmax.xlane.f32.xlu0 %v1963
        %v1965 = vpop.xlane.xlu0 %1964
        %v1966 = vcvt.f32.s32 %v1965
        %v1967 = vcvt.f32.s32 %v1961
        %v1968 = vshll.u32 %v1967, 16
        %v1969 = vadd.s32 %v1968, %v1966
        %vm1970 = vcmp.eq.s32.totalorder %v1938, %v1954
        %vm1971 = vcmp.eq.s32.totalorder %v1939, %v1969
        %v1972 = vand.u32 %v1954, 4294967280
        %v1973 = vand.u32 %v1969, 4294967280
        %vm1974 = vcmp.lt.s32.totalorder %v1972, 0
        %vm1975 = vcmp.lt.s32.totalorder %v1973, 0
        %v1976 = vxor.u32 %v1972, 2147483647
        %v1977 = vxor.u32 %v1973, 2147483647
        %v1978 = vsel %vm1974, %v1976, %v1972
        %v1979 = vsel %vm1975, %v1977, %v1973
        %v1982 = vsub.f32 %v1978, %v1650
        %v1983 = vsub.f32 %v1979, %v1651
        %v1984 = vmul.f32 %v1982, 1.442695
        %v1985 = vpow.pop %v1984
        %v1986 = vmul.f32 %v1983, 1.442695
        %v1987 = vpow.pop %v1986
        %v1988 = vadd.f32 %v1932, %v1985
        %v1989 = vadd.f32 %v1933, %v1987
        %v1990 = vsel %vm1970, %v1985, 0.0
        %v1991 = vsel %vm1971, %v1987, 0.0
        %v1992 = vadd.f32 %v1936, %v1990
        %v1993 = vadd.f32 %v1937, %v1991
        %v1994 = vsel %vm1970, 2147483648, %v1938
        %v1995 = vsel %vm1971, 2147483648, %v1939
        %v1996 = vsel %vm954, %v1994, 2147483648
        %v1997 = vand.u32 %v1996, 65535
        %v1998 = vshra.s32 %v1996, 16
        %v1999 = vcvt.s32.f32 %v1997
        %v2000 = vcvt.s32.f32 %v1998
        %2001 = vmax.xlane.f32.xlu0 %v2000
        %v2002 = vpop.xlane.xlu0 %2001
        %vm2003 = vcmp.eq.f32.partialorder %v2000, %v2002
        %v2004 = vsel %vm2003, %v1999, -inf
        %2005 = vmax.xlane.f32.xlu0 %v2004
        %v2006 = vpop.xlane.xlu0 %2005
        %v2007 = vcvt.f32.s32 %v2006
        %v2008 = vcvt.f32.s32 %v2002
        %v2009 = vshll.u32 %v2008, 16
        %v2010 = vadd.s32 %v2009, %v2007
        %v2011 = vsel %vm954, %v1995, 2147483648
        %v2012 = vand.u32 %v2011, 65535
        %v2013 = vshra.s32 %v2011, 16
        %v2014 = vcvt.s32.f32 %v2012
        %v2015 = vcvt.s32.f32 %v2013
        %2016 = vmax.xlane.f32.xlu0 %v2015
        %v2017 = vpop.xlane.xlu0 %2016
        %vm2018 = vcmp.eq.f32.partialorder %v2015, %v2017
        %v2019 = vsel %vm2018, %v2014, -inf
        %2020 = vmax.xlane.f32.xlu0 %v2019
        %v2021 = vpop.xlane.xlu0 %2020
        %v2022 = vcvt.f32.s32 %v2021
        %v2023 = vcvt.f32.s32 %v2017
        %v2024 = vshll.u32 %v2023, 16
        %v2025 = vadd.s32 %v2024, %v2022
        %vm2026 = vcmp.eq.s32.totalorder %v1994, %v2010
        %vm2027 = vcmp.eq.s32.totalorder %v1995, %v2025
        %v2028 = vand.u32 %v2010, 4294967280
        %v2029 = vand.u32 %v2025, 4294967280
        %vm2030 = vcmp.lt.s32.totalorder %v2028, 0
        %vm2031 = vcmp.lt.s32.totalorder %v2029, 0
        %v2032 = vxor.u32 %v2028, 2147483647
        %v2033 = vxor.u32 %v2029, 2147483647
        %v2034 = vsel %vm2030, %v2032, %v2028
        %v2035 = vsel %vm2031, %v2033, %v2029
        %v2038 = vsub.f32 %v2034, %v1650
        %v2039 = vsub.f32 %v2035, %v1651
        %v2040 = vmul.f32 %v2038, 1.442695
        %v2041 = vpow.pop %v2040
        %v2042 = vmul.f32 %v2039, 1.442695
        %v2043 = vpow.pop %v2042
        %v2044 = vadd.f32 %v1988, %v2041
        %v2045 = vadd.f32 %v1989, %v2043
        %v2046 = vsel %vm2026, %v2041, 0.0
        %v2047 = vsel %vm2027, %v2043, 0.0
        %v2048 = vadd.f32 %v1992, %v2046
        %v2049 = vadd.f32 %v1993, %v2047
        %v2050 = vrcp.pop %v2044
        %v2051 = vrcp.pop %v2045
        %v2052 = vmul.f32 %v2044, %v2050
        %v2053 = vmul.f32 %v2045, %v2051
        %v2054 = vsub.f32 2.0, %v2052
        %v2055 = vsub.f32 2.0, %v2053
        %v2056 = vmul.f32 %v2050, %v2054
        %v2057 = vmul.f32 %v2051, %v2055
        %v2058 = vmul.f32 %v2048, %v2056
        %v2059 = vmul.f32 %v2049, %v2057
        %v2060 = vsel %vm1403, 1.0, %v1705
        %v2061 = vsel %vm1403, 1.0, %v1707
        %v2062 = vsel %vm1406, %v2060, %v1761
        %v2063 = vsel %vm1406, %v2061, %v1763
        %v2064 = vsel %vm1409, %v2062, %v1817
        %v2065 = vsel %vm1409, %v2063, %v1819
        %v2066 = vsel %vm1412, %v2064, %v1873
        %v2067 = vsel %vm1412, %v2065, %v1875
        %v2068 = vsel %vm1415, %v2066, %v1929
        %v2069 = vsel %vm1415, %v2067, %v1931
        %v2070 = vsel %vm1418, %v2068, %v1985
        %v2071 = vsel %vm1418, %v2069, %v1987
        %v2072 = vsel %vm1421, %v2070, %v2041
        %v2073 = vsel %vm1421, %v2071, %v2043
        %v2074 = vmul.f32 %v2072, %v2056
        %v2075 = vmul.f32 %v2073, %v2057
        %s2076 = scalar_lea.vmem %s588, 16 [#allocation20]
        %2077 = vst.msk [vmem:[%s2076] sm:$0xff] %vm854, %v2074
        %2078 = vst.msk [vmem:[%s2076 + $0x8] sm:$0xff] %vm854, %v2075
        %2081 = vrot.lane.b32.xlu0 %v843, 120
        %v2082 = vpop.permute.xlu0 %2081
        %2083 = vrot.lane.b32.xlu0 %v848, 120
        %v2084 = vpop.permute.xlu0 %2083
        %v2088 = vsel %vm954, %v2058, 0
        %v2091 = vsel %vm954, %v2059, 0
        %2093 = vmatprep.subr.mxu0 0.0
        %2094 = vmatpush1.msra.mxu0 %v2082
        %2095 = vmatprep.subr.mxu0 0.0
        %2096 = vmatpush1.msra.mxu0 %v2084
        %2097 = vmatprep.subr.mxu0 0.0
        %2098 = vmatpush1.msra.mxu0 0.0
        %2099 = vmatprep.subr.mxu0 0.0
        %2100 = vmatpush1.msra.mxu0 0.0
        %2101 = vmatprep.subr.mxu0 0.0
        %2102 = vmatpush1.msra.mxu0 0.0
        %2103 = vmatprep.subr.mxu0 0.0
        %2104 = vmatpush1.msra.mxu0 0.0
        %2105 = vmatprep.subr.mxu0 0.0
        %2106 = vmatpush1.msra.mxu0 0.0
        %2107 = vmatprep.subr.mxu0 0.0
        %2108 = vmatpush1.msra.mxu0 0.0
        %2109 = vmatprep.subr.mxu0 0.0
        %2110 = vmatpush1.msra.mxu0 0.0
        %2111 = vmatprep.subr.mxu0 0.0
        %2112 = vmatpush1.msra.mxu0 0.0
        %2113 = vmatprep.subr.mxu0 0.0
        %2114 = vmatpush1.msra.mxu0 0.0
        %2115 = vmatprep.subr.mxu0 0.0
        %2116 = vmatpush1.msra.mxu0 0.0
        %2117 = vmatprep.subr.mxu0 0.0
        %2118 = vmatpush1.msra.mxu0 0.0
        %2119 = vmatprep.subr.mxu0 0.0
        %2120 = vmatpush1.msra.mxu0 0.0
        %2121 = vmatprep.subr.mxu0 0.0
        %2122 = vmatpush1.msra.mxu0 0.0
        %2123 = vmatprep.subr.mxu0 0.0
        %2124 = vmatpush1.msra.mxu0 0.0
        %2125 = vmatprep.subr.mxu0 0.0
        %2126 = vmatpush1.msra.mxu0 0.0
        %2127 = vmatprep.subr.mxu0 0.0
        %2128 = vmatpush1.msra.mxu0 0.0
        %2129 = vmatprep.subr.mxu0 0.0
        %2130 = vmatpush1.msra.mxu0 0.0
        %2131 = vmatprep.subr.mxu0 0.0
        %2132 = vmatpush1.msra.mxu0 0.0
        %2133 = vmatprep.subr.mxu0 0.0
        %2134 = vmatpush1.msra.mxu0 0.0
        %2135 = vmatprep.subr.mxu0 0.0
        %2136 = vmatpush1.msra.mxu0 0.0
        %2137 = vmatprep.subr.mxu0 0.0
        %2138 = vmatpush1.msra.mxu0 0.0
        %2139 = vmatprep.subr.mxu0 0.0
        %2140 = vmatpush1.msra.mxu0 0.0
        %2141 = vmatprep.subr.mxu0 0.0
        %2142 = vmatpush1.msra.mxu0 0.0
        %2143 = vmatprep.subr.mxu0 0.0
        %2144 = vmatpush1.msra.mxu0 0.0
        %2145 = vmatprep.subr.mxu0 0.0
        %2146 = vmatpush1.msra.mxu0 0.0
        %2147 = vmatprep.subr.mxu0 0.0
        %2148 = vmatpush1.msra.mxu0 0.0
        %2149 = vmatprep.subr.mxu0 0.0
        %2150 = vmatpush1.msra.mxu0 0.0
        %2151 = vmatprep.subr.mxu0 0.0
        %2152 = vmatpush1.msra.mxu0 0.0
        %2153 = vmatprep.subr.mxu0 0.0
        %2154 = vmatpush1.msra.mxu0 0.0
        %2155 = vmatprep.subr.mxu0 0.0
        %2156 = vmatpush1.msra.mxu0 0.0
        %2157 = vmatprep.mubr.f32.mxu0 0.0
        %2158 = vmatmul.mubr.f32.gmra.mrb[0].mxu0 %v2088
        %v2159 = vpop.f32.mrb[0].mxu0
        %v2160 = vadd.f32 0.0, %v2159
        %v2161 = vpop.f32.mrb[0].mxu0
        %2162 = vmatprep.mubr.f32.mxu0 0.0
        %2163 = vmatmul.mubr.f32.gmra.mrb[0].mxu0 %v2091
        %v2164 = vpop.f32.mrb[0].mxu0
        %v2165 = vadd.f32 0.0, %v2164
        %v2166 = vpop.f32.mrb[0].mxu0
        %2167 = vdwg.mxu0
        %2168 = vrot.lane.b32.xlu0 %v673, 112
        %v2169 = vpop.permute.xlu0 %2168
        %2170 = vrot.lane.b32.xlu0 %v678, 112
        %v2171 = vpop.permute.xlu0 %2170
        %2172 = vrot.lane.b32.xlu0 %v758, 112
        %v2173 = vpop.permute.xlu0 %2172
        %2174 = vrot.lane.b32.xlu0 %v763, 112
        %v2175 = vpop.permute.xlu0 %2174
        %v2176 = vsel %vm854, %v2169, 0
        %v2178 = vsel %vm854, %v2171, 0
        %v2180 = vsel %vm854, %v2173, 0
        %v2182 = vsel %vm854, %v2175, 0
        %2184 = vmatprep.subr.mxu0 0.0
        %2185 = vmatpush1.xpose.msra.mxu0 %v2180
        %2186 = vmatprep.subr.mxu0 0.0
        %2187 = vmatpush1.xpose.msra.mxu0 %v2182
        %2188 = vmatprep.subr.mxu0 0.0
        %2189 = vmatpush1.xpose.msra.mxu0 0.0
        %2190 = vmatprep.subr.mxu0 0.0
        %2191 = vmatpush1.xpose.msra.mxu0 0.0
        %2192 = vmatprep.subr.mxu0 0.0
        %2193 = vmatpush1.xpose.msra.mxu0 0.0
        %2194 = vmatprep.subr.mxu0 0.0
        %2195 = vmatpush1.xpose.msra.mxu0 0.0
        %2196 = vmatprep.subr.mxu0 0.0
        %2197 = vmatpush1.xpose.msra.mxu0 0.0
        %2198 = vmatprep.subr.mxu0 0.0
        %2199 = vmatpush1.xpose.msra.mxu0 0.0
        %2200 = vmatprep.subr.mxu0 0.0
        %2201 = vmatpush1.xpose.msra.mxu0 0.0
        %2202 = vmatprep.subr.mxu0 0.0
        %2203 = vmatpush1.xpose.msra.mxu0 0.0
        %2204 = vmatprep.subr.mxu0 0.0
        %2205 = vmatpush1.xpose.msra.mxu0 0.0
        %2206 = vmatprep.subr.mxu0 0.0
        %2207 = vmatpush1.xpose.msra.mxu0 0.0
        %2208 = vmatprep.subr.mxu0 0.0
        %2209 = vmatpush1.xpose.msra.mxu0 0.0
        %2210 = vmatprep.subr.mxu0 0.0
        %2211 = vmatpush1.xpose.msra.mxu0 0.0
        %2212 = vmatprep.subr.mxu0 0.0
        %2213 = vmatpush1.xpose.msra.mxu0 0.0
        %2214 = vmatprep.subr.mxu0 0.0
        %2215 = vmatpush1.xpose.msra.mxu0 0.0
        %2216 = vmatprep.subr.mxu0 0.0
        %2217 = vmatpush1.xpose.msra.mxu0 0.0
        %2218 = vmatprep.subr.mxu0 0.0
        %2219 = vmatpush1.xpose.msra.mxu0 0.0
        %2220 = vmatprep.subr.mxu0 0.0
        %2221 = vmatpush1.xpose.msra.mxu0 0.0
        %2222 = vmatprep.subr.mxu0 0.0
        %2223 = vmatpush1.xpose.msra.mxu0 0.0
        %2224 = vmatprep.subr.mxu0 0.0
        %2225 = vmatpush1.xpose.msra.mxu0 0.0
        %2226 = vmatprep.subr.mxu0 0.0
        %2227 = vmatpush1.xpose.msra.mxu0 0.0
        %2228 = vmatprep.subr.mxu0 0.0
        %2229 = vmatpush1.xpose.msra.mxu0 0.0
        %2230 = vmatprep.subr.mxu0 0.0
        %2231 = vmatpush1.xpose.msra.mxu0 0.0
        %2232 = vmatprep.subr.mxu0 0.0
        %2233 = vmatpush1.xpose.msra.mxu0 0.0
        %2234 = vmatprep.subr.mxu0 0.0
        %2235 = vmatpush1.xpose.msra.mxu0 0.0
        %2236 = vmatprep.subr.mxu0 0.0
        %2237 = vmatpush1.xpose.msra.mxu0 0.0
        %2238 = vmatprep.subr.mxu0 0.0
        %2239 = vmatpush1.xpose.msra.mxu0 0.0
        %2240 = vmatprep.subr.mxu0 0.0
        %2241 = vmatpush1.xpose.msra.mxu0 0.0
        %2242 = vmatprep.subr.mxu0 0.0
        %2243 = vmatpush1.xpose.msra.mxu0 0.0
        %2244 = vmatprep.subr.mxu0 0.0
        %2245 = vmatpush1.xpose.msra.mxu0 0.0
        %2246 = vmatprep.subr.mxu0 0.0
        %2247 = vmatpush1.xpose.msra.mxu0 0.0
        %2248 = vmatprep.mubr.f32.mxu0 0.0
        %2249 = vmatmul.mubr.f32.gmra.mrb[0].mxu0 %v2176
        %v2250 = vpop.f32.mrb[0].mxu0
        %v2251 = vadd.f32 0.0, %v2250
        %v2252 = vpop.f32.mrb[0].mxu0
        %2253 = vmatprep.mubr.f32.mxu0 0.0
        %2254 = vmatmul.mubr.f32.gmra.mrb[0].mxu0 %v2178
        %v2255 = vpop.f32.mrb[0].mxu0
        %v2256 = vadd.f32 0.0, %v2255
        %v2257 = vpop.f32.mrb[0].mxu0
        %2258 = vdwg.mxu0
        %vm2261 = vcmp.lt.s32.totalorder %v2251, 0
        %vm2262 = vcmp.lt.s32.totalorder %v2256, 0
        %v2263 = vxor.u32 %v2251, 2147483647
        %v2264 = vxor.u32 %v2256, 2147483647
        %v2265 = vsel %vm2261, %v2263, %v2251
        %v2266 = vsel %vm2262, %v2264, %v2256
        %v2267 = vand.u32 %v2265, 4294967280
        %v2268 = vand.u32 %v2266, 4294967280
        %v2269 = vor.u32 %v2267, %v853
        %v2270 = vor.u32 %v2268, %v853
        %v2271 = vsel %vm954, %v2269, 2147483648
        %v2272 = vand.u32 %v2271, 65535
        %v2273 = vshra.s32 %v2271, 16
        %v2274 = vcvt.s32.f32 %v2272
        %v2275 = vcvt.s32.f32 %v2273
        %2276 = vmax.xlane.f32.xlu0 %v2275
        %v2277 = vpop.xlane.xlu0 %2276
        %vm2278 = vcmp.eq.f32.partialorder %v2275, %v2277
        %v2279 = vsel %vm2278, %v2274, -inf
        %2280 = vmax.xlane.f32.xlu0 %v2279
        %v2281 = vpop.xlane.xlu0 %2280
        %v2282 = vcvt.f32.s32 %v2281
        %v2283 = vcvt.f32.s32 %v2277
        %v2284 = vshll.u32 %v2283, 16
        %v2285 = vadd.s32 %v2284, %v2282
        %v2286 = vsel %vm954, %v2270, 2147483648
        %v2287 = vand.u32 %v2286, 65535
        %v2288 = vshra.s32 %v2286, 16
        %v2289 = vcvt.s32.f32 %v2287
        %v2290 = vcvt.s32.f32 %v2288
        %2291 = vmax.xlane.f32.xlu0 %v2290
        %v2292 = vpop.xlane.xlu0 %2291
        %vm2293 = vcmp.eq.f32.partialorder %v2290, %v2292
        %v2294 = vsel %vm2293, %v2289, -inf
        %2295 = vmax.xlane.f32.xlu0 %v2294
        %v2296 = vpop.xlane.xlu0 %2295
        %v2297 = vcvt.f32.s32 %v2296
        %v2298 = vcvt.f32.s32 %v2292
        %v2299 = vshll.u32 %v2298, 16
        %v2300 = vadd.s32 %v2299, %v2297
        %vm2301 = vcmp.eq.s32.totalorder %v2269, %v2285
        %vm2302 = vcmp.eq.s32.totalorder %v2270, %v2300
        %v2303 = vand.u32 %v2285, 4294967280
        %v2304 = vand.u32 %v2300, 4294967280
        %vm2305 = vcmp.lt.s32.totalorder %v2303, 0
        %vm2306 = vcmp.lt.s32.totalorder %v2304, 0
        %v2307 = vxor.u32 %v2303, 2147483647
        %v2308 = vxor.u32 %v2304, 2147483647
        %v2309 = vsel %vm2305, %v2307, %v2303
        %v2310 = vsel %vm2306, %v2308, %v2304
        %v2313 = vsel %vm2301, 1.0, 0.0
        %v2314 = vsel %vm2302, 1.0, 0.0
        %v2315 = vadd.f32 %v2313, 0.0
        %v2316 = vadd.f32 %v2314, 0.0
        %v2317 = vsel %vm2301, 2147483648, %v2269
        %v2318 = vsel %vm2302, 2147483648, %v2270
        %v2319 = vsel %vm954, %v2317, 2147483648
        %v2320 = vand.u32 %v2319, 65535
        %v2321 = vshra.s32 %v2319, 16
        %v2322 = vcvt.s32.f32 %v2320
        %v2323 = vcvt.s32.f32 %v2321
        %2324 = vmax.xlane.f32.xlu0 %v2323
        %v2325 = vpop.xlane.xlu0 %2324
        %vm2326 = vcmp.eq.f32.partialorder %v2323, %v2325
        %v2327 = vsel %vm2326, %v2322, -inf
        %2328 = vmax.xlane.f32.xlu0 %v2327
        %v2329 = vpop.xlane.xlu0 %2328
        %v2330 = vcvt.f32.s32 %v2329
        %v2331 = vcvt.f32.s32 %v2325
        %v2332 = vshll.u32 %v2331, 16
        %v2333 = vadd.s32 %v2332, %v2330
        %v2334 = vsel %vm954, %v2318, 2147483648
        %v2335 = vand.u32 %v2334, 65535
        %v2336 = vshra.s32 %v2334, 16
        %v2337 = vcvt.s32.f32 %v2335
        %v2338 = vcvt.s32.f32 %v2336
        %2339 = vmax.xlane.f32.xlu0 %v2338
        %v2340 = vpop.xlane.xlu0 %2339
        %vm2341 = vcmp.eq.f32.partialorder %v2338, %v2340
        %v2342 = vsel %vm2341, %v2337, -inf
        %2343 = vmax.xlane.f32.xlu0 %v2342
        %v2344 = vpop.xlane.xlu0 %2343
        %v2345 = vcvt.f32.s32 %v2344
        %v2346 = vcvt.f32.s32 %v2340
        %v2347 = vshll.u32 %v2346, 16
        %v2348 = vadd.s32 %v2347, %v2345
        %vm2349 = vcmp.eq.s32.totalorder %v2317, %v2333
        %vm2350 = vcmp.eq.s32.totalorder %v2318, %v2348
        %v2351 = vand.u32 %v2333, 4294967280
        %v2352 = vand.u32 %v2348, 4294967280
        %vm2353 = vcmp.lt.s32.totalorder %v2351, 0
        %vm2354 = vcmp.lt.s32.totalorder %v2352, 0
        %v2355 = vxor.u32 %v2351, 2147483647
        %v2356 = vxor.u32 %v2352, 2147483647
        %v2357 = vsel %vm2353, %v2355, %v2351
        %v2358 = vsel %vm2354, %v2356, %v2352
        %v2361 = vsub.f32 %v2357, %v2309
        %v2362 = vsub.f32 %v2358, %v2310
        %v2363 = vmul.f32 %v2361, 1.442695
        %v2364 = vpow.pop %v2363
        %v2365 = vmul.f32 %v2362, 1.442695
        %v2366 = vpow.pop %v2365
        %v2367 = vadd.f32 %v2364, 1.0
        %v2368 = vadd.f32 %v2366, 1.0
        %v2369 = vsel %vm2349, %v2364, 0.0
        %v2370 = vsel %vm2350, %v2366, 0.0
        %v2371 = vadd.f32 %v2315, %v2369
        %v2372 = vadd.f32 %v2316, %v2370
        %v2373 = vsel %vm2349, 2147483648, %v2317
        %v2374 = vsel %vm2350, 2147483648, %v2318
        %v2375 = vsel %vm954, %v2373, 2147483648
        %v2376 = vand.u32 %v2375, 65535
        %v2377 = vshra.s32 %v2375, 16
        %v2378 = vcvt.s32.f32 %v2376
        %v2379 = vcvt.s32.f32 %v2377
        %2380 = vmax.xlane.f32.xlu0 %v2379
        %v2381 = vpop.xlane.xlu0 %2380
        %vm2382 = vcmp.eq.f32.partialorder %v2379, %v2381
        %v2383 = vsel %vm2382, %v2378, -inf
        %2384 = vmax.xlane.f32.xlu0 %v2383
        %v2385 = vpop.xlane.xlu0 %2384
        %v2386 = vcvt.f32.s32 %v2385
        %v2387 = vcvt.f32.s32 %v2381
        %v2388 = vshll.u32 %v2387, 16
        %v2389 = vadd.s32 %v2388, %v2386
        %v2390 = vsel %vm954, %v2374, 2147483648
        %v2391 = vand.u32 %v2390, 65535
        %v2392 = vshra.s32 %v2390, 16
        %v2393 = vcvt.s32.f32 %v2391
        %v2394 = vcvt.s32.f32 %v2392
        %2395 = vmax.xlane.f32.xlu0 %v2394
        %v2396 = vpop.xlane.xlu0 %2395
        %vm2397 = vcmp.eq.f32.partialorder %v2394, %v2396
        %v2398 = vsel %vm2397, %v2393, -inf
        %2399 = vmax.xlane.f32.xlu0 %v2398
        %v2400 = vpop.xlane.xlu0 %2399
        %v2401 = vcvt.f32.s32 %v2400
        %v2402 = vcvt.f32.s32 %v2396
        %v2403 = vshll.u32 %v2402, 16
        %v2404 = vadd.s32 %v2403, %v2401
        %vm2405 = vcmp.eq.s32.totalorder %v2373, %v2389
        %vm2406 = vcmp.eq.s32.totalorder %v2374, %v2404
        %v2407 = vand.u32 %v2389, 4294967280
        %v2408 = vand.u32 %v2404, 4294967280
        %vm2409 = vcmp.lt.s32.totalorder %v2407, 0
        %vm2410 = vcmp.lt.s32.totalorder %v2408, 0
        %v2411 = vxor.u32 %v2407, 2147483647
        %v2412 = vxor.u32 %v2408, 2147483647
        %v2413 = vsel %vm2409, %v2411, %v2407
        %v2414 = vsel %vm2410, %v2412, %v2408
        %v2417 = vsub.f32 %v2413, %v2309
        %v2418 = vsub.f32 %v2414, %v2310
        %v2419 = vmul.f32 %v2417, 1.442695
        %v2420 = vpow.pop %v2419
        %v2421 = vmul.f32 %v2418, 1.442695
        %v2422 = vpow.pop %v2421
        %v2423 = vadd.f32 %v2367, %v2420
        %v2424 = vadd.f32 %v2368, %v2422
        %v2425 = vsel %vm2405, %v2420, 0.0
        %v2426 = vsel %vm2406, %v2422, 0.0
        %v2427 = vadd.f32 %v2371, %v2425
        %v2428 = vadd.f32 %v2372, %v2426
        %v2429 = vsel %vm2405, 2147483648, %v2373
        %v2430 = vsel %vm2406, 2147483648, %v2374
        %v2431 = vsel %vm954, %v2429, 2147483648
        %v2432 = vand.u32 %v2431, 65535
        %v2433 = vshra.s32 %v2431, 16
        %v2434 = vcvt.s32.f32 %v2432
        %v2435 = vcvt.s32.f32 %v2433
        %2436 = vmax.xlane.f32.xlu0 %v2435
        %v2437 = vpop.xlane.xlu0 %2436
        %vm2438 = vcmp.eq.f32.partialorder %v2435, %v2437
        %v2439 = vsel %vm2438, %v2434, -inf
        %2440 = vmax.xlane.f32.xlu0 %v2439
        %v2441 = vpop.xlane.xlu0 %2440
        %v2442 = vcvt.f32.s32 %v2441
        %v2443 = vcvt.f32.s32 %v2437
        %v2444 = vshll.u32 %v2443, 16
        %v2445 = vadd.s32 %v2444, %v2442
        %v2446 = vsel %vm954, %v2430, 2147483648
        %v2447 = vand.u32 %v2446, 65535
        %v2448 = vshra.s32 %v2446, 16
        %v2449 = vcvt.s32.f32 %v2447
        %v2450 = vcvt.s32.f32 %v2448
        %2451 = vmax.xlane.f32.xlu0 %v2450
        %v2452 = vpop.xlane.xlu0 %2451
        %vm2453 = vcmp.eq.f32.partialorder %v2450, %v2452
        %v2454 = vsel %vm2453, %v2449, -inf
        %2455 = vmax.xlane.f32.xlu0 %v2454
        %v2456 = vpop.xlane.xlu0 %2455
        %v2457 = vcvt.f32.s32 %v2456
        %v2458 = vcvt.f32.s32 %v2452
        %v2459 = vshll.u32 %v2458, 16
        %v2460 = vadd.s32 %v2459, %v2457
        %vm2461 = vcmp.eq.s32.totalorder %v2429, %v2445
        %vm2462 = vcmp.eq.s32.totalorder %v2430, %v2460
        %v2463 = vand.u32 %v2445, 4294967280
        %v2464 = vand.u32 %v2460, 4294967280
        %vm2465 = vcmp.lt.s32.totalorder %v2463, 0
        %vm2466 = vcmp.lt.s32.totalorder %v2464, 0
        %v2467 = vxor.u32 %v2463, 2147483647
        %v2468 = vxor.u32 %v2464, 2147483647
        %v2469 = vsel %vm2465, %v2467, %v2463
        %v2470 = vsel %vm2466, %v2468, %v2464
        %v2473 = vsub.f32 %v2469, %v2309
        %v2474 = vsub.f32 %v2470, %v2310
        %v2475 = vmul.f32 %v2473, 1.442695
        %v2476 = vpow.pop %v2475
        %v2477 = vmul.f32 %v2474, 1.442695
        %v2478 = vpow.pop %v2477
        %v2479 = vadd.f32 %v2423, %v2476
        %v2480 = vadd.f32 %v2424, %v2478
        %v2481 = vsel %vm2461, %v2476, 0.0
        %v2482 = vsel %vm2462, %v2478, 0.0
        %v2483 = vadd.f32 %v2427, %v2481
        %v2484 = vadd.f32 %v2428, %v2482
        %v2485 = vsel %vm2461, 2147483648, %v2429
        %v2486 = vsel %vm2462, 2147483648, %v2430
        %v2487 = vsel %vm954, %v2485, 2147483648
        %v2488 = vand.u32 %v2487, 65535
        %v2489 = vshra.s32 %v2487, 16
        %v2490 = vcvt.s32.f32 %v2488
        %v2491 = vcvt.s32.f32 %v2489
        %2492 = vmax.xlane.f32.xlu0 %v2491
        %v2493 = vpop.xlane.xlu0 %2492
        %vm2494 = vcmp.eq.f32.partialorder %v2491, %v2493
        %v2495 = vsel %vm2494, %v2490, -inf
        %2496 = vmax.xlane.f32.xlu0 %v2495
        %v2497 = vpop.xlane.xlu0 %2496
        %v2498 = vcvt.f32.s32 %v2497
        %v2499 = vcvt.f32.s32 %v2493
        %v2500 = vshll.u32 %v2499, 16
        %v2501 = vadd.s32 %v2500, %v2498
        %v2502 = vsel %vm954, %v2486, 2147483648
        %v2503 = vand.u32 %v2502, 65535
        %v2504 = vshra.s32 %v2502, 16
        %v2505 = vcvt.s32.f32 %v2503
        %v2506 = vcvt.s32.f32 %v2504
        %2507 = vmax.xlane.f32.xlu0 %v2506
        %v2508 = vpop.xlane.xlu0 %2507
        %vm2509 = vcmp.eq.f32.partialorder %v2506, %v2508
        %v2510 = vsel %vm2509, %v2505, -inf
        %2511 = vmax.xlane.f32.xlu0 %v2510
        %v2512 = vpop.xlane.xlu0 %2511
        %v2513 = vcvt.f32.s32 %v2512
        %v2514 = vcvt.f32.s32 %v2508
        %v2515 = vshll.u32 %v2514, 16
        %v2516 = vadd.s32 %v2515, %v2513
        %vm2517 = vcmp.eq.s32.totalorder %v2485, %v2501
        %vm2518 = vcmp.eq.s32.totalorder %v2486, %v2516
        %v2519 = vand.u32 %v2501, 4294967280
        %v2520 = vand.u32 %v2516, 4294967280
        %vm2521 = vcmp.lt.s32.totalorder %v2519, 0
        %vm2522 = vcmp.lt.s32.totalorder %v2520, 0
        %v2523 = vxor.u32 %v2519, 2147483647
        %v2524 = vxor.u32 %v2520, 2147483647
        %v2525 = vsel %vm2521, %v2523, %v2519
        %v2526 = vsel %vm2522, %v2524, %v2520
        %v2529 = vsub.f32 %v2525, %v2309
        %v2530 = vsub.f32 %v2526, %v2310
        %v2531 = vmul.f32 %v2529, 1.442695
        %v2532 = vpow.pop %v2531
        %v2533 = vmul.f32 %v2530, 1.442695
        %v2534 = vpow.pop %v2533
        %v2535 = vadd.f32 %v2479, %v2532
        %v2536 = vadd.f32 %v2480, %v2534
        %v2537 = vsel %vm2517, %v2532, 0.0
        %v2538 = vsel %vm2518, %v2534, 0.0
        %v2539 = vadd.f32 %v2483, %v2537
        %v2540 = vadd.f32 %v2484, %v2538
        %v2541 = vsel %vm2517, 2147483648, %v2485
        %v2542 = vsel %vm2518, 2147483648, %v2486
        %v2543 = vsel %vm954, %v2541, 2147483648
        %v2544 = vand.u32 %v2543, 65535
        %v2545 = vshra.s32 %v2543, 16
        %v2546 = vcvt.s32.f32 %v2544
        %v2547 = vcvt.s32.f32 %v2545
        %2548 = vmax.xlane.f32.xlu0 %v2547
        %v2549 = vpop.xlane.xlu0 %2548
        %vm2550 = vcmp.eq.f32.partialorder %v2547, %v2549
        %v2551 = vsel %vm2550, %v2546, -inf
        %2552 = vmax.xlane.f32.xlu0 %v2551
        %v2553 = vpop.xlane.xlu0 %2552
        %v2554 = vcvt.f32.s32 %v2553
        %v2555 = vcvt.f32.s32 %v2549
        %v2556 = vshll.u32 %v2555, 16
        %v2557 = vadd.s32 %v2556, %v2554
        %v2558 = vsel %vm954, %v2542, 2147483648
        %v2559 = vand.u32 %v2558, 65535
        %v2560 = vshra.s32 %v2558, 16
        %v2561 = vcvt.s32.f32 %v2559
        %v2562 = vcvt.s32.f32 %v2560
        %2563 = vmax.xlane.f32.xlu0 %v2562
        %v2564 = vpop.xlane.xlu0 %2563
        %vm2565 = vcmp.eq.f32.partialorder %v2562, %v2564
        %v2566 = vsel %vm2565, %v2561, -inf
        %2567 = vmax.xlane.f32.xlu0 %v2566
        %v2568 = vpop.xlane.xlu0 %2567
        %v2569 = vcvt.f32.s32 %v2568
        %v2570 = vcvt.f32.s32 %v2564
        %v2571 = vshll.u32 %v2570, 16
        %v2572 = vadd.s32 %v2571, %v2569
        %vm2573 = vcmp.eq.s32.totalorder %v2541, %v2557
        %vm2574 = vcmp.eq.s32.totalorder %v2542, %v2572
        %v2575 = vand.u32 %v2557, 4294967280
        %v2576 = vand.u32 %v2572, 4294967280
        %vm2577 = vcmp.lt.s32.totalorder %v2575, 0
        %vm2578 = vcmp.lt.s32.totalorder %v2576, 0
        %v2579 = vxor.u32 %v2575, 2147483647
        %v2580 = vxor.u32 %v2576, 2147483647
        %v2581 = vsel %vm2577, %v2579, %v2575
        %v2582 = vsel %vm2578, %v2580, %v2576
        %v2585 = vsub.f32 %v2581, %v2309
        %v2586 = vsub.f32 %v2582, %v2310
        %v2587 = vmul.f32 %v2585, 1.442695
        %v2588 = vpow.pop %v2587
        %v2589 = vmul.f32 %v2586, 1.442695
        %v2590 = vpow.pop %v2589
        %v2591 = vadd.f32 %v2535, %v2588
        %v2592 = vadd.f32 %v2536, %v2590
        %v2593 = vsel %vm2573, %v2588, 0.0
        %v2594 = vsel %vm2574, %v2590, 0.0
        %v2595 = vadd.f32 %v2539, %v2593
        %v2596 = vadd.f32 %v2540, %v2594
        %v2597 = vsel %vm2573, 2147483648, %v2541
        %v2598 = vsel %vm2574, 2147483648, %v2542
        %v2599 = vsel %vm954, %v2597, 2147483648
        %v2600 = vand.u32 %v2599, 65535
        %v2601 = vshra.s32 %v2599, 16
        %v2602 = vcvt.s32.f32 %v2600
        %v2603 = vcvt.s32.f32 %v2601
        %2604 = vmax.xlane.f32.xlu0 %v2603
        %v2605 = vpop.xlane.xlu0 %2604
        %vm2606 = vcmp.eq.f32.partialorder %v2603, %v2605
        %v2607 = vsel %vm2606, %v2602, -inf
        %2608 = vmax.xlane.f32.xlu0 %v2607
        %v2609 = vpop.xlane.xlu0 %2608
        %v2610 = vcvt.f32.s32 %v2609
        %v2611 = vcvt.f32.s32 %v2605
        %v2612 = vshll.u32 %v2611, 16
        %v2613 = vadd.s32 %v2612, %v2610
        %v2614 = vsel %vm954, %v2598, 2147483648
        %v2615 = vand.u32 %v2614, 65535
        %v2616 = vshra.s32 %v2614, 16
        %v2617 = vcvt.s32.f32 %v2615
        %v2618 = vcvt.s32.f32 %v2616
        %2619 = vmax.xlane.f32.xlu0 %v2618
        %v2620 = vpop.xlane.xlu0 %2619
        %vm2621 = vcmp.eq.f32.partialorder %v2618, %v2620
        %v2622 = vsel %vm2621, %v2617, -inf
        %2623 = vmax.xlane.f32.xlu0 %v2622
        %v2624 = vpop.xlane.xlu0 %2623
        %v2625 = vcvt.f32.s32 %v2624
        %v2626 = vcvt.f32.s32 %v2620
        %v2627 = vshll.u32 %v2626, 16
        %v2628 = vadd.s32 %v2627, %v2625
        %vm2629 = vcmp.eq.s32.totalorder %v2597, %v2613
        %vm2630 = vcmp.eq.s32.totalorder %v2598, %v2628
        %v2631 = vand.u32 %v2613, 4294967280
        %v2632 = vand.u32 %v2628, 4294967280
        %vm2633 = vcmp.lt.s32.totalorder %v2631, 0
        %vm2634 = vcmp.lt.s32.totalorder %v2632, 0
        %v2635 = vxor.u32 %v2631, 2147483647
        %v2636 = vxor.u32 %v2632, 2147483647
        %v2637 = vsel %vm2633, %v2635, %v2631
        %v2638 = vsel %vm2634, %v2636, %v2632
        %v2641 = vsub.f32 %v2637, %v2309
        %v2642 = vsub.f32 %v2638, %v2310
        %v2643 = vmul.f32 %v2641, 1.442695
        %v2644 = vpow.pop %v2643
        %v2645 = vmul.f32 %v2642, 1.442695
        %v2646 = vpow.pop %v2645
        %v2647 = vadd.f32 %v2591, %v2644
        %v2648 = vadd.f32 %v2592, %v2646
        %v2649 = vsel %vm2629, %v2644, 0.0
        %v2650 = vsel %vm2630, %v2646, 0.0
        %v2651 = vadd.f32 %v2595, %v2649
        %v2652 = vadd.f32 %v2596, %v2650
        %v2653 = vsel %vm2629, 2147483648, %v2597
        %v2654 = vsel %vm2630, 2147483648, %v2598
        %v2655 = vsel %vm954, %v2653, 2147483648
        %v2656 = vand.u32 %v2655, 65535
        %v2657 = vshra.s32 %v2655, 16
        %v2658 = vcvt.s32.f32 %v2656
        %v2659 = vcvt.s32.f32 %v2657
        %2660 = vmax.xlane.f32.xlu0 %v2659
        %v2661 = vpop.xlane.xlu0 %2660
        %vm2662 = vcmp.eq.f32.partialorder %v2659, %v2661
        %v2663 = vsel %vm2662, %v2658, -inf
        %2664 = vmax.xlane.f32.xlu0 %v2663
        %v2665 = vpop.xlane.xlu0 %2664
        %v2666 = vcvt.f32.s32 %v2665
        %v2667 = vcvt.f32.s32 %v2661
        %v2668 = vshll.u32 %v2667, 16
        %v2669 = vadd.s32 %v2668, %v2666
        %v2670 = vsel %vm954, %v2654, 2147483648
        %v2671 = vand.u32 %v2670, 65535
        %v2672 = vshra.s32 %v2670, 16
        %v2673 = vcvt.s32.f32 %v2671
        %v2674 = vcvt.s32.f32 %v2672
        %2675 = vmax.xlane.f32.xlu0 %v2674
        %v2676 = vpop.xlane.xlu0 %2675
        %vm2677 = vcmp.eq.f32.partialorder %v2674, %v2676
        %v2678 = vsel %vm2677, %v2673, -inf
        %2679 = vmax.xlane.f32.xlu0 %v2678
        %v2680 = vpop.xlane.xlu0 %2679
        %v2681 = vcvt.f32.s32 %v2680
        %v2682 = vcvt.f32.s32 %v2676
        %v2683 = vshll.u32 %v2682, 16
        %v2684 = vadd.s32 %v2683, %v2681
        %vm2685 = vcmp.eq.s32.totalorder %v2653, %v2669
        %vm2686 = vcmp.eq.s32.totalorder %v2654, %v2684
        %v2687 = vand.u32 %v2669, 4294967280
        %v2688 = vand.u32 %v2684, 4294967280
        %vm2689 = vcmp.lt.s32.totalorder %v2687, 0
        %vm2690 = vcmp.lt.s32.totalorder %v2688, 0
        %v2691 = vxor.u32 %v2687, 2147483647
        %v2692 = vxor.u32 %v2688, 2147483647
        %v2693 = vsel %vm2689, %v2691, %v2687
        %v2694 = vsel %vm2690, %v2692, %v2688
        %v2697 = vsub.f32 %v2693, %v2309
        %v2698 = vsub.f32 %v2694, %v2310
        %v2699 = vmul.f32 %v2697, 1.442695
        %v2700 = vpow.pop %v2699
        %v2701 = vmul.f32 %v2698, 1.442695
        %v2702 = vpow.pop %v2701
        %v2703 = vadd.f32 %v2647, %v2700
        %v2704 = vadd.f32 %v2648, %v2702
        %v2705 = vsel %vm2685, %v2700, 0.0
        %v2706 = vsel %vm2686, %v2702, 0.0
        %v2707 = vadd.f32 %v2651, %v2705
        %v2708 = vadd.f32 %v2652, %v2706
        %v2709 = vrcp.pop %v2703
        %v2710 = vrcp.pop %v2704
        %v2711 = vmul.f32 %v2703, %v2709
        %v2712 = vmul.f32 %v2704, %v2710
        %v2713 = vsub.f32 2.0, %v2711
        %v2714 = vsub.f32 2.0, %v2712
        %v2715 = vmul.f32 %v2709, %v2713
        %v2716 = vmul.f32 %v2710, %v2714
        %v2717 = vmul.f32 %v2707, %v2715
        %v2718 = vmul.f32 %v2708, %v2716
        %v2719 = vsel %vm1403, 1.0, %v2364
        %v2720 = vsel %vm1403, 1.0, %v2366
        %v2721 = vsel %vm1406, %v2719, %v2420
        %v2722 = vsel %vm1406, %v2720, %v2422
        %v2723 = vsel %vm1409, %v2721, %v2476
        %v2724 = vsel %vm1409, %v2722, %v2478
        %v2725 = vsel %vm1412, %v2723, %v2532
        %v2726 = vsel %vm1412, %v2724, %v2534
        %v2727 = vsel %vm1415, %v2725, %v2588
        %v2728 = vsel %vm1415, %v2726, %v2590
        %v2729 = vsel %vm1418, %v2727, %v2644
        %v2730 = vsel %vm1418, %v2728, %v2646
        %v2731 = vsel %vm1421, %v2729, %v2700
        %v2732 = vsel %vm1421, %v2730, %v2702
        %v2733 = vmul.f32 %v2731, %v2715
        %v2734 = vmul.f32 %v2732, %v2716
        %s2735 = scalar_lea.vmem %s588, 32 [#allocation20]
        %2736 = vst.msk [vmem:[%s2735] sm:$0xff] %vm854, %v2733
        %2737 = vst.msk [vmem:[%s2735 + $0x8] sm:$0xff] %vm854, %v2734
        %2738 = vrot.lane.b32.xlu0 %v843, 112
        %v2739 = vpop.permute.xlu0 %2738
        %2740 = vrot.lane.b32.xlu0 %v848, 112
        %v2741 = vpop.permute.xlu0 %2740
        %v2745 = vsel %vm954, %v2717, 0
        %v2748 = vsel %vm954, %v2718, 0
        %2750 = vmatprep.subr.mxu0 0.0
        %2751 = vmatpush1.msra.mxu0 %v2739
        %2752 = vmatprep.subr.mxu0 0.0
        %2753 = vmatpush1.msra.mxu0 %v2741
        %2754 = vmatprep.subr.mxu0 0.0
        %2755 = vmatpush1.msra.mxu0 0.0
        %2756 = vmatprep.subr.mxu0 0.0
        %2757 = vmatpush1.msra.mxu0 0.0
        %2758 = vmatprep.subr.mxu0 0.0
        %2759 = vmatpush1.msra.mxu0 0.0
        %2760 = vmatprep.subr.mxu0 0.0
        %2761 = vmatpush1.msra.mxu0 0.0
        %2762 = vmatprep.subr.mxu0 0.0
        %2763 = vmatpush1.msra.mxu0 0.0
        %2764 = vmatprep.subr.mxu0 0.0
        %2765 = vmatpush1.msra.mxu0 0.0
        %2766 = vmatprep.subr.mxu0 0.0
        %2767 = vmatpush1.msra.mxu0 0.0
        %2768 = vmatprep.subr.mxu0 0.0
        %2769 = vmatpush1.msra.mxu0 0.0
        %2770 = vmatprep.subr.mxu0 0.0
        %2771 = vmatpush1.msra.mxu0 0.0
        %2772 = vmatprep.subr.mxu0 0.0
        %2773 = vmatpush1.msra.mxu0 0.0
        %2774 = vmatprep.subr.mxu0 0.0
        %2775 = vmatpush1.msra.mxu0 0.0
        %2776 = vmatprep.subr.mxu0 0.0
        %2777 = vmatpush1.msra.mxu0 0.0
        %2778 = vmatprep.subr.mxu0 0.0
        %2779 = vmatpush1.msra.mxu0 0.0
        %2780 = vmatprep.subr.mxu0 0.0
        %2781 = vmatpush1.msra.mxu0 0.0
        %2782 = vmatprep.subr.mxu0 0.0
        %2783 = vmatpush1.msra.mxu0 0.0
        %2784 = vmatprep.subr.mxu0 0.0
        %2785 = vmatpush1.msra.mxu0 0.0
        %2786 = vmatprep.subr.mxu0 0.0
        %2787 = vmatpush1.msra.mxu0 0.0
        %2788 = vmatprep.subr.mxu0 0.0
        %2789 = vmatpush1.msra.mxu0 0.0
        %2790 = vmatprep.subr.mxu0 0.0
        %2791 = vmatpush1.msra.mxu0 0.0
        %2792 = vmatprep.subr.mxu0 0.0
        %2793 = vmatpush1.msra.mxu0 0.0
        %2794 = vmatprep.subr.mxu0 0.0
        %2795 = vmatpush1.msra.mxu0 0.0
        %2796 = vmatprep.subr.mxu0 0.0
        %2797 = vmatpush1.msra.mxu0 0.0
        %2798 = vmatprep.subr.mxu0 0.0
        %2799 = vmatpush1.msra.mxu0 0.0
        %2800 = vmatprep.subr.mxu0 0.0
        %2801 = vmatpush1.msra.mxu0 0.0
        %2802 = vmatprep.subr.mxu0 0.0
        %2803 = vmatpush1.msra.mxu0 0.0
        %2804 = vmatprep.subr.mxu0 0.0
        %2805 = vmatpush1.msra.mxu0 0.0
        %2806 = vmatprep.subr.mxu0 0.0
        %2807 = vmatpush1.msra.mxu0 0.0
        %2808 = vmatprep.subr.mxu0 0.0
        %2809 = vmatpush1.msra.mxu0 0.0
        %2810 = vmatprep.subr.mxu0 0.0
        %2811 = vmatpush1.msra.mxu0 0.0
        %2812 = vmatprep.subr.mxu0 0.0
        %2813 = vmatpush1.msra.mxu0 0.0
        %2814 = vmatprep.mubr.f32.mxu0 0.0
        %2815 = vmatmul.mubr.f32.gmra.mrb[0].mxu0 %v2745
        %v2816 = vpop.f32.mrb[0].mxu0
        %v2817 = vadd.f32 0.0, %v2816
        %v2818 = vpop.f32.mrb[0].mxu0
        %2819 = vmatprep.mubr.f32.mxu0 0.0
        %2820 = vmatmul.mubr.f32.gmra.mrb[0].mxu0 %v2748
        %v2821 = vpop.f32.mrb[0].mxu0
        %v2822 = vadd.f32 0.0, %v2821
        %v2823 = vpop.f32.mrb[0].mxu0
        %2824 = vdwg.mxu0
        %2825 = vrot.lane.b32.xlu0 %v673, 104
        %v2826 = vpop.permute.xlu0 %2825
        %2827 = vrot.lane.b32.xlu0 %v678, 104
        %v2828 = vpop.permute.xlu0 %2827
        %2829 = vrot.lane.b32.xlu0 %v758, 104
        %v2830 = vpop.permute.xlu0 %2829
        %2831 = vrot.lane.b32.xlu0 %v763, 104
        %v2832 = vpop.permute.xlu0 %2831
        %v2833 = vsel %vm854, %v2826, 0
        %v2835 = vsel %vm854, %v2828, 0
        %v2837 = vsel %vm854, %v2830, 0
        %v2839 = vsel %vm854, %v2832, 0
        %2841 = vmatprep.subr.mxu0 0.0
        %2842 = vmatpush1.xpose.msra.mxu0 %v2837
        %2843 = vmatprep.subr.mxu0 0.0
        %2844 = vmatpush1.xpose.msra.mxu0 %v2839
        %2845 = vmatprep.subr.mxu0 0.0
        %2846 = vmatpush1.xpose.msra.mxu0 0.0
        %2847 = vmatprep.subr.mxu0 0.0
        %2848 = vmatpush1.xpose.msra.mxu0 0.0
        %2849 = vmatprep.subr.mxu0 0.0
        %2850 = vmatpush1.xpose.msra.mxu0 0.0
        %2851 = vmatprep.subr.mxu0 0.0
        %2852 = vmatpush1.xpose.msra.mxu0 0.0
        %2853 = vmatprep.subr.mxu0 0.0
        %2854 = vmatpush1.xpose.msra.mxu0 0.0
        %2855 = vmatprep.subr.mxu0 0.0
        %2856 = vmatpush1.xpose.msra.mxu0 0.0
        %2857 = vmatprep.subr.mxu0 0.0
        %2858 = vmatpush1.xpose.msra.mxu0 0.0
        %2859 = vmatprep.subr.mxu0 0.0
        %2860 = vmatpush1.xpose.msra.mxu0 0.0
        %2861 = vmatprep.subr.mxu0 0.0
        %2862 = vmatpush1.xpose.msra.mxu0 0.0
        %2863 = vmatprep.subr.mxu0 0.0
        %2864 = vmatpush1.xpose.msra.mxu0 0.0
        %2865 = vmatprep.subr.mxu0 0.0
        %2866 = vmatpush1.xpose.msra.mxu0 0.0
        %2867 = vmatprep.subr.mxu0 0.0
        %2868 = vmatpush1.xpose.msra.mxu0 0.0
        %2869 = vmatprep.subr.mxu0 0.0
        %2870 = vmatpush1.xpose.msra.mxu0 0.0
        %2871 = vmatprep.subr.mxu0 0.0
        %2872 = vmatpush1.xpose.msra.mxu0 0.0
        %2873 = vmatprep.subr.mxu0 0.0
        %2874 = vmatpush1.xpose.msra.mxu0 0.0
        %2875 = vmatprep.subr.mxu0 0.0
        %2876 = vmatpush1.xpose.msra.mxu0 0.0
        %2877 = vmatprep.subr.mxu0 0.0
        %2878 = vmatpush1.xpose.msra.mxu0 0.0
        %2879 = vmatprep.subr.mxu0 0.0
        %2880 = vmatpush1.xpose.msra.mxu0 0.0
        %2881 = vmatprep.subr.mxu0 0.0
        %2882 = vmatpush1.xpose.msra.mxu0 0.0
        %2883 = vmatprep.subr.mxu0 0.0
        %2884 = vmatpush1.xpose.msra.mxu0 0.0
        %2885 = vmatprep.subr.mxu0 0.0
        %2886 = vmatpush1.xpose.msra.mxu0 0.0
        %2887 = vmatprep.subr.mxu0 0.0
        %2888 = vmatpush1.xpose.msra.mxu0 0.0
        %2889 = vmatprep.subr.mxu0 0.0
        %2890 = vmatpush1.xpose.msra.mxu0 0.0
        %2891 = vmatprep.subr.mxu0 0.0
        %2892 = vmatpush1.xpose.msra.mxu0 0.0
        %2893 = vmatprep.subr.mxu0 0.0
        %2894 = vmatpush1.xpose.msra.mxu0 0.0
        %2895 = vmatprep.subr.mxu0 0.0
        %2896 = vmatpush1.xpose.msra.mxu0 0.0
        %2897 = vmatprep.subr.mxu0 0.0
        %2898 = vmatpush1.xpose.msra.mxu0 0.0
        %2899 = vmatprep.subr.mxu0 0.0
        %2900 = vmatpush1.xpose.msra.mxu0 0.0
        %2901 = vmatprep.subr.mxu0 0.0
        %2902 = vmatpush1.xpose.msra.mxu0 0.0
        %2903 = vmatprep.subr.mxu0 0.0
        %2904 = vmatpush1.xpose.msra.mxu0 0.0
        %2905 = vmatprep.mubr.f32.mxu0 0.0
        %2906 = vmatmul.mubr.f32.gmra.mrb[0].mxu0 %v2833
        %v2907 = vpop.f32.mrb[0].mxu0
        %v2908 = vadd.f32 0.0, %v2907
        %v2909 = vpop.f32.mrb[0].mxu0
        %2910 = vmatprep.mubr.f32.mxu0 0.0
        %2911 = vmatmul.mubr.f32.gmra.mrb[0].mxu0 %v2835
        %v2912 = vpop.f32.mrb[0].mxu0
        %v2913 = vadd.f32 0.0, %v2912
        %v2914 = vpop.f32.mrb[0].mxu0
        %2915 = vdwg.mxu0
        %vm2918 = vcmp.lt.s32.totalorder %v2908, 0
        %vm2919 = vcmp.lt.s32.totalorder %v2913, 0
        %v2920 = vxor.u32 %v2908, 2147483647
        %v2921 = vxor.u32 %v2913, 2147483647
        %v2922 = vsel %vm2918, %v2920, %v2908
        %v2923 = vsel %vm2919, %v2921, %v2913
        %v2924 = vand.u32 %v2922, 4294967280
        %v2925 = vand.u32 %v2923, 4294967280
        %v2926 = vor.u32 %v2924, %v853
        %v2927 = vor.u32 %v2925, %v853
        %v2928 = vsel %vm954, %v2926, 2147483648
        %v2929 = vand.u32 %v2928, 65535
        %v2930 = vshra.s32 %v2928, 16
        %v2931 = vcvt.s32.f32 %v2929
        %v2932 = vcvt.s32.f32 %v2930
        %2933 = vmax.xlane.f32.xlu0 %v2932
        %v2934 = vpop.xlane.xlu0 %2933
        %vm2935 = vcmp.eq.f32.partialorder %v2932, %v2934
        %v2936 = vsel %vm2935, %v2931, -inf
        %2937 = vmax.xlane.f32.xlu0 %v2936
        %v2938 = vpop.xlane.xlu0 %2937
        %v2939 = vcvt.f32.s32 %v2938
        %v2940 = vcvt.f32.s32 %v2934
        %v2941 = vshll.u32 %v2940, 16
        %v2942 = vadd.s32 %v2941, %v2939
        %v2943 = vsel %vm954, %v2927, 2147483648
        %v2944 = vand.u32 %v2943, 65535
        %v2945 = vshra.s32 %v2943, 16
        %v2946 = vcvt.s32.f32 %v2944
        %v2947 = vcvt.s32.f32 %v2945
        %2948 = vmax.xlane.f32.xlu0 %v2947
        %v2949 = vpop.xlane.xlu0 %2948
        %vm2950 = vcmp.eq.f32.partialorder %v2947, %v2949
        %v2951 = vsel %vm2950, %v2946, -inf
        %2952 = vmax.xlane.f32.xlu0 %v2951
        %v2953 = vpop.xlane.xlu0 %2952
        %v2954 = vcvt.f32.s32 %v2953
        %v2955 = vcvt.f32.s32 %v2949
        %v2956 = vshll.u32 %v2955, 16
        %v2957 = vadd.s32 %v2956, %v2954
        %vm2958 = vcmp.eq.s32.totalorder %v2926, %v2942
        %vm2959 = vcmp.eq.s32.totalorder %v2927, %v2957
        %v2960 = vand.u32 %v2942, 4294967280
        %v2961 = vand.u32 %v2957, 4294967280
        %vm2962 = vcmp.lt.s32.totalorder %v2960, 0
        %vm2963 = vcmp.lt.s32.totalorder %v2961, 0
        %v2964 = vxor.u32 %v2960, 2147483647
        %v2965 = vxor.u32 %v2961, 2147483647
        %v2966 = vsel %vm2962, %v2964, %v2960
        %v2967 = vsel %vm2963, %v2965, %v2961
        %v2970 = vsel %vm2958, 1.0, 0.0
        %v2971 = vsel %vm2959, 1.0, 0.0
        %v2972 = vadd.f32 %v2970, 0.0
        %v2973 = vadd.f32 %v2971, 0.0
        %v2974 = vsel %vm2958, 2147483648, %v2926
        %v2975 = vsel %vm2959, 2147483648, %v2927
        %v2976 = vsel %vm954, %v2974, 2147483648
        %v2977 = vand.u32 %v2976, 65535
        %v2978 = vshra.s32 %v2976, 16
        %v2979 = vcvt.s32.f32 %v2977
        %v2980 = vcvt.s32.f32 %v2978
        %2981 = vmax.xlane.f32.xlu0 %v2980
        %v2982 = vpop.xlane.xlu0 %2981
        %vm2983 = vcmp.eq.f32.partialorder %v2980, %v2982
        %v2984 = vsel %vm2983, %v2979, -inf
        %2985 = vmax.xlane.f32.xlu0 %v2984
        %v2986 = vpop.xlane.xlu0 %2985
        %v2987 = vcvt.f32.s32 %v2986
        %v2988 = vcvt.f32.s32 %v2982
        %v2989 = vshll.u32 %v2988, 16
        %v2990 = vadd.s32 %v2989, %v2987
        %v2991 = vsel %vm954, %v2975, 2147483648
        %v2992 = vand.u32 %v2991, 65535
        %v2993 = vshra.s32 %v2991, 16
        %v2994 = vcvt.s32.f32 %v2992
        %v2995 = vcvt.s32.f32 %v2993
        %2996 = vmax.xlane.f32.xlu0 %v2995
        %v2997 = vpop.xlane.xlu0 %2996
        %vm2998 = vcmp.eq.f32.partialorder %v2995, %v2997
        %v2999 = vsel %vm2998, %v2994, -inf
        %3000 = vmax.xlane.f32.xlu0 %v2999
        %v3001 = vpop.xlane.xlu0 %3000
        %v3002 = vcvt.f32.s32 %v3001
        %v3003 = vcvt.f32.s32 %v2997
        %v3004 = vshll.u32 %v3003, 16
        %v3005 = vadd.s32 %v3004, %v3002
        %vm3006 = vcmp.eq.s32.totalorder %v2974, %v2990
        %vm3007 = vcmp.eq.s32.totalorder %v2975, %v3005
        %v3008 = vand.u32 %v2990, 4294967280
        %v3009 = vand.u32 %v3005, 4294967280
        %vm3010 = vcmp.lt.s32.totalorder %v3008, 0
        %vm3011 = vcmp.lt.s32.totalorder %v3009, 0
        %v3012 = vxor.u32 %v3008, 2147483647
        %v3013 = vxor.u32 %v3009, 2147483647
        %v3014 = vsel %vm3010, %v3012, %v3008
        %v3015 = vsel %vm3011, %v3013, %v3009
        %v3018 = vsub.f32 %v3014, %v2966
        %v3019 = vsub.f32 %v3015, %v2967
        %v3020 = vmul.f32 %v3018, 1.442695
        %v3021 = vpow.pop %v3020
        %v3022 = vmul.f32 %v3019, 1.442695
        %v3023 = vpow.pop %v3022
        %v3024 = vadd.f32 %v3021, 1.0
        %v3025 = vadd.f32 %v3023, 1.0
        %v3026 = vsel %vm3006, %v3021, 0.0
        %v3027 = vsel %vm3007, %v3023, 0.0
        %v3028 = vadd.f32 %v2972, %v3026
        %v3029 = vadd.f32 %v2973, %v3027
        %v3030 = vsel %vm3006, 2147483648, %v2974
        %v3031 = vsel %vm3007, 2147483648, %v2975
        %v3032 = vsel %vm954, %v3030, 2147483648
        %v3033 = vand.u32 %v3032, 65535
        %v3034 = vshra.s32 %v3032, 16
        %v3035 = vcvt.s32.f32 %v3033
        %v3036 = vcvt.s32.f32 %v3034
        %3037 = vmax.xlane.f32.xlu0 %v3036
        %v3038 = vpop.xlane.xlu0 %3037
        %vm3039 = vcmp.eq.f32.partialorder %v3036, %v3038
        %v3040 = vsel %vm3039, %v3035, -inf
        %3041 = vmax.xlane.f32.xlu0 %v3040
        %v3042 = vpop.xlane.xlu0 %3041
        %v3043 = vcvt.f32.s32 %v3042
        %v3044 = vcvt.f32.s32 %v3038
        %v3045 = vshll.u32 %v3044, 16
        %v3046 = vadd.s32 %v3045, %v3043
        %v3047 = vsel %vm954, %v3031, 2147483648
        %v3048 = vand.u32 %v3047, 65535
        %v3049 = vshra.s32 %v3047, 16
        %v3050 = vcvt.s32.f32 %v3048
        %v3051 = vcvt.s32.f32 %v3049
        %3052 = vmax.xlane.f32.xlu0 %v3051
        %v3053 = vpop.xlane.xlu0 %3052
        %vm3054 = vcmp.eq.f32.partialorder %v3051, %v3053
        %v3055 = vsel %vm3054, %v3050, -inf
        %3056 = vmax.xlane.f32.xlu0 %v3055
        %v3057 = vpop.xlane.xlu0 %3056
        %v3058 = vcvt.f32.s32 %v3057
        %v3059 = vcvt.f32.s32 %v3053
        %v3060 = vshll.u32 %v3059, 16
        %v3061 = vadd.s32 %v3060, %v3058
        %vm3062 = vcmp.eq.s32.totalorder %v3030, %v3046
        %vm3063 = vcmp.eq.s32.totalorder %v3031, %v3061
        %v3064 = vand.u32 %v3046, 4294967280
        %v3065 = vand.u32 %v3061, 4294967280
        %vm3066 = vcmp.lt.s32.totalorder %v3064, 0
        %vm3067 = vcmp.lt.s32.totalorder %v3065, 0
        %v3068 = vxor.u32 %v3064, 2147483647
        %v3069 = vxor.u32 %v3065, 2147483647
        %v3070 = vsel %vm3066, %v3068, %v3064
        %v3071 = vsel %vm3067, %v3069, %v3065
        %v3074 = vsub.f32 %v3070, %v2966
        %v3075 = vsub.f32 %v3071, %v2967
        %v3076 = vmul.f32 %v3074, 1.442695
        %v3077 = vpow.pop %v3076
        %v3078 = vmul.f32 %v3075, 1.442695
        %v3079 = vpow.pop %v3078
        %v3080 = vadd.f32 %v3024, %v3077
        %v3081 = vadd.f32 %v3025, %v3079
        %v3082 = vsel %vm3062, %v3077, 0.0
        %v3083 = vsel %vm3063, %v3079, 0.0
        %v3084 = vadd.f32 %v3028, %v3082
        %v3085 = vadd.f32 %v3029, %v3083
        %v3086 = vsel %vm3062, 2147483648, %v3030
        %v3087 = vsel %vm3063, 2147483648, %v3031
        %v3088 = vsel %vm954, %v3086, 2147483648
        %v3089 = vand.u32 %v3088, 65535
        %v3090 = vshra.s32 %v3088, 16
        %v3091 = vcvt.s32.f32 %v3089
        %v3092 = vcvt.s32.f32 %v3090
        %3093 = vmax.xlane.f32.xlu0 %v3092
        %v3094 = vpop.xlane.xlu0 %3093
        %vm3095 = vcmp.eq.f32.partialorder %v3092, %v3094
        %v3096 = vsel %vm3095, %v3091, -inf
        %3097 = vmax.xlane.f32.xlu0 %v3096
        %v3098 = vpop.xlane.xlu0 %3097
        %v3099 = vcvt.f32.s32 %v3098
        %v3100 = vcvt.f32.s32 %v3094
        %v3101 = vshll.u32 %v3100, 16
        %v3102 = vadd.s32 %v3101, %v3099
        %v3103 = vsel %vm954, %v3087, 2147483648
        %v3104 = vand.u32 %v3103, 65535
        %v3105 = vshra.s32 %v3103, 16
        %v3106 = vcvt.s32.f32 %v3104
        %v3107 = vcvt.s32.f32 %v3105
        %3108 = vmax.xlane.f32.xlu0 %v3107
        %v3109 = vpop.xlane.xlu0 %3108
        %vm3110 = vcmp.eq.f32.partialorder %v3107, %v3109
        %v3111 = vsel %vm3110, %v3106, -inf
        %3112 = vmax.xlane.f32.xlu0 %v3111
        %v3113 = vpop.xlane.xlu0 %3112
        %v3114 = vcvt.f32.s32 %v3113
        %v3115 = vcvt.f32.s32 %v3109
        %v3116 = vshll.u32 %v3115, 16
        %v3117 = vadd.s32 %v3116, %v3114
        %vm3118 = vcmp.eq.s32.totalorder %v3086, %v3102
        %vm3119 = vcmp.eq.s32.totalorder %v3087, %v3117
        %v3120 = vand.u32 %v3102, 4294967280
        %v3121 = vand.u32 %v3117, 4294967280
        %vm3122 = vcmp.lt.s32.totalorder %v3120, 0
        %vm3123 = vcmp.lt.s32.totalorder %v3121, 0
        %v3124 = vxor.u32 %v3120, 2147483647
        %v3125 = vxor.u32 %v3121, 2147483647
        %v3126 = vsel %vm3122, %v3124, %v3120
        %v3127 = vsel %vm3123, %v3125, %v3121
        %v3130 = vsub.f32 %v3126, %v2966
        %v3131 = vsub.f32 %v3127, %v2967
        %v3132 = vmul.f32 %v3130, 1.442695
        %v3133 = vpow.pop %v3132
        %v3134 = vmul.f32 %v3131, 1.442695
        %v3135 = vpow.pop %v3134
        %v3136 = vadd.f32 %v3080, %v3133
        %v3137 = vadd.f32 %v3081, %v3135
        %v3138 = vsel %vm3118, %v3133, 0.0
        %v3139 = vsel %vm3119, %v3135, 0.0
        %v3140 = vadd.f32 %v3084, %v3138
        %v3141 = vadd.f32 %v3085, %v3139
        %v3142 = vsel %vm3118, 2147483648, %v3086
        %v3143 = vsel %vm3119, 2147483648, %v3087
        %v3144 = vsel %vm954, %v3142, 2147483648
        %v3145 = vand.u32 %v3144, 65535
        %v3146 = vshra.s32 %v3144, 16
        %v3147 = vcvt.s32.f32 %v3145
        %v3148 = vcvt.s32.f32 %v3146
        %3149 = vmax.xlane.f32.xlu0 %v3148
        %v3150 = vpop.xlane.xlu0 %3149
        %vm3151 = vcmp.eq.f32.partialorder %v3148, %v3150
        %v3152 = vsel %vm3151, %v3147, -inf
        %3153 = vmax.xlane.f32.xlu0 %v3152
        %v3154 = vpop.xlane.xlu0 %3153
        %v3155 = vcvt.f32.s32 %v3154
        %v3156 = vcvt.f32.s32 %v3150
        %v3157 = vshll.u32 %v3156, 16
        %v3158 = vadd.s32 %v3157, %v3155
        %v3159 = vsel %vm954, %v3143, 2147483648
        %v3160 = vand.u32 %v3159, 65535
        %v3161 = vshra.s32 %v3159, 16
        %v3162 = vcvt.s32.f32 %v3160
        %v3163 = vcvt.s32.f32 %v3161
        %3164 = vmax.xlane.f32.xlu0 %v3163
        %v3165 = vpop.xlane.xlu0 %3164
        %vm3166 = vcmp.eq.f32.partialorder %v3163, %v3165
        %v3167 = vsel %vm3166, %v3162, -inf
        %3168 = vmax.xlane.f32.xlu0 %v3167
        %v3169 = vpop.xlane.xlu0 %3168
        %v3170 = vcvt.f32.s32 %v3169
        %v3171 = vcvt.f32.s32 %v3165
        %v3172 = vshll.u32 %v3171, 16
        %v3173 = vadd.s32 %v3172, %v3170
        %vm3174 = vcmp.eq.s32.totalorder %v3142, %v3158
        %vm3175 = vcmp.eq.s32.totalorder %v3143, %v3173
        %v3176 = vand.u32 %v3158, 4294967280
        %v3177 = vand.u32 %v3173, 4294967280
        %vm3178 = vcmp.lt.s32.totalorder %v3176, 0
        %vm3179 = vcmp.lt.s32.totalorder %v3177, 0
        %v3180 = vxor.u32 %v3176, 2147483647
        %v3181 = vxor.u32 %v3177, 2147483647
        %v3182 = vsel %vm3178, %v3180, %v3176
        %v3183 = vsel %vm3179, %v3181, %v3177
        %v3186 = vsub.f32 %v3182, %v2966
        %v3187 = vsub.f32 %v3183, %v2967
        %v3188 = vmul.f32 %v3186, 1.442695
        %v3189 = vpow.pop %v3188
        %v3190 = vmul.f32 %v3187, 1.442695
        %v3191 = vpow.pop %v3190
        %v3192 = vadd.f32 %v3136, %v3189
        %v3193 = vadd.f32 %v3137, %v3191
        %v3194 = vsel %vm3174, %v3189, 0.0
        %v3195 = vsel %vm3175, %v3191, 0.0
        %v3196 = vadd.f32 %v3140, %v3194
        %v3197 = vadd.f32 %v3141, %v3195
        %v3198 = vsel %vm3174, 2147483648, %v3142
        %v3199 = vsel %vm3175, 2147483648, %v3143
        %v3200 = vsel %vm954, %v3198, 2147483648
        %v3201 = vand.u32 %v3200, 65535
        %v3202 = vshra.s32 %v3200, 16
        %v3203 = vcvt.s32.f32 %v3201
        %v3204 = vcvt.s32.f32 %v3202
        %3205 = vmax.xlane.f32.xlu0 %v3204
        %v3206 = vpop.xlane.xlu0 %3205
        %vm3207 = vcmp.eq.f32.partialorder %v3204, %v3206
        %v3208 = vsel %vm3207, %v3203, -inf
        %3209 = vmax.xlane.f32.xlu0 %v3208
        %v3210 = vpop.xlane.xlu0 %3209
        %v3211 = vcvt.f32.s32 %v3210
        %v3212 = vcvt.f32.s32 %v3206
        %v3213 = vshll.u32 %v3212, 16
        %v3214 = vadd.s32 %v3213, %v3211
        %v3215 = vsel %vm954, %v3199, 2147483648
        %v3216 = vand.u32 %v3215, 65535
        %v3217 = vshra.s32 %v3215, 16
        %v3218 = vcvt.s32.f32 %v3216
        %v3219 = vcvt.s32.f32 %v3217
        %3220 = vmax.xlane.f32.xlu0 %v3219
        %v3221 = vpop.xlane.xlu0 %3220
        %vm3222 = vcmp.eq.f32.partialorder %v3219, %v3221
        %v3223 = vsel %vm3222, %v3218, -inf
        %3224 = vmax.xlane.f32.xlu0 %v3223
        %v3225 = vpop.xlane.xlu0 %3224
        %v3226 = vcvt.f32.s32 %v3225
        %v3227 = vcvt.f32.s32 %v3221
        %v3228 = vshll.u32 %v3227, 16
        %v3229 = vadd.s32 %v3228, %v3226
        %vm3230 = vcmp.eq.s32.totalorder %v3198, %v3214
        %vm3231 = vcmp.eq.s32.totalorder %v3199, %v3229
        %v3232 = vand.u32 %v3214, 4294967280
        %v3233 = vand.u32 %v3229, 4294967280
        %vm3234 = vcmp.lt.s32.totalorder %v3232, 0
        %vm3235 = vcmp.lt.s32.totalorder %v3233, 0
        %v3236 = vxor.u32 %v3232, 2147483647
        %v3237 = vxor.u32 %v3233, 2147483647
        %v3238 = vsel %vm3234, %v3236, %v3232
        %v3239 = vsel %vm3235, %v3237, %v3233
        %v3242 = vsub.f32 %v3238, %v2966
        %v3243 = vsub.f32 %v3239, %v2967
        %v3244 = vmul.f32 %v3242, 1.442695
        %v3245 = vpow.pop %v3244
        %v3246 = vmul.f32 %v3243, 1.442695
        %v3247 = vpow.pop %v3246
        %v3248 = vadd.f32 %v3192, %v3245
        %v3249 = vadd.f32 %v3193, %v3247
        %v3250 = vsel %vm3230, %v3245, 0.0
        %v3251 = vsel %vm3231, %v3247, 0.0
        %v3252 = vadd.f32 %v3196, %v3250
        %v3253 = vadd.f32 %v3197, %v3251
        %v3254 = vsel %vm3230, 2147483648, %v3198
        %v3255 = vsel %vm3231, 2147483648, %v3199
        %v3256 = vsel %vm954, %v3254, 2147483648
        %v3257 = vand.u32 %v3256, 65535
        %v3258 = vshra.s32 %v3256, 16
        %v3259 = vcvt.s32.f32 %v3257
        %v3260 = vcvt.s32.f32 %v3258
        %3261 = vmax.xlane.f32.xlu0 %v3260
        %v3262 = vpop.xlane.xlu0 %3261
        %vm3263 = vcmp.eq.f32.partialorder %v3260, %v3262
        %v3264 = vsel %vm3263, %v3259, -inf
        %3265 = vmax.xlane.f32.xlu0 %v3264
        %v3266 = vpop.xlane.xlu0 %3265
        %v3267 = vcvt.f32.s32 %v3266
        %v3268 = vcvt.f32.s32 %v3262
        %v3269 = vshll.u32 %v3268, 16
        %v3270 = vadd.s32 %v3269, %v3267
        %v3271 = vsel %vm954, %v3255, 2147483648
        %v3272 = vand.u32 %v3271, 65535
        %v3273 = vshra.s32 %v3271, 16
        %v3274 = vcvt.s32.f32 %v3272
        %v3275 = vcvt.s32.f32 %v3273
        %3276 = vmax.xlane.f32.xlu0 %v3275
        %v3277 = vpop.xlane.xlu0 %3276
        %vm3278 = vcmp.eq.f32.partialorder %v3275, %v3277
        %v3279 = vsel %vm3278, %v3274, -inf
        %3280 = vmax.xlane.f32.xlu0 %v3279
        %v3281 = vpop.xlane.xlu0 %3280
        %v3282 = vcvt.f32.s32 %v3281
        %v3283 = vcvt.f32.s32 %v3277
        %v3284 = vshll.u32 %v3283, 16
        %v3285 = vadd.s32 %v3284, %v3282
        %vm3286 = vcmp.eq.s32.totalorder %v3254, %v3270
        %vm3287 = vcmp.eq.s32.totalorder %v3255, %v3285
        %v3288 = vand.u32 %v3270, 4294967280
        %v3289 = vand.u32 %v3285, 4294967280
        %vm3290 = vcmp.lt.s32.totalorder %v3288, 0
        %vm3291 = vcmp.lt.s32.totalorder %v3289, 0
        %v3292 = vxor.u32 %v3288, 2147483647
        %v3293 = vxor.u32 %v3289, 2147483647
        %v3294 = vsel %vm3290, %v3292, %v3288
        %v3295 = vsel %vm3291, %v3293, %v3289
        %v3298 = vsub.f32 %v3294, %v2966
        %v3299 = vsub.f32 %v3295, %v2967
        %v3300 = vmul.f32 %v3298, 1.442695
        %v3301 = vpow.pop %v3300
        %v3302 = vmul.f32 %v3299, 1.442695
        %v3303 = vpow.pop %v3302
        %v3304 = vadd.f32 %v3248, %v3301
        %v3305 = vadd.f32 %v3249, %v3303
        %v3306 = vsel %vm3286, %v3301, 0.0
        %v3307 = vsel %vm3287, %v3303, 0.0
        %v3308 = vadd.f32 %v3252, %v3306
        %v3309 = vadd.f32 %v3253, %v3307
        %v3310 = vsel %vm3286, 2147483648, %v3254
        %v3311 = vsel %vm3287, 2147483648, %v3255
        %v3312 = vsel %vm954, %v3310, 2147483648
        %v3313 = vand.u32 %v3312, 65535
        %v3314 = vshra.s32 %v3312, 16
        %v3315 = vcvt.s32.f32 %v3313
        %v3316 = vcvt.s32.f32 %v3314
        %3317 = vmax.xlane.f32.xlu0 %v3316
        %v3318 = vpop.xlane.xlu0 %3317
        %vm3319 = vcmp.eq.f32.partialorder %v3316, %v3318
        %v3320 = vsel %vm3319, %v3315, -inf
        %3321 = vmax.xlane.f32.xlu0 %v3320
        %v3322 = vpop.xlane.xlu0 %3321
        %v3323 = vcvt.f32.s32 %v3322
        %v3324 = vcvt.f32.s32 %v3318
        %v3325 = vshll.u32 %v3324, 16
        %v3326 = vadd.s32 %v3325, %v3323
        %v3327 = vsel %vm954, %v3311, 2147483648
        %v3328 = vand.u32 %v3327, 65535
        %v3329 = vshra.s32 %v3327, 16
        %v3330 = vcvt.s32.f32 %v3328
        %v3331 = vcvt.s32.f32 %v3329
        %3332 = vmax.xlane.f32.xlu0 %v3331
        %v3333 = vpop.xlane.xlu0 %3332
        %vm3334 = vcmp.eq.f32.partialorder %v3331, %v3333
        %v3335 = vsel %vm3334, %v3330, -inf
        %3336 = vmax.xlane.f32.xlu0 %v3335
        %v3337 = vpop.xlane.xlu0 %3336
        %v3338 = vcvt.f32.s32 %v3337
        %v3339 = vcvt.f32.s32 %v3333
        %v3340 = vshll.u32 %v3339, 16
        %v3341 = vadd.s32 %v3340, %v3338
        %vm3342 = vcmp.eq.s32.totalorder %v3310, %v3326
        %vm3343 = vcmp.eq.s32.totalorder %v3311, %v3341
        %v3344 = vand.u32 %v3326, 4294967280
        %v3345 = vand.u32 %v3341, 4294967280
        %vm3346 = vcmp.lt.s32.totalorder %v3344, 0
        %vm3347 = vcmp.lt.s32.totalorder %v3345, 0
        %v3348 = vxor.u32 %v3344, 2147483647
        %v3349 = vxor.u32 %v3345, 2147483647
        %v3350 = vsel %vm3346, %v3348, %v3344
        %v3351 = vsel %vm3347, %v3349, %v3345
        %v3354 = vsub.f32 %v3350, %v2966
        %v3355 = vsub.f32 %v3351, %v2967
        %v3356 = vmul.f32 %v3354, 1.442695
        %v3357 = vpow.pop %v3356
        %v3358 = vmul.f32 %v3355, 1.442695
        %v3359 = vpow.pop %v3358
        %v3360 = vadd.f32 %v3304, %v3357
        %v3361 = vadd.f32 %v3305, %v3359
        %v3362 = vsel %vm3342, %v3357, 0.0
        %v3363 = vsel %vm3343, %v3359, 0.0
        %v3364 = vadd.f32 %v3308, %v3362
        %v3365 = vadd.f32 %v3309, %v3363
        %v3366 = vrcp.pop %v3360
        %v3367 = vrcp.pop %v3361
        %v3368 = vmul.f32 %v3360, %v3366
        %v3369 = vmul.f32 %v3361, %v3367
        %v3370 = vsub.f32 2.0, %v3368
        %v3371 = vsub.f32 2.0, %v3369
        %v3372 = vmul.f32 %v3366, %v3370
        %v3373 = vmul.f32 %v3367, %v3371
        %v3374 = vmul.f32 %v3364, %v3372
        %v3375 = vmul.f32 %v3365, %v3373
        %v3376 = vsel %vm1403, 1.0, %v3021
        %v3377 = vsel %vm1403, 1.0, %v3023
        %v3378 = vsel %vm1406, %v3376, %v3077
        %v3379 = vsel %vm1406, %v3377, %v3079
        %v3380 = vsel %vm1409, %v3378, %v3133
        %v3381 = vsel %vm1409, %v3379, %v3135
        %v3382 = vsel %vm1412, %v3380, %v3189
        %v3383 = vsel %vm1412, %v3381, %v3191
        %v3384 = vsel %vm1415, %v3382, %v3245
        %v3385 = vsel %vm1415, %v3383, %v3247
        %v3386 = vsel %vm1418, %v3384, %v3301
        %v3387 = vsel %vm1418, %v3385, %v3303
        %v3388 = vsel %vm1421, %v3386, %v3357
        %v3389 = vsel %vm1421, %v3387, %v3359
        %v3390 = vmul.f32 %v3388, %v3372
        %v3391 = vmul.f32 %v3389, %v3373
        %s3392 = scalar_lea.vmem %s588, 48 [#allocation20]
        %3393 = vst.msk [vmem:[%s3392] sm:$0xff] %vm854, %v3390
        %3394 = vst.msk [vmem:[%s3392 + $0x8] sm:$0xff] %vm854, %v3391
        %3395 = vrot.lane.b32.xlu0 %v843, 104
        %v3396 = vpop.permute.xlu0 %3395
        %3397 = vrot.lane.b32.xlu0 %v848, 104
        %v3398 = vpop.permute.xlu0 %3397
        %v3402 = vsel %vm954, %v3374, 0
        %v3405 = vsel %vm954, %v3375, 0
        %3407 = vmatprep.subr.mxu0 0.0
        %3408 = vmatpush1.msra.mxu0 %v3396
        %3409 = vmatprep.subr.mxu0 0.0
        %3410 = vmatpush1.msra.mxu0 %v3398
        %3411 = vmatprep.subr.mxu0 0.0
        %3412 = vmatpush1.msra.mxu0 0.0
        %3413 = vmatprep.subr.mxu0 0.0
        %3414 = vmatpush1.msra.mxu0 0.0
        %3415 = vmatprep.subr.mxu0 0.0
        %3416 = vmatpush1.msra.mxu0 0.0
        %3417 = vmatprep.subr.mxu0 0.0
        %3418 = vmatpush1.msra.mxu0 0.0
        %3419 = vmatprep.subr.mxu0 0.0
        %3420 = vmatpush1.msra.mxu0 0.0
        %3421 = vmatprep.subr.mxu0 0.0
        %3422 = vmatpush1.msra.mxu0 0.0
        %3423 = vmatprep.subr.mxu0 0.0
        %3424 = vmatpush1.msra.mxu0 0.0
        %3425 = vmatprep.subr.mxu0 0.0
        %3426 = vmatpush1.msra.mxu0 0.0
        %3427 = vmatprep.subr.mxu0 0.0
        %3428 = vmatpush1.msra.mxu0 0.0
        %3429 = vmatprep.subr.mxu0 0.0
        %3430 = vmatpush1.msra.mxu0 0.0
        %3431 = vmatprep.subr.mxu0 0.0
        %3432 = vmatpush1.msra.mxu0 0.0
        %3433 = vmatprep.subr.mxu0 0.0
        %3434 = vmatpush1.msra.mxu0 0.0
        %3435 = vmatprep.subr.mxu0 0.0
        %3436 = vmatpush1.msra.mxu0 0.0
        %3437 = vmatprep.subr.mxu0 0.0
        %3438 = vmatpush1.msra.mxu0 0.0
        %3439 = vmatprep.subr.mxu0 0.0
        %3440 = vmatpush1.msra.mxu0 0.0
        %3441 = vmatprep.subr.mxu0 0.0
        %3442 = vmatpush1.msra.mxu0 0.0
        %3443 = vmatprep.subr.mxu0 0.0
        %3444 = vmatpush1.msra.mxu0 0.0
        %3445 = vmatprep.subr.mxu0 0.0
        %3446 = vmatpush1.msra.mxu0 0.0
        %3447 = vmatprep.subr.mxu0 0.0
        %3448 = vmatpush1.msra.mxu0 0.0
        %3449 = vmatprep.subr.mxu0 0.0
        %3450 = vmatpush1.msra.mxu0 0.0
        %3451 = vmatprep.subr.mxu0 0.0
        %3452 = vmatpush1.msra.mxu0 0.0
        %3453 = vmatprep.subr.mxu0 0.0
        %3454 = vmatpush1.msra.mxu0 0.0
        %3455 = vmatprep.subr.mxu0 0.0
        %3456 = vmatpush1.msra.mxu0 0.0
        %3457 = vmatprep.subr.mxu0 0.0
        %3458 = vmatpush1.msra.mxu0 0.0
        %3459 = vmatprep.subr.mxu0 0.0
        %3460 = vmatpush1.msra.mxu0 0.0
        %3461 = vmatprep.subr.mxu0 0.0
        %3462 = vmatpush1.msra.mxu0 0.0
        %3463 = vmatprep.subr.mxu0 0.0
        %3464 = vmatpush1.msra.mxu0 0.0
        %3465 = vmatprep.subr.mxu0 0.0
        %3466 = vmatpush1.msra.mxu0 0.0
        %3467 = vmatprep.subr.mxu0 0.0
        %3468 = vmatpush1.msra.mxu0 0.0
        %3469 = vmatprep.subr.mxu0 0.0
        %3470 = vmatpush1.msra.mxu0 0.0
        %3471 = vmatprep.mubr.f32.mxu0 0.0
        %3472 = vmatmul.mubr.f32.gmra.mrb[0].mxu0 %v3402
        %v3473 = vpop.f32.mrb[0].mxu0
        %v3474 = vadd.f32 0.0, %v3473
        %v3475 = vpop.f32.mrb[0].mxu0
        %3476 = vmatprep.mubr.f32.mxu0 0.0
        %3477 = vmatmul.mubr.f32.gmra.mrb[0].mxu0 %v3405
        %v3478 = vpop.f32.mrb[0].mxu0
        %v3479 = vadd.f32 0.0, %v3478
        %v3480 = vpop.f32.mrb[0].mxu0
        %3481 = vdwg.mxu0
        %3484 = vrot.lane.b32.xlu0 %v2160, 8
        %v3485 = vpop.permute.xlu0 %3484
        %3486 = vrot.lane.b32.xlu0 %v2165, 8
        %v3487 = vpop.permute.xlu0 %3486
        %3492 = vrot.lane.b32.xlu0 %v2817, 16
        %v3493 = vpop.permute.xlu0 %3492
        %3494 = vrot.lane.b32.xlu0 %v2822, 16
        %v3495 = vpop.permute.xlu0 %3494
        %3500 = vrot.lane.b32.xlu0 %v3474, 24
        %v3501 = vpop.permute.xlu0 %3500
        %3502 = vrot.lane.b32.xlu0 %v3479, 24
        %v3503 = vpop.permute.xlu0 %3502
        %v3506 = vsel %vm854, %v1501, %v3485
        %v3507 = vsel %vm854, %v1506, %v3487
        %v3508 = vsel %vm954, %v3506, %v3493
        %v3509 = vsel %vm954, %v3507, %v3495
        %vm3510 = vcmask 195584
        %v3511 = vsel %vm3510, %v3508, %v3501
        %v3512 = vsel %vm3510, %v3509, %v3503
        %v3513 = vld [vmem:[#allocation13] sm:$0xff]
        %v3514 = vld [vmem:[#allocation13 + $0x8] sm:$0xff]
        %v3515 = vld [vmem:[#allocation13 + $0x10] sm:$0xff]
        %v3516 = vld [vmem:[#allocation13 + $0x18] sm:$0xff]
        %v3517 = vld [vmem:[#allocation14] sm:$0x1]
        %v3519 = vlaneseq
        %v3520 = vshrl.u32 %v3519, 7
        %v3521 = vsub.s32 0, %v3520
        %v3522 = vrot.slane %v3517, %v3521
        %v3525 = vsel %vm599, %v3511, 0
        %v3528 = vsel %vm599, %v3512, 0
        %3530 = vmatprep.subr.mxu0 0.0
        %3531 = vmatpush1.msra.mxu0 %v3513
        %3532 = vmatprep.subr.mxu0 0.0
        %3533 = vmatpush1.msra.mxu0 %v3514
        %3534 = vmatprep.subr.mxu0 0.0
        %3535 = vmatpush1.msra.mxu0 %v3515
        %3536 = vmatprep.subr.mxu0 0.0
        %3537 = vmatpush1.msra.mxu0 %v3516
        %3538 = vmatprep.subr.mxu0 0.0
        %3539 = vmatpush1.msra.mxu0 0.0
        %3540 = vmatprep.subr.mxu0 0.0
        %3541 = vmatpush1.msra.mxu0 0.0
        %3542 = vmatprep.subr.mxu0 0.0
        %3543 = vmatpush1.msra.mxu0 0.0
        %3544 = vmatprep.subr.mxu0 0.0
        %3545 = vmatpush1.msra.mxu0 0.0
        %3546 = vmatprep.subr.mxu0 0.0
        %3547 = vmatpush1.msra.mxu0 0.0
        %3548 = vmatprep.subr.mxu0 0.0
        %3549 = vmatpush1.msra.mxu0 0.0
        %3550 = vmatprep.subr.mxu0 0.0
        %3551 = vmatpush1.msra.mxu0 0.0
        %3552 = vmatprep.subr.mxu0 0.0
        %3553 = vmatpush1.msra.mxu0 0.0
        %3554 = vmatprep.subr.mxu0 0.0
        %3555 = vmatpush1.msra.mxu0 0.0
        %3556 = vmatprep.subr.mxu0 0.0
        %3557 = vmatpush1.msra.mxu0 0.0
        %3558 = vmatprep.subr.mxu0 0.0
        %3559 = vmatpush1.msra.mxu0 0.0
        %3560 = vmatprep.subr.mxu0 0.0
        %3561 = vmatpush1.msra.mxu0 0.0
        %3562 = vmatprep.subr.mxu0 0.0
        %3563 = vmatpush1.msra.mxu0 0.0
        %3564 = vmatprep.subr.mxu0 0.0
        %3565 = vmatpush1.msra.mxu0 0.0
        %3566 = vmatprep.subr.mxu0 0.0
        %3567 = vmatpush1.msra.mxu0 0.0
        %3568 = vmatprep.subr.mxu0 0.0
        %3569 = vmatpush1.msra.mxu0 0.0
        %3570 = vmatprep.subr.mxu0 0.0
        %3571 = vmatpush1.msra.mxu0 0.0
        %3572 = vmatprep.subr.mxu0 0.0
        %3573 = vmatpush1.msra.mxu0 0.0
        %3574 = vmatprep.subr.mxu0 0.0
        %3575 = vmatpush1.msra.mxu0 0.0
        %3576 = vmatprep.subr.mxu0 0.0
        %3577 = vmatpush1.msra.mxu0 0.0
        %3578 = vmatprep.subr.mxu0 0.0
        %3579 = vmatpush1.msra.mxu0 0.0
        %3580 = vmatprep.subr.mxu0 0.0
        %3581 = vmatpush1.msra.mxu0 0.0
        %3582 = vmatprep.subr.mxu0 0.0
        %3583 = vmatpush1.msra.mxu0 0.0
        %3584 = vmatprep.subr.mxu0 0.0
        %3585 = vmatpush1.msra.mxu0 0.0
        %3586 = vmatprep.subr.mxu0 0.0
        %3587 = vmatpush1.msra.mxu0 0.0
        %3588 = vmatprep.subr.mxu0 0.0
        %3589 = vmatpush1.msra.mxu0 0.0
        %3590 = vmatprep.subr.mxu0 0.0
        %3591 = vmatpush1.msra.mxu0 0.0
        %3592 = vmatprep.subr.mxu0 0.0
        %3593 = vmatpush1.msra.mxu0 0.0
        %3594 = vmatprep.mubr.f32.mxu0 0.0
        %3595 = vmatmul.mubr.f32.gmra.mrb[0].mxu0 %v3525
        %v3596 = vpop.f32.mrb[0].mxu0
        %v3597 = vadd.f32 %v3522, %v3596
        %v3598 = vpop.f32.mrb[0].mxu0
        %3599 = vmatprep.mubr.f32.mxu0 0.0
        %3600 = vmatmul.mubr.f32.gmra.mrb[0].mxu0 %v3528
        %v3601 = vpop.f32.mrb[0].mxu0
        %v3602 = vadd.f32 %v3522, %v3601
        %v3603 = vpop.f32.mrb[0].mxu0
        %3604 = vdwg.mxu0
        %v3605 = vadd.f32 %v3597, %v589
        %v3606 = vadd.f32 %v3602, %v590
        %v3607 = vsel %vm599, %v3605, 0.0
        %3608 = vadd.xlane.f32.xlu0 %v3607
        %v3609 = vpop.xlane.xlu0 %3608
        %v3610 = vsel %vm599, %v3606, 0.0
        %3611 = vadd.xlane.f32.xlu0 %v3610
        %v3612 = vpop.xlane.xlu0 %3611
        %v3613 = vrcp.pop 32.0
        %v3614 = vmul.f32 %v3609, %v3613
        %v3615 = vmul.f32 %v3612, %v3613
        %v3616 = vsub.f32 %v3605, %v3614
        %v3617 = vsub.f32 %v3606, %v3615
        %v3618 = vmul.f32 %v3616, %v3616
        %v3619 = vmul.f32 %v3617, %v3617
        %v3620 = vsel %vm599, %v3618, 0.0
        %3621 = vadd.xlane.f32.xlu0 %v3620
        %v3622 = vpop.xlane.xlu0 %3621
        %v3623 = vsel %vm599, %v3619, 0.0
        %3624 = vadd.xlane.f32.xlu0 %v3623
        %v3625 = vpop.xlane.xlu0 %3624
        %v3626 = vmul.f32 %v3622, %v3613
        %v3627 = vmul.f32 %v3625, %v3613
        %v3628 = vadd.f32 %v3626, 1e-05
        %v3629 = vadd.f32 %v3627, 1e-05
        %v3630 = vrsqrt.pop %v3628
        %v3631 = vrsqrt.pop %v3629
        %v3632 = vmul.f32 %v3616, %v3630
        %v3633 = vmul.f32 %v3617, %v3631
        %v3634 = vld [vmem:[#allocation16] sm:$0x1]
        %v3636 = vlaneseq
        %v3637 = vshrl.u32 %v3636, 7
        %v3638 = vsub.s32 0, %v3637
        %v3639 = vrot.slane %v3634, %v3638
        %v3641 = vmul.f32 %v3632, %v3639
        %v3642 = vmul.f32 %v3633, %v3639
        %v3643 = vld [vmem:[#allocation17] sm:$0x1]
        %v3645 = vlaneseq
        %v3646 = vshrl.u32 %v3645, 7
        %v3647 = vsub.s32 0, %v3646
        %v3648 = vrot.slane %v3643, %v3647
        %v3650 = vadd.f32 %v3641, %v3648
        %v3651 = vadd.f32 %v3642, %v3648
        %3652 = vst.msk [vmem:[%s581] sm:$0xff] %vm599, %v3650
        %3653 = vst.msk [vmem:[%s581 + $0x8] sm:$0xff] %vm599, %v3651
        %s3654 = sand.u32 %s272, 1
        %s3655 = scalar_lea.sflag [#allocation4], %s3654
        %s3656 = sand.u32 %s272, 1
        %s3657 = smul.addr %s3656, 16
        %s3658 = scalar_lea.vmem [#allocation19], %s3657
        %s3659 = sand.u32 %s298, 1
        %s3660 = scalar_lea.sflag [#allocation21], %s3659
        %s3661 = sand.u32 %s298, 1
        %s3662 = smul.addr %s3661, 64
        %s3663 = scalar_lea.vmem [#allocation20], %s3662
        // Predicated region
        $region101: #{tpu_custom_call.1} parent=59 // pred_check
          %p3664 = pneg %p282
        $region102: #{tpu_custom_call.1} parent=59 // pred_check_branch
          %3666 = sbr.rel (%p3664) target = $region104
        $region103: #{tpu_custom_call.1} parent=59 // pred_region
          %s3668 = ssub.s32 256, 256
          %3669 = vsyncadd %s3655, %s3668
          %s3670 = smul.addr %s39, 2
          %s3671 = smul.addr %s3670, 128
          %s3672 = scalar_lea.hbm %s10, %s3671
          %s3673 = sshll.u32 %s3658, 4
          %s3674 = int_to_ptr.vmem [resolvable:$true] %s3673
          %3679 = dma.vmem_to_hbm [thread:$0]  %s3674, 256, %s3672, %s3655, 128, 128, 8
        $region104: #{tpu_custom_call.1} parent=59 // pred_fallthru
          _
        // Predicated region
        $region105: #{tpu_custom_call.1} parent=59 // pred_check
          %p3680 = pneg %p308
        $region106: #{tpu_custom_call.1} parent=59 // pred_check_branch
          %3682 = sbr.rel (%p3680) target = $region108
        $region107: #{tpu_custom_call.1} parent=59 // pred_region
          %s3684 = ssub.s32 1024, 1024
          %3685 = vsyncadd %s3660, %s3684
          %s3686 = smul.addr %s39, 8
          %s3687 = smul.addr %s3686, 128
          %s3688 = scalar_lea.hbm %s11, %s3687
          %s3689 = sshll.u32 %s3663, 4
          %s3690 = int_to_ptr.vmem [resolvable:$true] %s3689
          %3695 = dma.vmem_to_hbm [thread:$0]  %s3690, 1024, %s3688, %s3660, 128, 128, 8
        $region108: #{tpu_custom_call.1} parent=59 // pred_fallthru
          _
      $region60: #{tpu_custom_call.1} parent=5 // pred_fallthru
        _
      %p3696 = scmp.le.s32.totalorder 2, %s34
      // Predicated region
      $region109: #{tpu_custom_call.1} parent=5 // pred_check
        %p3697 = pneg %p3696
      $region110: #{tpu_custom_call.1} parent=5 // pred_check_branch
        %3699 = sbr.rel (%p3697) target = $region112
      $region111: #{tpu_custom_call.1} parent=5 // pred_region
        %s3700 = ssub.s32 %s34, 2
        // Predicated region
        $region113: #{tpu_custom_call.1} parent=111 // pred_check
          %p3701 = pneg %p288
        $region114: #{tpu_custom_call.1} parent=111 // pred_check_branch
          %3703 = sbr.rel (%p3701) target = $region116
        $region115: #{tpu_custom_call.1} parent=111 // pred_region
          %s3704 = sand.u32 %s273, 1
          %s3705 = scalar_lea.sflag [#allocation4], %s3704
          %s3706 = sand.u32 %s273, 1
          %s3707 = smul.addr %s3706, 16
          %s3708 = scalar_lea.vmem [#allocation19], %s3707
          %3709 = dma.done %s3705, 256
        $region116: #{tpu_custom_call.1} parent=111 // pred_fallthru
          _
        // Predicated region
        $region117: #{tpu_custom_call.1} parent=111 // pred_check
          %p3710 = pneg %p314
        $region118: #{tpu_custom_call.1} parent=111 // pred_check_branch
          %3712 = sbr.rel (%p3710) target = $region120
        $region119: #{tpu_custom_call.1} parent=111 // pred_region
          %s3713 = sand.u32 %s299, 1
          %s3714 = scalar_lea.sflag [#allocation21], %s3713
          %s3715 = sand.u32 %s299, 1
          %s3716 = smul.addr %s3715, 64
          %s3717 = scalar_lea.vmem [#allocation20], %s3716
          %3718 = dma.done %s3714, 1024
        $region120: #{tpu_custom_call.1} parent=111 // pred_fallthru
          _
      $region112: #{tpu_custom_call.1} parent=5 // pred_fallthru
        _
    $region6: #{tpu_custom_call.1} parent=1 // loop_footer
      %s38 = sadd.s32 1, %s34
    $region7: #{tpu_custom_call.1} parent=1 // loop_footer_branch
      %33 = sbr.rel target = $region3
    $region8: #{tpu_custom_call.1} parent=1 // loop_exit
      _
    %3719 = vsyncpa [#allocation3], 1
    %s3720 = scalar_lea.sflag [#allocation3], 1
    %3721 = vsyncpa %s3720, 1
    %3722 = vsyncpa [#allocation6], 1
    %s3723 = scalar_lea.sflag [#allocation6], 1
    %3724 = vsyncpa %s3723, 1
    %3725 = vsyncpa [#allocation9], 1
    %3726 = vsyncpa [#allocation12], 1
    %3727 = vsyncpa [#allocation15], 1
    %3728 = vsyncpa [#allocation18], 1
    %3729 = vsyncpa [#allocation4], 1
    %s3730 = scalar_lea.sflag [#allocation4], 1
    %3731 = vsyncpa %s3730, 1
    %3732 = vsyncpa [#allocation21], 1
    %s3733 = scalar_lea.sflag [#allocation21], 1
    %3734 = vsyncpa %s3733, 1

</llo_original>
